<compile_context>
chip_gen: v6e
topology: v6e:2x2x1
jax: 0.10.0
libtpu: 0.0.40
codegen_flags: <defaults>
</compile_context>

<pallas_src>
import math

import jax
import jax.numpy as jnp
from jax import lax
from jax.experimental import pallas as pl
from jax.experimental.pallas import tpu as pltpu


def _make_deconv_kernel(W, prelu_a):
    """Kernel factory: W (image width) and PReLU slope are trace-time constants."""
    a = float(prelu_a)

    def kernel(vm1_ref, v0_ref, vp1_ref, w_ref, b_ref, o_ref):
        # vX_ref : (TR, W+2, Cin)   row-shifted (dh = -1/0/+1), width-haloed input
        # w_ref  : (9, Cin, 4*Cout) fused phase weights, index = (dh+1)*3 + (dw+1)
        # b_ref  : (1, 4*Cout)      bias tiled over the 4 phases
        # o_ref  : (TR*W, 4*Cout)   lane-dense fused output tile
        TR, _, Cin = v0_ref.shape
        Cout4 = w_ref.shape[-1]
        TM = TR * W

        views = (vm1_ref, v0_ref, vp1_ref)
        acc = jnp.zeros((TM, Cout4), jnp.float32)
        for dh_idx in range(3):
            v = views[dh_idx]
            for dw_idx in range(3):
                # tap[row, j, ci] = x[n, i + dh, j + dw, ci]  (zeros at the borders)
                tap = v[:, dw_idx:dw_idx + W, :].reshape(TM, Cin)
                acc = acc + jnp.dot(tap, w_ref[3 * dh_idx + dw_idx],
                                    preferred_element_type=jnp.float32)
        acc = acc + b_ref[...]
        o_ref[...] = jnp.where(acc >= 0.0, acc, a * acc)

    return kernel


def deconv_block_forward(x_nchw, weight, bias, prelu_a, *, target_tm=512):
    """ConvTranspose2d(Cin, Cout, 4, 2, 1, bias=True) + PReLU  (norm=None path).

    x_nchw : [N, Cin, H, W] float32
    weight : [Cin, Cout, 4, 4]   (PyTorch ConvTranspose2d weight layout)
    bias   : [Cout]
    prelu_a: python float (single-parameter PReLU)
    returns: [N, Cout, 2H, 2W]
    """
    N, Cin, H, W = x_nchw.shape
    Cout = weight.shape[1]
    Cout4 = 4 * Cout
    Wp2 = W + 2
    NH = N * H

    # --- input prep: NHWC + three row-shifted, width-haloed views (per-image pad) ---
    x = jnp.transpose(x_nchw, (0, 2, 3, 1)).astype(jnp.float32)       # NHWC
    xp = jnp.pad(x, ((0, 0), (1, 1), (1, 1), (0, 0)))                 # [N,H+2,W+2,Cin]
    # V_dh[n*H+i, 1+j, :] = x[n, i+dh, j, :]  (zeros outside the image)
    views = [xp[:, s:s + H].reshape(NH, Wp2, Cin) for s in (0, 1, 2)]  # dh = -1, 0, +1

    # --- tiling: TR image rows per grid step, ~target_tm output pixel-pairs/step ---
    TR = max(1, target_tm // max(W, 1))
    TR = min(TR, NH)
    f = 8 // math.gcd(W, 8)                    # ensure TR*W % 8 == 0 for the out block
    TR = ((TR + f - 1) // f) * f
    NHpad = ((NH + TR - 1) // TR) * TR
    if NHpad != NH:
        views = [jnp.pad(v, ((0, NHpad - NH), (0, 0), (0, 0))) for v in views]
    TM = TR * W
    grid = (NHpad // TR,)

    # --- fused weights: W_all[(dh+1)*3+(dw+1), ci, p*Cout+co], p = 2*r + c ---------
    # For output pixel (2i+r, 2j+c) the valid taps are:
    #   r=0: (dh,kh) in {(0,1), (-1,3)}   r=1: {(1,0), (0,2)}   (same table for c/kw)
    row_taps = {0: {0: 1, -1: 3}, 1: {1: 0, 0: 2}}     # r -> {dh: kh}
    col_taps = row_taps                                # c -> {dw: kw}
    w = weight.astype(jnp.float32)
    W_all = jnp.zeros((3, 3, Cin, Cout4), jnp.float32)
    for r in (0, 1):
        for c in (0, 1):
            p = 2 * r + c
            for dh, kh in row_taps[r].items():
                for dw, kw in col_taps[c].items():
                    W_all = W_all.at[dh + 1, dw + 1, :,
                                     p * Cout:(p + 1) * Cout].set(w[:, :, kh, kw])
    W_all = W_all.reshape(9, Cin, Cout4)
    b4 = jnp.tile(bias.astype(jnp.float32), 4).reshape(1, Cout4)

    kernel = _make_deconv_kernel(W, prelu_a)
    y2d = pl.pallas_call(
        kernel,
        out_shape=jax.ShapeDtypeStruct((NHpad * W, Cout4), jnp.float32),
        grid_spec=pltpu.PrefetchScalarGridSpec(
            num_scalar_prefetch=0,
            grid=grid,
            in_specs=[
                pl.BlockSpec((TR, Wp2, Cin), lambda m: (m, 0, 0)),
                pl.BlockSpec((TR, Wp2, Cin), lambda m: (m, 0, 0)),
                pl.BlockSpec((TR, Wp2, Cin), lambda m: (m, 0, 0)),
                pl.BlockSpec((9, Cin, Cout4), lambda m: (0, 0, 0)),
                pl.BlockSpec((1, Cout4), lambda m: (0, 0)),
            ],
            out_specs=pl.BlockSpec((TM, Cout4), lambda m: (m, 0)),
        ),
        compiler_params=pltpu.CompilerParams(
            dimension_semantics=("parallel",)),
    )(*views, W_all, b4)

    # --- single interleave transpose to NCHW --------------------------------------
    y = y2d[: NH * W].reshape(N, H, W, 2, 2, Cout)      # (n, i, j, r, c, co)
    y = jnp.transpose(y, (0, 5, 1, 3, 2, 4))            # (n, co, i, r, j, c)
    return y.reshape(N, Cout, 2 * H, 2 * W)


def _reference(x, weight, bias, a):
    # Pure-JAX reference: transposed conv == lhs-dilated conv with flipped kernel.
    w_conv = jnp.flip(weight, axis=(2, 3)).transpose(1, 0, 2, 3)      # OIHW
    y = lax.conv_general_dilated(
        x, w_conv, window_strides=(1, 1), padding=((2, 2), (2, 2)),
        lhs_dilation=(2, 2), rhs_dilation=(1, 1),
        dimension_numbers=('NCHW', 'OIHW', 'NCHW'))
    y = y + bias.reshape(1, -1, 1, 1)
    return jnp.where(y >= 0, y, a * y)


if __name__ == "__main__":
    N, Cin, Cout, H, W = 2, 4, 8, 16, 16
    key = jax.random.PRNGKey(0)
    k1, k2, k3 = jax.random.split(key, 3)

    # Deterministic param init (shapes per ConvTranspose2d(Cin, Cout, 4, 2, 1)).
    bound = 1.0 / float((Cin * 4 * 4) ** 0.5)
    weight = jax.random.uniform(k1, (Cin, Cout, 4, 4), jnp.float32, -bound, bound)
    bias = jax.random.uniform(k2, (Cout,), jnp.float32, -bound, bound)
    prelu_a = 0.25                                   # nn.PReLU() default slope
    # norm=None in the default module config, so no batch/instance-norm branch.
    # TODO(synk): batch/instance norm variants of DeconvBlock are not implemented.

    x = jax.random.normal(k3, (N, Cin, H, W), jnp.float32)

    out = deconv_block_forward(x, weight, bias, prelu_a)
    out = jax.block_until_ready(out)

    ref = _reference(x, weight, bias, prelu_a)
    assert out.shape == (N, Cout, 2 * H, 2 * W), out.shape
    assert jnp.allclose(out, ref, atol=1e-4, rtol=1e-4), float(jnp.max(jnp.abs(out - ref)))
    print("KERNEL_OK")
</pallas_src>

<mosaic_0001>
module attributes {stable_mosaic.version = 11 : i64} {
  func.func @kernel(%arg0: i32, %arg1: memref<32x18x4xf32, #tpu.memory_space<vmem>>, %arg2: memref<32x18x4xf32, #tpu.memory_space<vmem>>, %arg3: memref<32x18x4xf32, #tpu.memory_space<vmem>>, %arg4: memref<9x4x32xf32, #tpu.memory_space<vmem>>, %arg5: memref<1x32xf32, #tpu.memory_space<vmem>>, %arg6: memref<512x32xf32, #tpu.memory_space<vmem>>) attributes {dimension_semantics = [#tpu.dimension_semantics<parallel>], iteration_bounds = array<i64: 1>, scalar_prefetch = 0 : i64, scratch_operands = 0 : i64, tpu.core_type = #tpu.core_type<tc>, window_params = [{transform_indices = @transform_0, window_bounds = array<i64: 32, 18, 4>}, {transform_indices = @transform_1, window_bounds = array<i64: 32, 18, 4>}, {transform_indices = @transform_2, window_bounds = array<i64: 32, 18, 4>}, {pipeline_mode = #tpu.pipeline_mode<synchronous>, transform_indices = @transform_3, window_bounds = array<i64: 9, 4, 32>}, {pipeline_mode = #tpu.pipeline_mode<synchronous>, transform_indices = @transform_4, window_bounds = array<i64: 1, 32>}, {transform_indices = @transform_5, window_bounds = array<i64: 512, 32>}]} {
    %cst = arith.constant 0.000000e+00 : f32
    %0 = vector.broadcast %cst : f32 to vector<512x32xf32>
    %c0 = arith.constant 0 : index
    %c0_0 = arith.constant 0 : index
    %c0_1 = arith.constant 0 : index
    %1 = vector.load %arg1[%c0, %c0_0, %c0_1] : memref<32x18x4xf32, #tpu.memory_space<vmem>>, vector<32x16x4xf32>
    %2 = vector.shape_cast %1 : vector<32x16x4xf32> to vector<512x4xf32>
    %c0_2 = arith.constant 0 : index
    %c0_3 = arith.constant 0 : index
    %c0_4 = arith.constant 0 : index
    %3 = vector.load %arg4[%c0_2, %c0_3, %c0_4] : memref<9x4x32xf32, #tpu.memory_space<vmem>>, vector<1x4x32xf32>
    %4 = vector.shape_cast %3 : vector<1x4x32xf32> to vector<4x32xf32>
    %cst_5 = arith.constant dense<0.000000e+00> : vector<512x32xf32>
    %5 = tpu.matmul %2, %4, %cst_5 {dimension_numbers = #tpu.dot_dimension_numbers<[1], [0], [0], [1], [0, 0, 1, 1], [], []>} : vector<512x4xf32>, vector<4x32xf32>, vector<512x32xf32> -> vector<512x32xf32>
    %6 = arith.addf %0, %5 : vector<512x32xf32>
    %c0_6 = arith.constant 0 : index
    %c1 = arith.constant 1 : index
    %c0_7 = arith.constant 0 : index
    %7 = vector.load %arg1[%c0_6, %c1, %c0_7] : memref<32x18x4xf32, #tpu.memory_space<vmem>>, vector<32x16x4xf32>
    %8 = vector.shape_cast %7 : vector<32x16x4xf32> to vector<512x4xf32>
    %c1_8 = arith.constant 1 : index
    %c0_9 = arith.constant 0 : index
    %c0_10 = arith.constant 0 : index
    %9 = vector.load %arg4[%c1_8, %c0_9, %c0_10] : memref<9x4x32xf32, #tpu.memory_space<vmem>>, vector<1x4x32xf32>
    %10 = vector.shape_cast %9 : vector<1x4x32xf32> to vector<4x32xf32>
    %cst_11 = arith.constant dense<0.000000e+00> : vector<512x32xf32>
    %11 = tpu.matmul %8, %10, %cst_11 {dimension_numbers = #tpu.dot_dimension_numbers<[1], [0], [0], [1], [0, 0, 1, 1], [], []>} : vector<512x4xf32>, vector<4x32xf32>, vector<512x32xf32> -> vector<512x32xf32>
    %12 = arith.addf %6, %11 : vector<512x32xf32>
    %c0_12 = arith.constant 0 : index
    %c2 = arith.constant 2 : index
    %c0_13 = arith.constant 0 : index
    %13 = vector.load %arg1[%c0_12, %c2, %c0_13] : memref<32x18x4xf32, #tpu.memory_space<vmem>>, vector<32x16x4xf32>
    %14 = vector.shape_cast %13 : vector<32x16x4xf32> to vector<512x4xf32>
    %c2_14 = arith.constant 2 : index
    %c0_15 = arith.constant 0 : index
    %c0_16 = arith.constant 0 : index
    %15 = vector.load %arg4[%c2_14, %c0_15, %c0_16] : memref<9x4x32xf32, #tpu.memory_space<vmem>>, vector<1x4x32xf32>
    %16 = vector.shape_cast %15 : vector<1x4x32xf32> to vector<4x32xf32>
    %cst_17 = arith.constant dense<0.000000e+00> : vector<512x32xf32>
    %17 = tpu.matmul %14, %16, %cst_17 {dimension_numbers = #tpu.dot_dimension_numbers<[1], [0], [0], [1], [0, 0, 1, 1], [], []>} : vector<512x4xf32>, vector<4x32xf32>, vector<512x32xf32> -> vector<512x32xf32>
    %18 = arith.addf %12, %17 : vector<512x32xf32>
    %c0_18 = arith.constant 0 : index
    %c0_19 = arith.constant 0 : index
    %c0_20 = arith.constant 0 : index
    %19 = vector.load %arg2[%c0_18, %c0_19, %c0_20] : memref<32x18x4xf32, #tpu.memory_space<vmem>>, vector<32x16x4xf32>
    %20 = vector.shape_cast %19 : vector<32x16x4xf32> to vector<512x4xf32>
    %c3 = arith.constant 3 : index
    %c0_21 = arith.constant 0 : index
    %c0_22 = arith.constant 0 : index
    %21 = vector.load %arg4[%c3, %c0_21, %c0_22] : memref<9x4x32xf32, #tpu.memory_space<vmem>>, vector<1x4x32xf32>
    %22 = vector.shape_cast %21 : vector<1x4x32xf32> to vector<4x32xf32>
    %cst_23 = arith.constant dense<0.000000e+00> : vector<512x32xf32>
    %23 = tpu.matmul %20, %22, %cst_23 {dimension_numbers = #tpu.dot_dimension_numbers<[1], [0], [0], [1], [0, 0, 1, 1], [], []>} : vector<512x4xf32>, vector<4x32xf32>, vector<512x32xf32> -> vector<512x32xf32>
    %24 = arith.addf %18, %23 : vector<512x32xf32>
    %c0_24 = arith.constant 0 : index
    %c1_25 = arith.constant 1 : index
    %c0_26 = arith.constant 0 : index
    %25 = vector.load %arg2[%c0_24, %c1_25, %c0_26] : memref<32x18x4xf32, #tpu.memory_space<vmem>>, vector<32x16x4xf32>
    %26 = vector.shape_cast %25 : vector<32x16x4xf32> to vector<512x4xf32>
    %c4 = arith.constant 4 : index
    %c0_27 = arith.constant 0 : index
    %c0_28 = arith.constant 0 : index
    %27 = vector.load %arg4[%c4, %c0_27, %c0_28] : memref<9x4x32xf32, #tpu.memory_space<vmem>>, vector<1x4x32xf32>
    %28 = vector.shape_cast %27 : vector<1x4x32xf32> to vector<4x32xf32>
    %cst_29 = arith.constant dense<0.000000e+00> : vector<512x32xf32>
    %29 = tpu.matmul %26, %28, %cst_29 {dimension_numbers = #tpu.dot_dimension_numbers<[1], [0], [0], [1], [0, 0, 1, 1], [], []>} : vector<512x4xf32>, vector<4x32xf32>, vector<512x32xf32> -> vector<512x32xf32>
    %30 = arith.addf %24, %29 : vector<512x32xf32>
    %c0_30 = arith.constant 0 : index
    %c2_31 = arith.constant 2 : index
    %c0_32 = arith.constant 0 : index
    %31 = vector.load %arg2[%c0_30, %c2_31, %c0_32] : memref<32x18x4xf32, #tpu.memory_space<vmem>>, vector<32x16x4xf32>
    %32 = vector.shape_cast %31 : vector<32x16x4xf32> to vector<512x4xf32>
    %c5 = arith.constant 5 : index
    %c0_33 = arith.constant 0 : index
    %c0_34 = arith.constant 0 : index
    %33 = vector.load %arg4[%c5, %c0_33, %c0_34] : memref<9x4x32xf32, #tpu.memory_space<vmem>>, vector<1x4x32xf32>
    %34 = vector.shape_cast %33 : vector<1x4x32xf32> to vector<4x32xf32>
    %cst_35 = arith.constant dense<0.000000e+00> : vector<512x32xf32>
    %35 = tpu.matmul %32, %34, %cst_35 {dimension_numbers = #tpu.dot_dimension_numbers<[1], [0], [0], [1], [0, 0, 1, 1], [], []>} : vector<512x4xf32>, vector<4x32xf32>, vector<512x32xf32> -> vector<512x32xf32>
    %36 = arith.addf %30, %35 : vector<512x32xf32>
    %c0_36 = arith.constant 0 : index
    %c0_37 = arith.constant 0 : index
    %c0_38 = arith.constant 0 : index
    %37 = vector.load %arg3[%c0_36, %c0_37, %c0_38] : memref<32x18x4xf32, #tpu.memory_space<vmem>>, vector<32x16x4xf32>
    %38 = vector.shape_cast %37 : vector<32x16x4xf32> to vector<512x4xf32>
    %c6 = arith.constant 6 : index
    %c0_39 = arith.constant 0 : index
    %c0_40 = arith.constant 0 : index
    %39 = vector.load %arg4[%c6, %c0_39, %c0_40] : memref<9x4x32xf32, #tpu.memory_space<vmem>>, vector<1x4x32xf32>
    %40 = vector.shape_cast %39 : vector<1x4x32xf32> to vector<4x32xf32>
    %cst_41 = arith.constant dense<0.000000e+00> : vector<512x32xf32>
    %41 = tpu.matmul %38, %40, %cst_41 {dimension_numbers = #tpu.dot_dimension_numbers<[1], [0], [0], [1], [0, 0, 1, 1], [], []>} : vector<512x4xf32>, vector<4x32xf32>, vector<512x32xf32> -> vector<512x32xf32>
    %42 = arith.addf %36, %41 : vector<512x32xf32>
    %c0_42 = arith.constant 0 : index
    %c1_43 = arith.constant 1 : index
    %c0_44 = arith.constant 0 : index
    %43 = vector.load %arg3[%c0_42, %c1_43, %c0_44] : memref<32x18x4xf32, #tpu.memory_space<vmem>>, vector<32x16x4xf32>
    %44 = vector.shape_cast %43 : vector<32x16x4xf32> to vector<512x4xf32>
    %c7 = arith.constant 7 : index
    %c0_45 = arith.constant 0 : index
    %c0_46 = arith.constant 0 : index
    %45 = vector.load %arg4[%c7, %c0_45, %c0_46] : memref<9x4x32xf32, #tpu.memory_space<vmem>>, vector<1x4x32xf32>
    %46 = vector.shape_cast %45 : vector<1x4x32xf32> to vector<4x32xf32>
    %cst_47 = arith.constant dense<0.000000e+00> : vector<512x32xf32>
    %47 = tpu.matmul %44, %46, %cst_47 {dimension_numbers = #tpu.dot_dimension_numbers<[1], [0], [0], [1], [0, 0, 1, 1], [], []>} : vector<512x4xf32>, vector<4x32xf32>, vector<512x32xf32> -> vector<512x32xf32>
    %48 = arith.addf %42, %47 : vector<512x32xf32>
    %c0_48 = arith.constant 0 : index
    %c2_49 = arith.constant 2 : index
    %c0_50 = arith.constant 0 : index
    %49 = vector.load %arg3[%c0_48, %c2_49, %c0_50] : memref<32x18x4xf32, #tpu.memory_space<vmem>>, vector<32x16x4xf32>
    %50 = vector.shape_cast %49 : vector<32x16x4xf32> to vector<512x4xf32>
    %c8 = arith.constant 8 : index
    %c0_51 = arith.constant 0 : index
    %c0_52 = arith.constant 0 : index
    %51 = vector.load %arg4[%c8, %c0_51, %c0_52] : memref<9x4x32xf32, #tpu.memory_space<vmem>>, vector<1x4x32xf32>
    %52 = vector.shape_cast %51 : vector<1x4x32xf32> to vector<4x32xf32>
    %cst_53 = arith.constant dense<0.000000e+00> : vector<512x32xf32>
    %53 = tpu.matmul %50, %52, %cst_53 {dimension_numbers = #tpu.dot_dimension_numbers<[1], [0], [0], [1], [0, 0, 1, 1], [], []>} : vector<512x4xf32>, vector<4x32xf32>, vector<512x32xf32> -> vector<512x32xf32>
    %54 = arith.addf %48, %53 : vector<512x32xf32>
    %c0_54 = arith.constant 0 : index
    %c0_55 = arith.constant 0 : index
    %55 = vector.load %arg5[%c0_54, %c0_55] : memref<1x32xf32, #tpu.memory_space<vmem>>, vector<1x32xf32>
    %56 = vector.broadcast %55 : vector<1x32xf32> to vector<512x32xf32>
    %57 = arith.addf %54, %56 : vector<512x32xf32>
    %cst_56 = arith.constant 0.000000e+00 : f32
    %58 = vector.broadcast %cst_56 : f32 to vector<512x32xf32>
    %59 = arith.cmpf oge, %57, %58 : vector<512x32xf32>
    %cst_57 = arith.constant 2.500000e-01 : f32
    %60 = vector.broadcast %cst_57 : f32 to vector<512x32xf32>
    %61 = arith.mulf %60, %57 : vector<512x32xf32>
    %62 = arith.select %59, %57, %61 : vector<512x32xi1>, vector<512x32xf32>
    %c0_58 = arith.constant 0 : index
    %c0_59 = arith.constant 0 : index
    %63 = vector.load %arg6[%c0_58, %c0_59] : memref<512x32xf32, #tpu.memory_space<vmem>>, vector<512x32xf32>
    tpu.vector_store %arg6[%c0_58, %c0_59], %62 {strides = array<i32>} : memref<512x32xf32, #tpu.memory_space<vmem>>, vector<512x32xf32>,
    return
  }
  func.func @transform_0(%arg0: i32) -> (i32, i32, i32) {
    %c0_i32 = arith.constant 0 : i32
    %c0_i32_0 = arith.constant 0 : i32
    %c0_i32_1 = arith.constant 0 : i32
    return %arg0, %c0_i32, %c0_i32_0 : i32, i32, i32
  }
  func.func @transform_1(%arg0: i32) -> (i32, i32, i32) {
    %c0_i32 = arith.constant 0 : i32
    %c0_i32_0 = arith.constant 0 : i32
    %c0_i32_1 = arith.constant 0 : i32
    return %arg0, %c0_i32, %c0_i32_0 : i32, i32, i32
  }
  func.func @transform_2(%arg0: i32) -> (i32, i32, i32) {
    %c0_i32 = arith.constant 0 : i32
    %c0_i32_0 = arith.constant 0 : i32
    %c0_i32_1 = arith.constant 0 : i32
    return %arg0, %c0_i32, %c0_i32_0 : i32, i32, i32
  }
  func.func @transform_3(%arg0: i32) -> (i32, i32, i32) {
    %c0_i32 = arith.constant 0 : i32
    %c0_i32_0 = arith.constant 0 : i32
    %c0_i32_1 = arith.constant 0 : i32
    %c0_i32_2 = arith.constant 0 : i32
    return %c0_i32, %c0_i32_0, %c0_i32_1 : i32, i32, i32
  }
  func.func @transform_4(%arg0: i32) -> (i32, i32) {
    %c0_i32 = arith.constant 0 : i32
    %c0_i32_0 = arith.constant 0 : i32
    %c0_i32_1 = arith.constant 0 : i32
    return %c0_i32, %c0_i32_0 : i32, i32
  }
  func.func @transform_5(%arg0: i32) -> (i32, i32) {
    %c0_i32 = arith.constant 0 : i32
    %c0_i32_0 = arith.constant 0 : i32
    return %arg0, %c0_i32 : i32, i32
  }
}

</mosaic_0001>

<llo_original>
// kernel: tpu_custom_call.1
$region0: #{tpu_custom_call.1}
  #allocation0 [shape = 'u32[]', space=smem, size = 0x4, offset = 0x4, fixed_abs, tag = 'smem constant byte address 0x4 - core index']
  #allocation1 [shape = 'u32[144,128]{1,0:T(1,128)}', space=vmem, size = 0x12000, scoped, tag = 'internal scratch']
  %s0 = inlined_call_operand.vmem [shape: f32[32,18,4], index: 0, kind: input, shape index: {}]
  %s1 = inlined_call_operand.vmem [shape: f32[32,18,4], index: 1, kind: input, shape index: {}]
  %s2 = inlined_call_operand.vmem [shape: f32[32,18,4], index: 2, kind: input, shape index: {}]
  %s3 = inlined_call_operand.vmem [shape: f32[9,4,32], index: 3, kind: input, shape index: {}]
  %s4 = inlined_call_operand.vmem [shape: f32[1,32], index: 4, kind: input, shape index: {}]
  %s5 = inlined_call_operand.vmem [shape: f32[512,32], index: 5, kind: output, shape index: {}]
  %s6 = sld [smem:[#allocation0]]
  $region30: #{tpu_custom_call.1} parent=0
    _
  %s8 = ssub.s32 1, %s6
  %s9 = scalar_select 0, %s8, %s6
  // Predicated region
  $region2: #{tpu_custom_call.1} parent=0 // pred_check
    _
  $region3: #{tpu_custom_call.1} parent=0 // pred_check_branch
    %11 = sbr.rel (0) target = $region5
  $region4: #{tpu_custom_call.1} parent=0 // pred_region
    _
  $region5: #{tpu_custom_call.1} parent=0 // pred_fallthru
    _
  // Predicated region
  $region6: #{tpu_custom_call.1} parent=0 // pred_check
    _
  $region7: #{tpu_custom_call.1} parent=0 // pred_check_branch
    %13 = sbr.rel (0) target = $region9
  $region8: #{tpu_custom_call.1} parent=0 // pred_region
    _
  $region9: #{tpu_custom_call.1} parent=0 // pred_fallthru
    _
  // Predicated region
  $region10: #{tpu_custom_call.1} parent=0 // pred_check
    _
  $region11: #{tpu_custom_call.1} parent=0 // pred_check_branch
    %15 = sbr.rel (0) target = $region13
  $region12: #{tpu_custom_call.1} parent=0 // pred_region
    _
  $region13: #{tpu_custom_call.1} parent=0 // pred_fallthru
    _
  // Predicated region
  $region14: #{tpu_custom_call.1} parent=0 // pred_check
    _
  $region15: #{tpu_custom_call.1} parent=0 // pred_check_branch
    %17 = sbr.rel (0) target = $region17
  $region16: #{tpu_custom_call.1} parent=0 // pred_region
    _
  $region17: #{tpu_custom_call.1} parent=0 // pred_fallthru
    _
  // Predicated region
  $region18: #{tpu_custom_call.1} parent=0 // pred_check
    _
  $region19: #{tpu_custom_call.1} parent=0 // pred_check_branch
    %19 = sbr.rel (0) target = $region21
  $region20: #{tpu_custom_call.1} parent=0 // pred_region
    _
  $region21: #{tpu_custom_call.1} parent=0 // pred_fallthru
    _
  %v20 = vld [vmem:[%s0] sm:$0xff]
  %v21 = vld [vmem:[%s0 + $0x8] sm:$0xff]
  %v22 = vld [vmem:[%s0 + $0x18] sm:$0xff]
  %v23 = vld [vmem:[%s0 + $0x20] sm:$0xff]
  %v24 = vld [vmem:[%s0 + $0x30] sm:$0xff]
  %v25 = vld [vmem:[%s0 + $0x38] sm:$0xff]
  %v26 = vld [vmem:[%s0 + $0x48] sm:$0xff]
  %v27 = vld [vmem:[%s0 + $0x50] sm:$0xff]
  %v28 = vld [vmem:[%s0 + $0x60] sm:$0xff]
  %v29 = vld [vmem:[%s0 + $0x68] sm:$0xff]
  %v30 = vld [vmem:[%s0 + $0x78] sm:$0xff]
  %v31 = vld [vmem:[%s0 + $0x80] sm:$0xff]
  %v32 = vld [vmem:[%s0 + $0x90] sm:$0xff]
  %v33 = vld [vmem:[%s0 + $0x98] sm:$0xff]
  %v34 = vld [vmem:[%s0 + $0xa8] sm:$0xff]
  %v35 = vld [vmem:[%s0 + $0xb0] sm:$0xff]
  %v36 = vld [vmem:[%s0 + $0xc0] sm:$0xff]
  %v37 = vld [vmem:[%s0 + $0xc8] sm:$0xff]
  %v38 = vld [vmem:[%s0 + $0xd8] sm:$0xff]
  %v39 = vld [vmem:[%s0 + $0xe0] sm:$0xff]
  %v40 = vld [vmem:[%s0 + $0xf0] sm:$0xff]
  %v41 = vld [vmem:[%s0 + $0xf8] sm:$0xff]
  %v42 = vld [vmem:[%s0 + $0x108] sm:$0xff]
  %v43 = vld [vmem:[%s0 + $0x110] sm:$0xff]
  %v44 = vld [vmem:[%s0 + $0x120] sm:$0xff]
  %v45 = vld [vmem:[%s0 + $0x128] sm:$0xff]
  %v46 = vld [vmem:[%s0 + $0x138] sm:$0xff]
  %v47 = vld [vmem:[%s0 + $0x140] sm:$0xff]
  %v48 = vld [vmem:[%s0 + $0x150] sm:$0xff]
  %v49 = vld [vmem:[%s0 + $0x158] sm:$0xff]
  %v50 = vld [vmem:[%s0 + $0x168] sm:$0xff]
  %v51 = vld [vmem:[%s0 + $0x170] sm:$0xff]
  %v52 = vld [vmem:[%s0 + $0x180] sm:$0xff]
  %v53 = vld [vmem:[%s0 + $0x188] sm:$0xff]
  %v54 = vld [vmem:[%s0 + $0x198] sm:$0xff]
  %v55 = vld [vmem:[%s0 + $0x1a0] sm:$0xff]
  %v56 = vld [vmem:[%s0 + $0x1b0] sm:$0xff]
  %v57 = vld [vmem:[%s0 + $0x1b8] sm:$0xff]
  %v58 = vld [vmem:[%s0 + $0x1c8] sm:$0xff]
  %v59 = vld [vmem:[%s0 + $0x1d0] sm:$0xff]
  %v60 = vld [vmem:[%s0 + $0x1e0] sm:$0xff]
  %v61 = vld [vmem:[%s0 + $0x1e8] sm:$0xff]
  %v62 = vld [vmem:[%s0 + $0x1f8] sm:$0xff]
  %v63 = vld [vmem:[%s0 + $0x200] sm:$0xff]
  %v64 = vld [vmem:[%s0 + $0x210] sm:$0xff]
  %v65 = vld [vmem:[%s0 + $0x218] sm:$0xff]
  %v66 = vld [vmem:[%s0 + $0x228] sm:$0xff]
  %v67 = vld [vmem:[%s0 + $0x230] sm:$0xff]
  %v68 = vld [vmem:[%s0 + $0x240] sm:$0xff]
  %v69 = vld [vmem:[%s0 + $0x248] sm:$0xff]
  %v70 = vld [vmem:[%s0 + $0x258] sm:$0xff]
  %v71 = vld [vmem:[%s0 + $0x260] sm:$0xff]
  %v72 = vld [vmem:[%s0 + $0x270] sm:$0xff]
  %v73 = vld [vmem:[%s0 + $0x278] sm:$0xff]
  %v74 = vld [vmem:[%s0 + $0x288] sm:$0xff]
  %v75 = vld [vmem:[%s0 + $0x290] sm:$0xff]
  %v76 = vld [vmem:[%s0 + $0x2a0] sm:$0xff]
  %v77 = vld [vmem:[%s0 + $0x2a8] sm:$0xff]
  %v78 = vld [vmem:[%s0 + $0x2b8] sm:$0xff]
  %v79 = vld [vmem:[%s0 + $0x2c0] sm:$0xff]
  %v80 = vld [vmem:[%s0 + $0x2d0] sm:$0xff]
  %v81 = vld [vmem:[%s0 + $0x2d8] sm:$0xff]
  %v82 = vld [vmem:[%s0 + $0x2e8] sm:$0xff]
  %v83 = vld [vmem:[%s0 + $0x2f0] sm:$0xff]
  %v84 = vld [vmem:[%s3] sm:$0xf]
  %v85 = vld [vmem:[%s0 + $0x1] sm:$0xff]
  %v86 = vld [vmem:[%s0 + $0x9] sm:$0xff]
  %v87 = vld [vmem:[%s0 + $0x19] sm:$0xff]
  %v88 = vld [vmem:[%s0 + $0x21] sm:$0xff]
  %v89 = vld [vmem:[%s0 + $0x31] sm:$0xff]
  %v90 = vld [vmem:[%s0 + $0x39] sm:$0xff]
  %v91 = vld [vmem:[%s0 + $0x49] sm:$0xff]
  %v92 = vld [vmem:[%s0 + $0x51] sm:$0xff]
  %v93 = vld [vmem:[%s0 + $0x61] sm:$0xff]
  %v94 = vld [vmem:[%s0 + $0x69] sm:$0xff]
  %v95 = vld [vmem:[%s0 + $0x79] sm:$0xff]
  %v96 = vld [vmem:[%s0 + $0x81] sm:$0xff]
  %v97 = vld [vmem:[%s0 + $0x91] sm:$0xff]
  %v98 = vld [vmem:[%s0 + $0x99] sm:$0xff]
  %v99 = vld [vmem:[%s0 + $0xa9] sm:$0xff]
  %v100 = vld [vmem:[%s0 + $0xb1] sm:$0xff]
  %v101 = vld [vmem:[%s0 + $0xc1] sm:$0xff]
  %v102 = vld [vmem:[%s0 + $0xc9] sm:$0xff]
  %v103 = vld [vmem:[%s0 + $0xd9] sm:$0xff]
  %v104 = vld [vmem:[%s0 + $0xe1] sm:$0xff]
  %v105 = vld [vmem:[%s0 + $0xf1] sm:$0xff]
  %v106 = vld [vmem:[%s0 + $0xf9] sm:$0xff]
  %v107 = vld [vmem:[%s0 + $0x109] sm:$0xff]
  %v108 = vld [vmem:[%s0 + $0x111] sm:$0xff]
  %v109 = vld [vmem:[%s0 + $0x121] sm:$0xff]
  %v110 = vld [vmem:[%s0 + $0x129] sm:$0xff]
  %v111 = vld [vmem:[%s0 + $0x139] sm:$0xff]
  %v112 = vld [vmem:[%s0 + $0x141] sm:$0xff]
  %v113 = vld [vmem:[%s0 + $0x151] sm:$0xff]
  %v114 = vld [vmem:[%s0 + $0x159] sm:$0xff]
  %v115 = vld [vmem:[%s0 + $0x169] sm:$0xff]
  %v116 = vld [vmem:[%s0 + $0x171] sm:$0xff]
  %v117 = vld [vmem:[%s0 + $0x181] sm:$0xff]
  %v118 = vld [vmem:[%s0 + $0x189] sm:$0xff]
  %v119 = vld [vmem:[%s0 + $0x199] sm:$0xff]
  %v120 = vld [vmem:[%s0 + $0x1a1] sm:$0xff]
  %v121 = vld [vmem:[%s0 + $0x1b1] sm:$0xff]
  %v122 = vld [vmem:[%s0 + $0x1b9] sm:$0xff]
  %v123 = vld [vmem:[%s0 + $0x1c9] sm:$0xff]
  %v124 = vld [vmem:[%s0 + $0x1d1] sm:$0xff]
  %v125 = vld [vmem:[%s0 + $0x1e1] sm:$0xff]
  %v126 = vld [vmem:[%s0 + $0x1e9] sm:$0xff]
  %v127 = vld [vmem:[%s0 + $0x1f9] sm:$0xff]
  %v128 = vld [vmem:[%s0 + $0x201] sm:$0xff]
  %v129 = vld [vmem:[%s0 + $0x211] sm:$0xff]
  %v130 = vld [vmem:[%s0 + $0x219] sm:$0xff]
  %v131 = vld [vmem:[%s0 + $0x229] sm:$0xff]
  %v132 = vld [vmem:[%s0 + $0x231] sm:$0xff]
  %v133 = vld [vmem:[%s0 + $0x241] sm:$0xff]
  %v134 = vld [vmem:[%s0 + $0x249] sm:$0xff]
  %v135 = vld [vmem:[%s0 + $0x259] sm:$0xff]
  %v136 = vld [vmem:[%s0 + $0x261] sm:$0xff]
  %v137 = vld [vmem:[%s0 + $0x271] sm:$0xff]
  %v138 = vld [vmem:[%s0 + $0x279] sm:$0xff]
  %v139 = vld [vmem:[%s0 + $0x289] sm:$0xff]
  %v140 = vld [vmem:[%s0 + $0x291] sm:$0xff]
  %v141 = vld [vmem:[%s0 + $0x2a1] sm:$0xff]
  %v142 = vld [vmem:[%s0 + $0x2a9] sm:$0xff]
  %v143 = vld [vmem:[%s0 + $0x2b9] sm:$0xff]
  %v144 = vld [vmem:[%s0 + $0x2c1] sm:$0xff]
  %v145 = vld [vmem:[%s0 + $0x2d1] sm:$0xff]
  %v146 = vld [vmem:[%s0 + $0x2d9] sm:$0xff]
  %v147 = vld [vmem:[%s0 + $0x2e9] sm:$0xff]
  %v148 = vld [vmem:[%s0 + $0x2f1] sm:$0xff]
  %s149 = scalar_lea.vmem %s3, 4
  %v150 = vld [vmem:[%s149] sm:$0xf]
  %vm151 = vcmask 31744
  %v153 = vsel %vm151, %v85, 0
  %v156 = vsel %vm151, %v86, 0
  %v159 = vsel %vm151, %v87, 0
  %v162 = vsel %vm151, %v88, 0
  %v165 = vsel %vm151, %v89, 0
  %v168 = vsel %vm151, %v90, 0
  %v171 = vsel %vm151, %v91, 0
  %v174 = vsel %vm151, %v92, 0
  %v177 = vsel %vm151, %v93, 0
  %v180 = vsel %vm151, %v94, 0
  %v183 = vsel %vm151, %v95, 0
  %v186 = vsel %vm151, %v96, 0
  %v189 = vsel %vm151, %v97, 0
  %v192 = vsel %vm151, %v98, 0
  %v195 = vsel %vm151, %v99, 0
  %v198 = vsel %vm151, %v100, 0
  %v201 = vsel %vm151, %v101, 0
  %v204 = vsel %vm151, %v102, 0
  %v207 = vsel %vm151, %v103, 0
  %v210 = vsel %vm151, %v104, 0
  %v213 = vsel %vm151, %v105, 0
  %v216 = vsel %vm151, %v106, 0
  %v219 = vsel %vm151, %v107, 0
  %v222 = vsel %vm151, %v108, 0
  %v225 = vsel %vm151, %v109, 0
  %v228 = vsel %vm151, %v110, 0
  %v231 = vsel %vm151, %v111, 0
  %v234 = vsel %vm151, %v112, 0
  %v237 = vsel %vm151, %v113, 0
  %v240 = vsel %vm151, %v114, 0
  %v243 = vsel %vm151, %v115, 0
  %v246 = vsel %vm151, %v116, 0
  %v249 = vsel %vm151, %v117, 0
  %v252 = vsel %vm151, %v118, 0
  %v255 = vsel %vm151, %v119, 0
  %v258 = vsel %vm151, %v120, 0
  %v261 = vsel %vm151, %v121, 0
  %v264 = vsel %vm151, %v122, 0
  %v267 = vsel %vm151, %v123, 0
  %v270 = vsel %vm151, %v124, 0
  %v273 = vsel %vm151, %v125, 0
  %v276 = vsel %vm151, %v126, 0
  %v279 = vsel %vm151, %v127, 0
  %v282 = vsel %vm151, %v128, 0
  %v285 = vsel %vm151, %v129, 0
  %v288 = vsel %vm151, %v130, 0
  %v291 = vsel %vm151, %v131, 0
  %v294 = vsel %vm151, %v132, 0
  %v297 = vsel %vm151, %v133, 0
  %v300 = vsel %vm151, %v134, 0
  %v303 = vsel %vm151, %v135, 0
  %v306 = vsel %vm151, %v136, 0
  %v309 = vsel %vm151, %v137, 0
  %v312 = vsel %vm151, %v138, 0
  %v315 = vsel %vm151, %v139, 0
  %v318 = vsel %vm151, %v140, 0
  %v321 = vsel %vm151, %v141, 0
  %v324 = vsel %vm151, %v142, 0
  %v327 = vsel %vm151, %v143, 0
  %v330 = vsel %vm151, %v144, 0
  %v333 = vsel %vm151, %v145, 0
  %v336 = vsel %vm151, %v146, 0
  %v339 = vsel %vm151, %v147, 0
  %v342 = vsel %vm151, %v148, 0
  %vm344 = vcmask 1043456
  %v346 = vsel %vm344, %v150, 0
  %348 = vmatprep.subr.mxu0 0.0
  %349 = vmatpush1.msra.mxu0 0.0
  %350 = vmatprep.subr.mxu0 0.0
  %351 = vmatpush1.msra.mxu0 0.0
  %352 = vmatprep.subr.mxu0 0.0
  %353 = vmatpush1.msra.mxu0 0.0
  %354 = vmatprep.subr.mxu0 0.0
  %355 = vmatpush1.msra.mxu0 0.0
  %356 = vmatprep.subr.mxu0 0.0
  %357 = vmatpush1.msra.mxu0 0.0
  %358 = vmatprep.subr.mxu0 0.0
  %359 = vmatpush1.msra.mxu0 0.0
  %360 = vmatprep.subr.mxu0 0.0
  %361 = vmatpush1.msra.mxu0 0.0
  %362 = vmatprep.subr.mxu0 0.0
  %363 = vmatpush1.msra.mxu0 0.0
  %364 = vmatprep.subr.mxu0 0.0
  %365 = vmatpush1.msra.mxu0 0.0
  %366 = vmatprep.subr.mxu0 0.0
  %367 = vmatpush1.msra.mxu0 0.0
  %368 = vmatprep.subr.mxu0 0.0
  %369 = vmatpush1.msra.mxu0 0.0
  %370 = vmatprep.subr.mxu0 0.0
  %371 = vmatpush1.msra.mxu0 0.0
  %372 = vmatprep.subr.mxu0 0.0
  %373 = vmatpush1.msra.mxu0 0.0
  %374 = vmatprep.subr.mxu0 0.0
  %375 = vmatpush1.msra.mxu0 0.0
  %376 = vmatprep.subr.mxu0 0.0
  %377 = vmatpush1.msra.mxu0 0.0
  %378 = vmatprep.subr.mxu0 0.0
  %379 = vmatpush1.msra.mxu0 %v346
  %380 = vmatprep.subr.mxu0 0.0
  %381 = vmatpush2.msra.mxu0 0.0
  %382 = vmatprep.subr.mxu0 0.0
  %383 = vmatpush2.msra.mxu0 0.0
  %384 = vmatprep.subr.mxu0 0.0
  %385 = vmatpush2.msra.mxu0 0.0
  %386 = vmatprep.subr.mxu0 0.0
  %387 = vmatpush2.msra.mxu0 0.0
  %388 = vmatprep.subr.mxu0 0.0
  %389 = vmatpush2.msra.mxu0 0.0
  %390 = vmatprep.subr.mxu0 0.0
  %391 = vmatpush2.msra.mxu0 0.0
  %392 = vmatprep.subr.mxu0 0.0
  %393 = vmatpush2.msra.mxu0 0.0
  %394 = vmatprep.subr.mxu0 0.0
  %395 = vmatpush2.msra.mxu0 0.0
  %396 = vmatprep.subr.mxu0 0.0
  %397 = vmatpush2.msra.mxu0 0.0
  %398 = vmatprep.subr.mxu0 0.0
  %399 = vmatpush2.msra.mxu0 0.0
  %400 = vmatprep.subr.mxu0 0.0
  %401 = vmatpush2.msra.mxu0 0.0
  %402 = vmatprep.subr.mxu0 0.0
  %403 = vmatpush2.msra.mxu0 0.0
  %404 = vmatprep.subr.mxu0 0.0
  %405 = vmatpush2.msra.mxu0 0.0
  %406 = vmatprep.subr.mxu0 0.0
  %407 = vmatpush2.msra.mxu0 0.0
  %408 = vmatprep.subr.mxu0 0.0
  %409 = vmatpush2.msra.mxu0 0.0
  %410 = vmatprep.subr.mxu0 0.0
  %411 = vmatpush2.msra.mxu0 0.0
  %412 = vmatprep.mubr.f32.mxu0 0.0
  %413 = vmatmul.mubr.f32.gmra.mxu0 %v153
  %v414 = vpop.f32.mrf.mxu0
  %v415 = vadd.f32 0.0, %v414
  %v416 = vpop.f32.mrf.mxu0
  %417 = vmatprep.mubr.f32.mxu0 0.0
  %418 = vmatmul.mubr.f32.gmra.mxu0 %v156
  %v419 = vpop.f32.mrf.mxu0
  %v420 = vadd.f32 0.0, %v419
  %v421 = vpop.f32.mrf.mxu0
  %422 = vmatprep.mubr.f32.mxu0 0.0
  %423 = vmatmul.mubr.f32.gmra.mxu0 %v159
  %v424 = vpop.f32.mrf.mxu0
  %v425 = vadd.f32 0.0, %v424
  %v426 = vpop.f32.mrf.mxu0
  %427 = vmatprep.mubr.f32.mxu0 0.0
  %428 = vmatmul.mubr.f32.gmra.mxu0 %v162
  %v429 = vpop.f32.mrf.mxu0
  %v430 = vadd.f32 0.0, %v429
  %v431 = vpop.f32.mrf.mxu0
  %432 = vmatprep.mubr.f32.mxu0 0.0
  %433 = vmatmul.mubr.f32.gmra.mxu0 %v165
  %v434 = vpop.f32.mrf.mxu0
  %v435 = vadd.f32 0.0, %v434
  %v436 = vpop.f32.mrf.mxu0
  %437 = vmatprep.mubr.f32.mxu0 0.0
  %438 = vmatmul.mubr.f32.gmra.mxu0 %v168
  %v439 = vpop.f32.mrf.mxu0
  %v440 = vadd.f32 0.0, %v439
  %v441 = vpop.f32.mrf.mxu0
  %442 = vmatprep.mubr.f32.mxu0 0.0
  %443 = vmatmul.mubr.f32.gmra.mxu0 %v171
  %v444 = vpop.f32.mrf.mxu0
  %v445 = vadd.f32 0.0, %v444
  %v446 = vpop.f32.mrf.mxu0
  %447 = vmatprep.mubr.f32.mxu0 0.0
  %448 = vmatmul.mubr.f32.gmra.mxu0 %v174
  %v449 = vpop.f32.mrf.mxu0
  %v450 = vadd.f32 0.0, %v449
  %v451 = vpop.f32.mrf.mxu0
  %452 = vmatprep.mubr.f32.mxu0 0.0
  %453 = vmatmul.mubr.f32.gmra.mxu0 %v177
  %v454 = vpop.f32.mrf.mxu0
  %v455 = vadd.f32 0.0, %v454
  %v456 = vpop.f32.mrf.mxu0
  %457 = vmatprep.mubr.f32.mxu0 0.0
  %458 = vmatmul.mubr.f32.gmra.mxu0 %v180
  %v459 = vpop.f32.mrf.mxu0
  %v460 = vadd.f32 0.0, %v459
  %v461 = vpop.f32.mrf.mxu0
  %462 = vmatprep.mubr.f32.mxu0 0.0
  %463 = vmatmul.mubr.f32.gmra.mxu0 %v183
  %v464 = vpop.f32.mrf.mxu0
  %v465 = vadd.f32 0.0, %v464
  %v466 = vpop.f32.mrf.mxu0
  %467 = vmatprep.mubr.f32.mxu0 0.0
  %468 = vmatmul.mubr.f32.gmra.mxu0 %v186
  %v469 = vpop.f32.mrf.mxu0
  %v470 = vadd.f32 0.0, %v469
  %v471 = vpop.f32.mrf.mxu0
  %472 = vmatprep.mubr.f32.mxu0 0.0
  %473 = vmatmul.mubr.f32.gmra.mxu0 %v189
  %v474 = vpop.f32.mrf.mxu0
  %v475 = vadd.f32 0.0, %v474
  %v476 = vpop.f32.mrf.mxu0
  %477 = vmatprep.mubr.f32.mxu0 0.0
  %478 = vmatmul.mubr.f32.gmra.mxu0 %v192
  %v479 = vpop.f32.mrf.mxu0
  %v480 = vadd.f32 0.0, %v479
  %v481 = vpop.f32.mrf.mxu0
  %482 = vmatprep.mubr.f32.mxu0 0.0
  %483 = vmatmul.mubr.f32.gmra.mxu0 %v195
  %v484 = vpop.f32.mrf.mxu0
  %v485 = vadd.f32 0.0, %v484
  %v486 = vpop.f32.mrf.mxu0
  %487 = vmatprep.mubr.f32.mxu0 0.0
  %488 = vmatmul.mubr.f32.gmra.mxu0 %v198
  %v489 = vpop.f32.mrf.mxu0
  %v490 = vadd.f32 0.0, %v489
  %v491 = vpop.f32.mrf.mxu0
  %492 = vmatprep.mubr.f32.mxu0 0.0
  %493 = vmatmul.mubr.f32.gmra.mxu0 %v201
  %v494 = vpop.f32.mrf.mxu0
  %v495 = vadd.f32 0.0, %v494
  %v496 = vpop.f32.mrf.mxu0
  %497 = vmatprep.mubr.f32.mxu0 0.0
  %498 = vmatmul.mubr.f32.gmra.mxu0 %v204
  %v499 = vpop.f32.mrf.mxu0
  %v500 = vadd.f32 0.0, %v499
  %v501 = vpop.f32.mrf.mxu0
  %502 = vmatprep.mubr.f32.mxu0 0.0
  %503 = vmatmul.mubr.f32.gmra.mxu0 %v207
  %v504 = vpop.f32.mrf.mxu0
  %v505 = vadd.f32 0.0, %v504
  %v506 = vpop.f32.mrf.mxu0
  %507 = vmatprep.mubr.f32.mxu0 0.0
  %508 = vmatmul.mubr.f32.gmra.mxu0 %v210
  %v509 = vpop.f32.mrf.mxu0
  %v510 = vadd.f32 0.0, %v509
  %v511 = vpop.f32.mrf.mxu0
  %512 = vmatprep.mubr.f32.mxu0 0.0
  %513 = vmatmul.mubr.f32.gmra.mxu0 %v213
  %v514 = vpop.f32.mrf.mxu0
  %v515 = vadd.f32 0.0, %v514
  %v516 = vpop.f32.mrf.mxu0
  %517 = vmatprep.mubr.f32.mxu0 0.0
  %518 = vmatmul.mubr.f32.gmra.mxu0 %v216
  %v519 = vpop.f32.mrf.mxu0
  %v520 = vadd.f32 0.0, %v519
  %v521 = vpop.f32.mrf.mxu0
  %522 = vmatprep.mubr.f32.mxu0 0.0
  %523 = vmatmul.mubr.f32.gmra.mxu0 %v219
  %v524 = vpop.f32.mrf.mxu0
  %v525 = vadd.f32 0.0, %v524
  %v526 = vpop.f32.mrf.mxu0
  %527 = vmatprep.mubr.f32.mxu0 0.0
  %528 = vmatmul.mubr.f32.gmra.mxu0 %v222
  %v529 = vpop.f32.mrf.mxu0
  %v530 = vadd.f32 0.0, %v529
  %v531 = vpop.f32.mrf.mxu0
  %532 = vmatprep.mubr.f32.mxu0 0.0
  %533 = vmatmul.mubr.f32.gmra.mxu0 %v225
  %v534 = vpop.f32.mrf.mxu0
  %v535 = vadd.f32 0.0, %v534
  %v536 = vpop.f32.mrf.mxu0
  %537 = vmatprep.mubr.f32.mxu0 0.0
  %538 = vmatmul.mubr.f32.gmra.mxu0 %v228
  %v539 = vpop.f32.mrf.mxu0
  %v540 = vadd.f32 0.0, %v539
  %v541 = vpop.f32.mrf.mxu0
  %542 = vmatprep.mubr.f32.mxu0 0.0
  %543 = vmatmul.mubr.f32.gmra.mxu0 %v231
  %v544 = vpop.f32.mrf.mxu0
  %v545 = vadd.f32 0.0, %v544
  %v546 = vpop.f32.mrf.mxu0
  %547 = vmatprep.mubr.f32.mxu0 0.0
  %548 = vmatmul.mubr.f32.gmra.mxu0 %v234
  %v549 = vpop.f32.mrf.mxu0
  %v550 = vadd.f32 0.0, %v549
  %v551 = vpop.f32.mrf.mxu0
  %552 = vmatprep.mubr.f32.mxu0 0.0
  %553 = vmatmul.mubr.f32.gmra.mxu0 %v237
  %v554 = vpop.f32.mrf.mxu0
  %v555 = vadd.f32 0.0, %v554
  %v556 = vpop.f32.mrf.mxu0
  %557 = vmatprep.mubr.f32.mxu0 0.0
  %558 = vmatmul.mubr.f32.gmra.mxu0 %v240
  %v559 = vpop.f32.mrf.mxu0
  %v560 = vadd.f32 0.0, %v559
  %v561 = vpop.f32.mrf.mxu0
  %562 = vmatprep.mubr.f32.mxu0 0.0
  %563 = vmatmul.mubr.f32.gmra.mxu0 %v243
  %v564 = vpop.f32.mrf.mxu0
  %v565 = vadd.f32 0.0, %v564
  %v566 = vpop.f32.mrf.mxu0
  %567 = vmatprep.mubr.f32.mxu0 0.0
  %568 = vmatmul.mubr.f32.gmra.mxu0 %v246
  %v569 = vpop.f32.mrf.mxu0
  %v570 = vadd.f32 0.0, %v569
  %v571 = vpop.f32.mrf.mxu0
  %572 = vmatprep.mubr.f32.mxu0 0.0
  %573 = vmatmul.mubr.f32.gmra.mxu0 %v249
  %v574 = vpop.f32.mrf.mxu0
  %v575 = vadd.f32 0.0, %v574
  %v576 = vpop.f32.mrf.mxu0
  %577 = vmatprep.mubr.f32.mxu0 0.0
  %578 = vmatmul.mubr.f32.gmra.mxu0 %v252
  %v579 = vpop.f32.mrf.mxu0
  %v580 = vadd.f32 0.0, %v579
  %v581 = vpop.f32.mrf.mxu0
  %582 = vmatprep.mubr.f32.mxu0 0.0
  %583 = vmatmul.mubr.f32.gmra.mxu0 %v255
  %v584 = vpop.f32.mrf.mxu0
  %v585 = vadd.f32 0.0, %v584
  %v586 = vpop.f32.mrf.mxu0
  %587 = vmatprep.mubr.f32.mxu0 0.0
  %588 = vmatmul.mubr.f32.gmra.mxu0 %v258
  %v589 = vpop.f32.mrf.mxu0
  %v590 = vadd.f32 0.0, %v589
  %v591 = vpop.f32.mrf.mxu0
  %592 = vmatprep.mubr.f32.mxu0 0.0
  %593 = vmatmul.mubr.f32.gmra.mxu0 %v261
  %v594 = vpop.f32.mrf.mxu0
  %v595 = vadd.f32 0.0, %v594
  %v596 = vpop.f32.mrf.mxu0
  %597 = vmatprep.mubr.f32.mxu0 0.0
  %598 = vmatmul.mubr.f32.gmra.mxu0 %v264
  %v599 = vpop.f32.mrf.mxu0
  %v600 = vadd.f32 0.0, %v599
  %v601 = vpop.f32.mrf.mxu0
  %602 = vmatprep.mubr.f32.mxu0 0.0
  %603 = vmatmul.mubr.f32.gmra.mxu0 %v267
  %v604 = vpop.f32.mrf.mxu0
  %v605 = vadd.f32 0.0, %v604
  %v606 = vpop.f32.mrf.mxu0
  %607 = vmatprep.mubr.f32.mxu0 0.0
  %608 = vmatmul.mubr.f32.gmra.mxu0 %v270
  %v609 = vpop.f32.mrf.mxu0
  %v610 = vadd.f32 0.0, %v609
  %v611 = vpop.f32.mrf.mxu0
  %612 = vmatprep.mubr.f32.mxu0 0.0
  %613 = vmatmul.mubr.f32.gmra.mxu0 %v273
  %v614 = vpop.f32.mrf.mxu0
  %v615 = vadd.f32 0.0, %v614
  %v616 = vpop.f32.mrf.mxu0
  %617 = vmatprep.mubr.f32.mxu0 0.0
  %618 = vmatmul.mubr.f32.gmra.mxu0 %v276
  %v619 = vpop.f32.mrf.mxu0
  %v620 = vadd.f32 0.0, %v619
  %v621 = vpop.f32.mrf.mxu0
  %622 = vmatprep.mubr.f32.mxu0 0.0
  %623 = vmatmul.mubr.f32.gmra.mxu0 %v279
  %v624 = vpop.f32.mrf.mxu0
  %v625 = vadd.f32 0.0, %v624
  %v626 = vpop.f32.mrf.mxu0
  %627 = vmatprep.mubr.f32.mxu0 0.0
  %628 = vmatmul.mubr.f32.gmra.mxu0 %v282
  %v629 = vpop.f32.mrf.mxu0
  %v630 = vadd.f32 0.0, %v629
  %v631 = vpop.f32.mrf.mxu0
  %632 = vmatprep.mubr.f32.mxu0 0.0
  %633 = vmatmul.mubr.f32.gmra.mxu0 %v285
  %v634 = vpop.f32.mrf.mxu0
  %v635 = vadd.f32 0.0, %v634
  %v636 = vpop.f32.mrf.mxu0
  %637 = vmatprep.mubr.f32.mxu0 0.0
  %638 = vmatmul.mubr.f32.gmra.mxu0 %v288
  %v639 = vpop.f32.mrf.mxu0
  %v640 = vadd.f32 0.0, %v639
  %v641 = vpop.f32.mrf.mxu0
  %642 = vmatprep.mubr.f32.mxu0 0.0
  %643 = vmatmul.mubr.f32.gmra.mxu0 %v291
  %v644 = vpop.f32.mrf.mxu0
  %v645 = vadd.f32 0.0, %v644
  %v646 = vpop.f32.mrf.mxu0
  %647 = vmatprep.mubr.f32.mxu0 0.0
  %648 = vmatmul.mubr.f32.gmra.mxu0 %v294
  %v649 = vpop.f32.mrf.mxu0
  %v650 = vadd.f32 0.0, %v649
  %v651 = vpop.f32.mrf.mxu0
  %652 = vmatprep.mubr.f32.mxu0 0.0
  %653 = vmatmul.mubr.f32.gmra.mxu0 %v297
  %v654 = vpop.f32.mrf.mxu0
  %v655 = vadd.f32 0.0, %v654
  %v656 = vpop.f32.mrf.mxu0
  %657 = vmatprep.mubr.f32.mxu0 0.0
  %658 = vmatmul.mubr.f32.gmra.mxu0 %v300
  %v659 = vpop.f32.mrf.mxu0
  %v660 = vadd.f32 0.0, %v659
  %v661 = vpop.f32.mrf.mxu0
  %662 = vmatprep.mubr.f32.mxu0 0.0
  %663 = vmatmul.mubr.f32.gmra.mxu0 %v303
  %v664 = vpop.f32.mrf.mxu0
  %v665 = vadd.f32 0.0, %v664
  %v666 = vpop.f32.mrf.mxu0
  %667 = vmatprep.mubr.f32.mxu0 0.0
  %668 = vmatmul.mubr.f32.gmra.mxu0 %v306
  %v669 = vpop.f32.mrf.mxu0
  %v670 = vadd.f32 0.0, %v669
  %v671 = vpop.f32.mrf.mxu0
  %672 = vmatprep.mubr.f32.mxu0 0.0
  %673 = vmatmul.mubr.f32.gmra.mxu0 %v309
  %v674 = vpop.f32.mrf.mxu0
  %v675 = vadd.f32 0.0, %v674
  %v676 = vpop.f32.mrf.mxu0
  %677 = vmatprep.mubr.f32.mxu0 0.0
  %678 = vmatmul.mubr.f32.gmra.mxu0 %v312
  %v679 = vpop.f32.mrf.mxu0
  %v680 = vadd.f32 0.0, %v679
  %v681 = vpop.f32.mrf.mxu0
  %682 = vmatprep.mubr.f32.mxu0 0.0
  %683 = vmatmul.mubr.f32.gmra.mxu0 %v315
  %v684 = vpop.f32.mrf.mxu0
  %v685 = vadd.f32 0.0, %v684
  %v686 = vpop.f32.mrf.mxu0
  %687 = vmatprep.mubr.f32.mxu0 0.0
  %688 = vmatmul.mubr.f32.gmra.mxu0 %v318
  %v689 = vpop.f32.mrf.mxu0
  %v690 = vadd.f32 0.0, %v689
  %v691 = vpop.f32.mrf.mxu0
  %692 = vmatprep.mubr.f32.mxu0 0.0
  %693 = vmatmul.mubr.f32.gmra.mxu0 %v321
  %v694 = vpop.f32.mrf.mxu0
  %v695 = vadd.f32 0.0, %v694
  %v696 = vpop.f32.mrf.mxu0
  %697 = vmatprep.mubr.f32.mxu0 0.0
  %698 = vmatmul.mubr.f32.gmra.mxu0 %v324
  %v699 = vpop.f32.mrf.mxu0
  %v700 = vadd.f32 0.0, %v699
  %v701 = vpop.f32.mrf.mxu0
  %702 = vmatprep.mubr.f32.mxu0 0.0
  %703 = vmatmul.mubr.f32.gmra.mxu0 %v327
  %v704 = vpop.f32.mrf.mxu0
  %v705 = vadd.f32 0.0, %v704
  %v706 = vpop.f32.mrf.mxu0
  %707 = vmatprep.mubr.f32.mxu0 0.0
  %708 = vmatmul.mubr.f32.gmra.mxu0 %v330
  %v709 = vpop.f32.mrf.mxu0
  %v710 = vadd.f32 0.0, %v709
  %v711 = vpop.f32.mrf.mxu0
  %712 = vmatprep.mubr.f32.mxu0 0.0
  %713 = vmatmul.mubr.f32.gmra.mxu0 %v333
  %v714 = vpop.f32.mrf.mxu0
  %v715 = vadd.f32 0.0, %v714
  %v716 = vpop.f32.mrf.mxu0
  %717 = vmatprep.mubr.f32.mxu0 0.0
  %718 = vmatmul.mubr.f32.gmra.mxu0 %v336
  %v719 = vpop.f32.mrf.mxu0
  %v720 = vadd.f32 0.0, %v719
  %v721 = vpop.f32.mrf.mxu0
  %722 = vmatprep.mubr.f32.mxu0 0.0
  %723 = vmatmul.mubr.f32.gmra.mxu0 %v339
  %v724 = vpop.f32.mrf.mxu0
  %v725 = vadd.f32 0.0, %v724
  %v726 = vpop.f32.mrf.mxu0
  %727 = vmatprep.mubr.f32.mxu0 0.0
  %728 = vmatmul.mubr.f32.gmra.mxu0 %v342
  %v729 = vpop.f32.mrf.mxu0
  %v730 = vadd.f32 0.0, %v729
  %v731 = vpop.f32.mrf.mxu0
  %732 = vdwg.mxu0
  %v734 = vsel %vm151, %v20, 0
  %v737 = vsel %vm151, %v21, 0
  %v740 = vsel %vm151, %v22, 0
  %v743 = vsel %vm151, %v23, 0
  %v746 = vsel %vm151, %v24, 0
  %v749 = vsel %vm151, %v25, 0
  %v752 = vsel %vm151, %v26, 0
  %v755 = vsel %vm151, %v27, 0
  %v758 = vsel %vm151, %v28, 0
  %v761 = vsel %vm151, %v29, 0
  %v764 = vsel %vm151, %v30, 0
  %v767 = vsel %vm151, %v31, 0
  %v770 = vsel %vm151, %v32, 0
  %v773 = vsel %vm151, %v33, 0
  %v776 = vsel %vm151, %v34, 0
  %v779 = vsel %vm151, %v35, 0
  %v782 = vsel %vm151, %v36, 0
  %v785 = vsel %vm151, %v37, 0
  %v788 = vsel %vm151, %v38, 0
  %v791 = vsel %vm151, %v39, 0
  %v794 = vsel %vm151, %v40, 0
  %v797 = vsel %vm151, %v41, 0
  %v800 = vsel %vm151, %v42, 0
  %v803 = vsel %vm151, %v43, 0
  %v806 = vsel %vm151, %v44, 0
  %v809 = vsel %vm151, %v45, 0
  %v812 = vsel %vm151, %v46, 0
  %v815 = vsel %vm151, %v47, 0
  %v818 = vsel %vm151, %v48, 0
  %v821 = vsel %vm151, %v49, 0
  %v824 = vsel %vm151, %v50, 0
  %v827 = vsel %vm151, %v51, 0
  %v830 = vsel %vm151, %v52, 0
  %v833 = vsel %vm151, %v53, 0
  %v836 = vsel %vm151, %v54, 0
  %v839 = vsel %vm151, %v55, 0
  %v842 = vsel %vm151, %v56, 0
  %v845 = vsel %vm151, %v57, 0
  %v848 = vsel %vm151, %v58, 0
  %v851 = vsel %vm151, %v59, 0
  %v854 = vsel %vm151, %v60, 0
  %v857 = vsel %vm151, %v61, 0
  %v860 = vsel %vm151, %v62, 0
  %v863 = vsel %vm151, %v63, 0
  %v866 = vsel %vm151, %v64, 0
  %v869 = vsel %vm151, %v65, 0
  %v872 = vsel %vm151, %v66, 0
  %v875 = vsel %vm151, %v67, 0
  %v878 = vsel %vm151, %v68, 0
  %v881 = vsel %vm151, %v69, 0
  %v884 = vsel %vm151, %v70, 0
  %v887 = vsel %vm151, %v71, 0
  %v890 = vsel %vm151, %v72, 0
  %v893 = vsel %vm151, %v73, 0
  %v896 = vsel %vm151, %v74, 0
  %v899 = vsel %vm151, %v75, 0
  %v902 = vsel %vm151, %v76, 0
  %v905 = vsel %vm151, %v77, 0
  %v908 = vsel %vm151, %v78, 0
  %v911 = vsel %vm151, %v79, 0
  %v914 = vsel %vm151, %v80, 0
  %v917 = vsel %vm151, %v81, 0
  %v920 = vsel %vm151, %v82, 0
  %v923 = vsel %vm151, %v83, 0
  %v926 = vsel %vm344, %v84, 0
  %928 = vmatprep.subr.mxu0 0.0
  %929 = vmatpush1.msra.mxu0 0.0
  %930 = vmatprep.subr.mxu0 0.0
  %931 = vmatpush1.msra.mxu0 0.0
  %932 = vmatprep.subr.mxu0 0.0
  %933 = vmatpush1.msra.mxu0 0.0
  %934 = vmatprep.subr.mxu0 0.0
  %935 = vmatpush1.msra.mxu0 0.0
  %936 = vmatprep.subr.mxu0 0.0
  %937 = vmatpush1.msra.mxu0 0.0
  %938 = vmatprep.subr.mxu0 0.0
  %939 = vmatpush1.msra.mxu0 0.0
  %940 = vmatprep.subr.mxu0 0.0
  %941 = vmatpush1.msra.mxu0 0.0
  %942 = vmatprep.subr.mxu0 0.0
  %943 = vmatpush1.msra.mxu0 0.0
  %944 = vmatprep.subr.mxu0 0.0
  %945 = vmatpush1.msra.mxu0 0.0
  %946 = vmatprep.subr.mxu0 0.0
  %947 = vmatpush1.msra.mxu0 0.0
  %948 = vmatprep.subr.mxu0 0.0
  %949 = vmatpush1.msra.mxu0 0.0
  %950 = vmatprep.subr.mxu0 0.0
  %951 = vmatpush1.msra.mxu0 0.0
  %952 = vmatprep.subr.mxu0 0.0
  %953 = vmatpush1.msra.mxu0 0.0
  %954 = vmatprep.subr.mxu0 0.0
  %955 = vmatpush1.msra.mxu0 0.0
  %956 = vmatprep.subr.mxu0 0.0
  %957 = vmatpush1.msra.mxu0 0.0
  %958 = vmatprep.subr.mxu0 0.0
  %959 = vmatpush1.msra.mxu0 %v926
  %960 = vmatprep.subr.mxu0 0.0
  %961 = vmatpush2.msra.mxu0 0.0
  %962 = vmatprep.subr.mxu0 0.0
  %963 = vmatpush2.msra.mxu0 0.0
  %964 = vmatprep.subr.mxu0 0.0
  %965 = vmatpush2.msra.mxu0 0.0
  %966 = vmatprep.subr.mxu0 0.0
  %967 = vmatpush2.msra.mxu0 0.0
  %968 = vmatprep.subr.mxu0 0.0
  %969 = vmatpush2.msra.mxu0 0.0
  %970 = vmatprep.subr.mxu0 0.0
  %971 = vmatpush2.msra.mxu0 0.0
  %972 = vmatprep.subr.mxu0 0.0
  %973 = vmatpush2.msra.mxu0 0.0
  %974 = vmatprep.subr.mxu0 0.0
  %975 = vmatpush2.msra.mxu0 0.0
  %976 = vmatprep.subr.mxu0 0.0
  %977 = vmatpush2.msra.mxu0 0.0
  %978 = vmatprep.subr.mxu0 0.0
  %979 = vmatpush2.msra.mxu0 0.0
  %980 = vmatprep.subr.mxu0 0.0
  %981 = vmatpush2.msra.mxu0 0.0
  %982 = vmatprep.subr.mxu0 0.0
  %983 = vmatpush2.msra.mxu0 0.0
  %984 = vmatprep.subr.mxu0 0.0
  %985 = vmatpush2.msra.mxu0 0.0
  %986 = vmatprep.subr.mxu0 0.0
  %987 = vmatpush2.msra.mxu0 0.0
  %988 = vmatprep.subr.mxu0 0.0
  %989 = vmatpush2.msra.mxu0 0.0
  %990 = vmatprep.subr.mxu0 0.0
  %991 = vmatpush2.msra.mxu0 0.0
  %992 = vmatprep.mubr.f32.mxu0 0.0
  %993 = vmatmul.mubr.f32.gmra.mxu0 %v734
  %v994 = vpop.f32.mrf.mxu0
  %v995 = vadd.f32 %v415, %v994
  %v996 = vpop.f32.mrf.mxu0
  %997 = vmatprep.mubr.f32.mxu0 0.0
  %998 = vmatmul.mubr.f32.gmra.mxu0 %v737
  %v999 = vpop.f32.mrf.mxu0
  %v1000 = vadd.f32 %v420, %v999
  %v1001 = vpop.f32.mrf.mxu0
  %1002 = vmatprep.mubr.f32.mxu0 0.0
  %1003 = vmatmul.mubr.f32.gmra.mxu0 %v740
  %v1004 = vpop.f32.mrf.mxu0
  %v1005 = vadd.f32 %v425, %v1004
  %v1006 = vpop.f32.mrf.mxu0
  %1007 = vmatprep.mubr.f32.mxu0 0.0
  %1008 = vmatmul.mubr.f32.gmra.mxu0 %v743
  %v1009 = vpop.f32.mrf.mxu0
  %v1010 = vadd.f32 %v430, %v1009
  %v1011 = vpop.f32.mrf.mxu0
  %1012 = vmatprep.mubr.f32.mxu0 0.0
  %1013 = vmatmul.mubr.f32.gmra.mxu0 %v746
  %v1014 = vpop.f32.mrf.mxu0
  %v1015 = vadd.f32 %v435, %v1014
  %v1016 = vpop.f32.mrf.mxu0
  %1017 = vmatprep.mubr.f32.mxu0 0.0
  %1018 = vmatmul.mubr.f32.gmra.mxu0 %v749
  %v1019 = vpop.f32.mrf.mxu0
  %v1020 = vadd.f32 %v440, %v1019
  %v1021 = vpop.f32.mrf.mxu0
  %1022 = vmatprep.mubr.f32.mxu0 0.0
  %1023 = vmatmul.mubr.f32.gmra.mxu0 %v752
  %v1024 = vpop.f32.mrf.mxu0
  %v1025 = vadd.f32 %v445, %v1024
  %v1026 = vpop.f32.mrf.mxu0
  %1027 = vmatprep.mubr.f32.mxu0 0.0
  %1028 = vmatmul.mubr.f32.gmra.mxu0 %v755
  %v1029 = vpop.f32.mrf.mxu0
  %v1030 = vadd.f32 %v450, %v1029
  %v1031 = vpop.f32.mrf.mxu0
  %1032 = vmatprep.mubr.f32.mxu0 0.0
  %1033 = vmatmul.mubr.f32.gmra.mxu0 %v758
  %v1034 = vpop.f32.mrf.mxu0
  %v1035 = vadd.f32 %v455, %v1034
  %v1036 = vpop.f32.mrf.mxu0
  %1037 = vmatprep.mubr.f32.mxu0 0.0
  %1038 = vmatmul.mubr.f32.gmra.mxu0 %v761
  %v1039 = vpop.f32.mrf.mxu0
  %v1040 = vadd.f32 %v460, %v1039
  %v1041 = vpop.f32.mrf.mxu0
  %1042 = vmatprep.mubr.f32.mxu0 0.0
  %1043 = vmatmul.mubr.f32.gmra.mxu0 %v764
  %v1044 = vpop.f32.mrf.mxu0
  %v1045 = vadd.f32 %v465, %v1044
  %v1046 = vpop.f32.mrf.mxu0
  %1047 = vmatprep.mubr.f32.mxu0 0.0
  %1048 = vmatmul.mubr.f32.gmra.mxu0 %v767
  %v1049 = vpop.f32.mrf.mxu0
  %v1050 = vadd.f32 %v470, %v1049
  %v1051 = vpop.f32.mrf.mxu0
  %1052 = vmatprep.mubr.f32.mxu0 0.0
  %1053 = vmatmul.mubr.f32.gmra.mxu0 %v770
  %v1054 = vpop.f32.mrf.mxu0
  %v1055 = vadd.f32 %v475, %v1054
  %v1056 = vpop.f32.mrf.mxu0
  %1057 = vmatprep.mubr.f32.mxu0 0.0
  %1058 = vmatmul.mubr.f32.gmra.mxu0 %v773
  %v1059 = vpop.f32.mrf.mxu0
  %v1060 = vadd.f32 %v480, %v1059
  %v1061 = vpop.f32.mrf.mxu0
  %1062 = vmatprep.mubr.f32.mxu0 0.0
  %1063 = vmatmul.mubr.f32.gmra.mxu0 %v776
  %v1064 = vpop.f32.mrf.mxu0
  %v1065 = vadd.f32 %v485, %v1064
  %v1066 = vpop.f32.mrf.mxu0
  %1067 = vmatprep.mubr.f32.mxu0 0.0
  %1068 = vmatmul.mubr.f32.gmra.mxu0 %v779
  %v1069 = vpop.f32.mrf.mxu0
  %v1070 = vadd.f32 %v490, %v1069
  %v1071 = vpop.f32.mrf.mxu0
  %1072 = vmatprep.mubr.f32.mxu0 0.0
  %1073 = vmatmul.mubr.f32.gmra.mxu0 %v782
  %v1074 = vpop.f32.mrf.mxu0
  %v1075 = vadd.f32 %v495, %v1074
  %v1076 = vpop.f32.mrf.mxu0
  %1077 = vmatprep.mubr.f32.mxu0 0.0
  %1078 = vmatmul.mubr.f32.gmra.mxu0 %v785
  %v1079 = vpop.f32.mrf.mxu0
  %v1080 = vadd.f32 %v500, %v1079
  %v1081 = vpop.f32.mrf.mxu0
  %1082 = vmatprep.mubr.f32.mxu0 0.0
  %1083 = vmatmul.mubr.f32.gmra.mxu0 %v788
  %v1084 = vpop.f32.mrf.mxu0
  %v1085 = vadd.f32 %v505, %v1084
  %v1086 = vpop.f32.mrf.mxu0
  %1087 = vmatprep.mubr.f32.mxu0 0.0
  %1088 = vmatmul.mubr.f32.gmra.mxu0 %v791
  %v1089 = vpop.f32.mrf.mxu0
  %v1090 = vadd.f32 %v510, %v1089
  %v1091 = vpop.f32.mrf.mxu0
  %1092 = vmatprep.mubr.f32.mxu0 0.0
  %1093 = vmatmul.mubr.f32.gmra.mxu0 %v794
  %v1094 = vpop.f32.mrf.mxu0
  %v1095 = vadd.f32 %v515, %v1094
  %v1096 = vpop.f32.mrf.mxu0
  %1097 = vmatprep.mubr.f32.mxu0 0.0
  %1098 = vmatmul.mubr.f32.gmra.mxu0 %v797
  %v1099 = vpop.f32.mrf.mxu0
  %v1100 = vadd.f32 %v520, %v1099
  %v1101 = vpop.f32.mrf.mxu0
  %1102 = vmatprep.mubr.f32.mxu0 0.0
  %1103 = vmatmul.mubr.f32.gmra.mxu0 %v800
  %v1104 = vpop.f32.mrf.mxu0
  %v1105 = vadd.f32 %v525, %v1104
  %v1106 = vpop.f32.mrf.mxu0
  %1107 = vmatprep.mubr.f32.mxu0 0.0
  %1108 = vmatmul.mubr.f32.gmra.mxu0 %v803
  %v1109 = vpop.f32.mrf.mxu0
  %v1110 = vadd.f32 %v530, %v1109
  %v1111 = vpop.f32.mrf.mxu0
  %1112 = vmatprep.mubr.f32.mxu0 0.0
  %1113 = vmatmul.mubr.f32.gmra.mxu0 %v806
  %v1114 = vpop.f32.mrf.mxu0
  %v1115 = vadd.f32 %v535, %v1114
  %v1116 = vpop.f32.mrf.mxu0
  %1117 = vmatprep.mubr.f32.mxu0 0.0
  %1118 = vmatmul.mubr.f32.gmra.mxu0 %v809
  %v1119 = vpop.f32.mrf.mxu0
  %v1120 = vadd.f32 %v540, %v1119
  %v1121 = vpop.f32.mrf.mxu0
  %1122 = vmatprep.mubr.f32.mxu0 0.0
  %1123 = vmatmul.mubr.f32.gmra.mxu0 %v812
  %v1124 = vpop.f32.mrf.mxu0
  %v1125 = vadd.f32 %v545, %v1124
  %v1126 = vpop.f32.mrf.mxu0
  %1127 = vmatprep.mubr.f32.mxu0 0.0
  %1128 = vmatmul.mubr.f32.gmra.mxu0 %v815
  %v1129 = vpop.f32.mrf.mxu0
  %v1130 = vadd.f32 %v550, %v1129
  %v1131 = vpop.f32.mrf.mxu0
  %1132 = vmatprep.mubr.f32.mxu0 0.0
  %1133 = vmatmul.mubr.f32.gmra.mxu0 %v818
  %v1134 = vpop.f32.mrf.mxu0
  %v1135 = vadd.f32 %v555, %v1134
  %v1136 = vpop.f32.mrf.mxu0
  %1137 = vmatprep.mubr.f32.mxu0 0.0
  %1138 = vmatmul.mubr.f32.gmra.mxu0 %v821
  %v1139 = vpop.f32.mrf.mxu0
  %v1140 = vadd.f32 %v560, %v1139
  %v1141 = vpop.f32.mrf.mxu0
  %1142 = vmatprep.mubr.f32.mxu0 0.0
  %1143 = vmatmul.mubr.f32.gmra.mxu0 %v824
  %v1144 = vpop.f32.mrf.mxu0
  %v1145 = vadd.f32 %v565, %v1144
  %v1146 = vpop.f32.mrf.mxu0
  %1147 = vmatprep.mubr.f32.mxu0 0.0
  %1148 = vmatmul.mubr.f32.gmra.mxu0 %v827
  %v1149 = vpop.f32.mrf.mxu0
  %v1150 = vadd.f32 %v570, %v1149
  %v1151 = vpop.f32.mrf.mxu0
  %1152 = vmatprep.mubr.f32.mxu0 0.0
  %1153 = vmatmul.mubr.f32.gmra.mxu0 %v830
  %v1154 = vpop.f32.mrf.mxu0
  %v1155 = vadd.f32 %v575, %v1154
  %v1156 = vpop.f32.mrf.mxu0
  %1157 = vmatprep.mubr.f32.mxu0 0.0
  %1158 = vmatmul.mubr.f32.gmra.mxu0 %v833
  %v1159 = vpop.f32.mrf.mxu0
  %v1160 = vadd.f32 %v580, %v1159
  %v1161 = vpop.f32.mrf.mxu0
  %1162 = vmatprep.mubr.f32.mxu0 0.0
  %1163 = vmatmul.mubr.f32.gmra.mxu0 %v836
  %v1164 = vpop.f32.mrf.mxu0
  %v1165 = vadd.f32 %v585, %v1164
  %v1166 = vpop.f32.mrf.mxu0
  %1167 = vmatprep.mubr.f32.mxu0 0.0
  %1168 = vmatmul.mubr.f32.gmra.mxu0 %v839
  %v1169 = vpop.f32.mrf.mxu0
  %v1170 = vadd.f32 %v590, %v1169
  %v1171 = vpop.f32.mrf.mxu0
  %1172 = vmatprep.mubr.f32.mxu0 0.0
  %1173 = vmatmul.mubr.f32.gmra.mxu0 %v842
  %v1174 = vpop.f32.mrf.mxu0
  %v1175 = vadd.f32 %v595, %v1174
  %v1176 = vpop.f32.mrf.mxu0
  %1177 = vmatprep.mubr.f32.mxu0 0.0
  %1178 = vmatmul.mubr.f32.gmra.mxu0 %v845
  %v1179 = vpop.f32.mrf.mxu0
  %v1180 = vadd.f32 %v600, %v1179
  %v1181 = vpop.f32.mrf.mxu0
  %1182 = vmatprep.mubr.f32.mxu0 0.0
  %1183 = vmatmul.mubr.f32.gmra.mxu0 %v848
  %v1184 = vpop.f32.mrf.mxu0
  %v1185 = vadd.f32 %v605, %v1184
  %v1186 = vpop.f32.mrf.mxu0
  %1187 = vmatprep.mubr.f32.mxu0 0.0
  %1188 = vmatmul.mubr.f32.gmra.mxu0 %v851
  %v1189 = vpop.f32.mrf.mxu0
  %v1190 = vadd.f32 %v610, %v1189
  %v1191 = vpop.f32.mrf.mxu0
  %1192 = vmatprep.mubr.f32.mxu0 0.0
  %1193 = vmatmul.mubr.f32.gmra.mxu0 %v854
  %v1194 = vpop.f32.mrf.mxu0
  %v1195 = vadd.f32 %v615, %v1194
  %v1196 = vpop.f32.mrf.mxu0
  %1197 = vmatprep.mubr.f32.mxu0 0.0
  %1198 = vmatmul.mubr.f32.gmra.mxu0 %v857
  %v1199 = vpop.f32.mrf.mxu0
  %v1200 = vadd.f32 %v620, %v1199
  %v1201 = vpop.f32.mrf.mxu0
  %1202 = vmatprep.mubr.f32.mxu0 0.0
  %1203 = vmatmul.mubr.f32.gmra.mxu0 %v860
  %v1204 = vpop.f32.mrf.mxu0
  %v1205 = vadd.f32 %v625, %v1204
  %v1206 = vpop.f32.mrf.mxu0
  %1207 = vmatprep.mubr.f32.mxu0 0.0
  %1208 = vmatmul.mubr.f32.gmra.mxu0 %v863
  %v1209 = vpop.f32.mrf.mxu0
  %v1210 = vadd.f32 %v630, %v1209
  %v1211 = vpop.f32.mrf.mxu0
  %1212 = vmatprep.mubr.f32.mxu0 0.0
  %1213 = vmatmul.mubr.f32.gmra.mxu0 %v866
  %v1214 = vpop.f32.mrf.mxu0
  %v1215 = vadd.f32 %v635, %v1214
  %v1216 = vpop.f32.mrf.mxu0
  %1217 = vmatprep.mubr.f32.mxu0 0.0
  %1218 = vmatmul.mubr.f32.gmra.mxu0 %v869
  %v1219 = vpop.f32.mrf.mxu0
  %v1220 = vadd.f32 %v640, %v1219
  %v1221 = vpop.f32.mrf.mxu0
  %1222 = vmatprep.mubr.f32.mxu0 0.0
  %1223 = vmatmul.mubr.f32.gmra.mxu0 %v872
  %v1224 = vpop.f32.mrf.mxu0
  %v1225 = vadd.f32 %v645, %v1224
  %v1226 = vpop.f32.mrf.mxu0
  %1227 = vmatprep.mubr.f32.mxu0 0.0
  %1228 = vmatmul.mubr.f32.gmra.mxu0 %v875
  %v1229 = vpop.f32.mrf.mxu0
  %v1230 = vadd.f32 %v650, %v1229
  %v1231 = vpop.f32.mrf.mxu0
  %1232 = vmatprep.mubr.f32.mxu0 0.0
  %1233 = vmatmul.mubr.f32.gmra.mxu0 %v878
  %v1234 = vpop.f32.mrf.mxu0
  %v1235 = vadd.f32 %v655, %v1234
  %v1236 = vpop.f32.mrf.mxu0
  %1237 = vmatprep.mubr.f32.mxu0 0.0
  %1238 = vmatmul.mubr.f32.gmra.mxu0 %v881
  %v1239 = vpop.f32.mrf.mxu0
  %v1240 = vadd.f32 %v660, %v1239
  %v1241 = vpop.f32.mrf.mxu0
  %1242 = vmatprep.mubr.f32.mxu0 0.0
  %1243 = vmatmul.mubr.f32.gmra.mxu0 %v884
  %v1244 = vpop.f32.mrf.mxu0
  %v1245 = vadd.f32 %v665, %v1244
  %v1246 = vpop.f32.mrf.mxu0
  %1247 = vmatprep.mubr.f32.mxu0 0.0
  %1248 = vmatmul.mubr.f32.gmra.mxu0 %v887
  %v1249 = vpop.f32.mrf.mxu0
  %v1250 = vadd.f32 %v670, %v1249
  %v1251 = vpop.f32.mrf.mxu0
  %1252 = vmatprep.mubr.f32.mxu0 0.0
  %1253 = vmatmul.mubr.f32.gmra.mxu0 %v890
  %v1254 = vpop.f32.mrf.mxu0
  %v1255 = vadd.f32 %v675, %v1254
  %v1256 = vpop.f32.mrf.mxu0
  %1257 = vmatprep.mubr.f32.mxu0 0.0
  %1258 = vmatmul.mubr.f32.gmra.mxu0 %v893
  %v1259 = vpop.f32.mrf.mxu0
  %v1260 = vadd.f32 %v680, %v1259
  %v1261 = vpop.f32.mrf.mxu0
  %1262 = vmatprep.mubr.f32.mxu0 0.0
  %1263 = vmatmul.mubr.f32.gmra.mxu0 %v896
  %v1264 = vpop.f32.mrf.mxu0
  %v1265 = vadd.f32 %v685, %v1264
  %v1266 = vpop.f32.mrf.mxu0
  %1267 = vmatprep.mubr.f32.mxu0 0.0
  %1268 = vmatmul.mubr.f32.gmra.mxu0 %v899
  %v1269 = vpop.f32.mrf.mxu0
  %v1270 = vadd.f32 %v690, %v1269
  %v1271 = vpop.f32.mrf.mxu0
  %1272 = vmatprep.mubr.f32.mxu0 0.0
  %1273 = vmatmul.mubr.f32.gmra.mxu0 %v902
  %v1274 = vpop.f32.mrf.mxu0
  %v1275 = vadd.f32 %v695, %v1274
  %v1276 = vpop.f32.mrf.mxu0
  %1277 = vmatprep.mubr.f32.mxu0 0.0
  %1278 = vmatmul.mubr.f32.gmra.mxu0 %v905
  %v1279 = vpop.f32.mrf.mxu0
  %v1280 = vadd.f32 %v700, %v1279
  %v1281 = vpop.f32.mrf.mxu0
  %1282 = vmatprep.mubr.f32.mxu0 0.0
  %1283 = vmatmul.mubr.f32.gmra.mxu0 %v908
  %v1284 = vpop.f32.mrf.mxu0
  %v1285 = vadd.f32 %v705, %v1284
  %v1286 = vpop.f32.mrf.mxu0
  %1287 = vmatprep.mubr.f32.mxu0 0.0
  %1288 = vmatmul.mubr.f32.gmra.mxu0 %v911
  %v1289 = vpop.f32.mrf.mxu0
  %v1290 = vadd.f32 %v710, %v1289
  %v1291 = vpop.f32.mrf.mxu0
  %1292 = vmatprep.mubr.f32.mxu0 0.0
  %1293 = vmatmul.mubr.f32.gmra.mxu0 %v914
  %v1294 = vpop.f32.mrf.mxu0
  %v1295 = vadd.f32 %v715, %v1294
  %v1296 = vpop.f32.mrf.mxu0
  %1297 = vmatprep.mubr.f32.mxu0 0.0
  %1298 = vmatmul.mubr.f32.gmra.mxu0 %v917
  %v1299 = vpop.f32.mrf.mxu0
  %v1300 = vadd.f32 %v720, %v1299
  %v1301 = vpop.f32.mrf.mxu0
  %1302 = vmatprep.mubr.f32.mxu0 0.0
  %1303 = vmatmul.mubr.f32.gmra.mxu0 %v920
  %v1304 = vpop.f32.mrf.mxu0
  %v1305 = vadd.f32 %v725, %v1304
  %v1306 = vpop.f32.mrf.mxu0
  %1307 = vmatprep.mubr.f32.mxu0 0.0
  %1308 = vmatmul.mubr.f32.gmra.mxu0 %v923
  %v1309 = vpop.f32.mrf.mxu0
  %v1310 = vadd.f32 %v730, %v1309
  %v1311 = vpop.f32.mrf.mxu0
  %1312 = vdwg.mxu0
  %v1313 = vld [vmem:[%s0 + $0x2] sm:$0xff]
  %v1314 = vld [vmem:[%s0 + $0xa] sm:$0xff]
  %v1315 = vld [vmem:[%s0 + $0x1a] sm:$0xff]
  %v1316 = vld [vmem:[%s0 + $0x22] sm:$0xff]
  %v1317 = vld [vmem:[%s0 + $0x32] sm:$0xff]
  %v1318 = vld [vmem:[%s0 + $0x3a] sm:$0xff]
  %v1319 = vld [vmem:[%s0 + $0x4a] sm:$0xff]
  %v1320 = vld [vmem:[%s0 + $0x52] sm:$0xff]
  %v1321 = vld [vmem:[%s0 + $0x62] sm:$0xff]
  %v1322 = vld [vmem:[%s0 + $0x6a] sm:$0xff]
  %v1323 = vld [vmem:[%s0 + $0x7a] sm:$0xff]
  %v1324 = vld [vmem:[%s0 + $0x82] sm:$0xff]
  %v1325 = vld [vmem:[%s0 + $0x92] sm:$0xff]
  %v1326 = vld [vmem:[%s0 + $0x9a] sm:$0xff]
  %v1327 = vld [vmem:[%s0 + $0xaa] sm:$0xff]
  %v1328 = vld [vmem:[%s0 + $0xb2] sm:$0xff]
  %v1329 = vld [vmem:[%s0 + $0xc2] sm:$0xff]
  %v1330 = vld [vmem:[%s0 + $0xca] sm:$0xff]
  %v1331 = vld [vmem:[%s0 + $0xda] sm:$0xff]
  %v1332 = vld [vmem:[%s0 + $0xe2] sm:$0xff]
  %v1333 = vld [vmem:[%s0 + $0xf2] sm:$0xff]
  %v1334 = vld [vmem:[%s0 + $0xfa] sm:$0xff]
  %v1335 = vld [vmem:[%s0 + $0x10a] sm:$0xff]
  %v1336 = vld [vmem:[%s0 + $0x112] sm:$0xff]
  %v1337 = vld [vmem:[%s0 + $0x122] sm:$0xff]
  %v1338 = vld [vmem:[%s0 + $0x12a] sm:$0xff]
  %v1339 = vld [vmem:[%s0 + $0x13a] sm:$0xff]
  %v1340 = vld [vmem:[%s0 + $0x142] sm:$0xff]
  %v1341 = vld [vmem:[%s0 + $0x152] sm:$0xff]
  %v1342 = vld [vmem:[%s0 + $0x15a] sm:$0xff]
  %v1343 = vld [vmem:[%s0 + $0x16a] sm:$0xff]
  %v1344 = vld [vmem:[%s0 + $0x172] sm:$0xff]
  %v1345 = vld [vmem:[%s0 + $0x182] sm:$0xff]
  %v1346 = vld [vmem:[%s0 + $0x18a] sm:$0xff]
  %v1347 = vld [vmem:[%s0 + $0x19a] sm:$0xff]
  %v1348 = vld [vmem:[%s0 + $0x1a2] sm:$0xff]
  %v1349 = vld [vmem:[%s0 + $0x1b2] sm:$0xff]
  %v1350 = vld [vmem:[%s0 + $0x1ba] sm:$0xff]
  %v1351 = vld [vmem:[%s0 + $0x1ca] sm:$0xff]
  %v1352 = vld [vmem:[%s0 + $0x1d2] sm:$0xff]
  %v1353 = vld [vmem:[%s0 + $0x1e2] sm:$0xff]
  %v1354 = vld [vmem:[%s0 + $0x1ea] sm:$0xff]
  %v1355 = vld [vmem:[%s0 + $0x1fa] sm:$0xff]
  %v1356 = vld [vmem:[%s0 + $0x202] sm:$0xff]
  %v1357 = vld [vmem:[%s0 + $0x212] sm:$0xff]
  %v1358 = vld [vmem:[%s0 + $0x21a] sm:$0xff]
  %v1359 = vld [vmem:[%s0 + $0x22a] sm:$0xff]
  %v1360 = vld [vmem:[%s0 + $0x232] sm:$0xff]
  %v1361 = vld [vmem:[%s0 + $0x242] sm:$0xff]
  %v1362 = vld [vmem:[%s0 + $0x24a] sm:$0xff]
  %v1363 = vld [vmem:[%s0 + $0x25a] sm:$0xff]
  %v1364 = vld [vmem:[%s0 + $0x262] sm:$0xff]
  %v1365 = vld [vmem:[%s0 + $0x272] sm:$0xff]
  %v1366 = vld [vmem:[%s0 + $0x27a] sm:$0xff]
  %v1367 = vld [vmem:[%s0 + $0x28a] sm:$0xff]
  %v1368 = vld [vmem:[%s0 + $0x292] sm:$0xff]
  %v1369 = vld [vmem:[%s0 + $0x2a2] sm:$0xff]
  %v1370 = vld [vmem:[%s0 + $0x2aa] sm:$0xff]
  %v1371 = vld [vmem:[%s0 + $0x2ba] sm:$0xff]
  %v1372 = vld [vmem:[%s0 + $0x2c2] sm:$0xff]
  %v1373 = vld [vmem:[%s0 + $0x2d2] sm:$0xff]
  %v1374 = vld [vmem:[%s0 + $0x2da] sm:$0xff]
  %v1375 = vld [vmem:[%s0 + $0x2ea] sm:$0xff]
  %v1376 = vld [vmem:[%s0 + $0x2f2] sm:$0xff]
  %s1377 = scalar_lea.vmem %s3, 8
  %v1378 = vld [vmem:[%s1377] sm:$0xf]
  %v1380 = vsel %vm151, %v1313, 0
  %v1383 = vsel %vm151, %v1314, 0
  %v1386 = vsel %vm151, %v1315, 0
  %v1389 = vsel %vm151, %v1316, 0
  %v1392 = vsel %vm151, %v1317, 0
  %v1395 = vsel %vm151, %v1318, 0
  %v1398 = vsel %vm151, %v1319, 0
  %v1401 = vsel %vm151, %v1320, 0
  %v1404 = vsel %vm151, %v1321, 0
  %v1407 = vsel %vm151, %v1322, 0
  %v1410 = vsel %vm151, %v1323, 0
  %v1413 = vsel %vm151, %v1324, 0
  %v1416 = vsel %vm151, %v1325, 0
  %v1419 = vsel %vm151, %v1326, 0
  %v1422 = vsel %vm151, %v1327, 0
  %v1425 = vsel %vm151, %v1328, 0
  %v1428 = vsel %vm151, %v1329, 0
  %v1431 = vsel %vm151, %v1330, 0
  %v1434 = vsel %vm151, %v1331, 0
  %v1437 = vsel %vm151, %v1332, 0
  %v1440 = vsel %vm151, %v1333, 0
  %v1443 = vsel %vm151, %v1334, 0
  %v1446 = vsel %vm151, %v1335, 0
  %v1449 = vsel %vm151, %v1336, 0
  %v1452 = vsel %vm151, %v1337, 0
  %v1455 = vsel %vm151, %v1338, 0
  %v1458 = vsel %vm151, %v1339, 0
  %v1461 = vsel %vm151, %v1340, 0
  %v1464 = vsel %vm151, %v1341, 0
  %v1467 = vsel %vm151, %v1342, 0
  %v1470 = vsel %vm151, %v1343, 0
  %v1473 = vsel %vm151, %v1344, 0
  %v1476 = vsel %vm151, %v1345, 0
  %v1479 = vsel %vm151, %v1346, 0
  %v1482 = vsel %vm151, %v1347, 0
  %v1485 = vsel %vm151, %v1348, 0
  %v1488 = vsel %vm151, %v1349, 0
  %v1491 = vsel %vm151, %v1350, 0
  %v1494 = vsel %vm151, %v1351, 0
  %v1497 = vsel %vm151, %v1352, 0
  %v1500 = vsel %vm151, %v1353, 0
  %v1503 = vsel %vm151, %v1354, 0
  %v1506 = vsel %vm151, %v1355, 0
  %v1509 = vsel %vm151, %v1356, 0
  %v1512 = vsel %vm151, %v1357, 0
  %v1515 = vsel %vm151, %v1358, 0
  %v1518 = vsel %vm151, %v1359, 0
  %v1521 = vsel %vm151, %v1360, 0
  %v1524 = vsel %vm151, %v1361, 0
  %v1527 = vsel %vm151, %v1362, 0
  %v1530 = vsel %vm151, %v1363, 0
  %v1533 = vsel %vm151, %v1364, 0
  %v1536 = vsel %vm151, %v1365, 0
  %v1539 = vsel %vm151, %v1366, 0
  %v1542 = vsel %vm151, %v1367, 0
  %v1545 = vsel %vm151, %v1368, 0
  %v1548 = vsel %vm151, %v1369, 0
  %v1551 = vsel %vm151, %v1370, 0
  %v1554 = vsel %vm151, %v1371, 0
  %v1557 = vsel %vm151, %v1372, 0
  %v1560 = vsel %vm151, %v1373, 0
  %v1563 = vsel %vm151, %v1374, 0
  %v1566 = vsel %vm151, %v1375, 0
  %v1569 = vsel %vm151, %v1376, 0
  %v1572 = vsel %vm344, %v1378, 0
  %1574 = vmatprep.subr.mxu0 0.0
  %1575 = vmatpush1.msra.mxu0 0.0
  %1576 = vmatprep.subr.mxu0 0.0
  %1577 = vmatpush1.msra.mxu0 0.0
  %1578 = vmatprep.subr.mxu0 0.0
  %1579 = vmatpush1.msra.mxu0 0.0
  %1580 = vmatprep.subr.mxu0 0.0
  %1581 = vmatpush1.msra.mxu0 0.0
  %1582 = vmatprep.subr.mxu0 0.0
  %1583 = vmatpush1.msra.mxu0 0.0
  %1584 = vmatprep.subr.mxu0 0.0
  %1585 = vmatpush1.msra.mxu0 0.0
  %1586 = vmatprep.subr.mxu0 0.0
  %1587 = vmatpush1.msra.mxu0 0.0
  %1588 = vmatprep.subr.mxu0 0.0
  %1589 = vmatpush1.msra.mxu0 0.0
  %1590 = vmatprep.subr.mxu0 0.0
  %1591 = vmatpush1.msra.mxu0 0.0
  %1592 = vmatprep.subr.mxu0 0.0
  %1593 = vmatpush1.msra.mxu0 0.0
  %1594 = vmatprep.subr.mxu0 0.0
  %1595 = vmatpush1.msra.mxu0 0.0
  %1596 = vmatprep.subr.mxu0 0.0
  %1597 = vmatpush1.msra.mxu0 0.0
  %1598 = vmatprep.subr.mxu0 0.0
  %1599 = vmatpush1.msra.mxu0 0.0
  %1600 = vmatprep.subr.mxu0 0.0
  %1601 = vmatpush1.msra.mxu0 0.0
  %1602 = vmatprep.subr.mxu0 0.0
  %1603 = vmatpush1.msra.mxu0 0.0
  %1604 = vmatprep.subr.mxu0 0.0
  %1605 = vmatpush1.msra.mxu0 %v1572
  %1606 = vmatprep.subr.mxu0 0.0
  %1607 = vmatpush2.msra.mxu0 0.0
  %1608 = vmatprep.subr.mxu0 0.0
  %1609 = vmatpush2.msra.mxu0 0.0
  %1610 = vmatprep.subr.mxu0 0.0
  %1611 = vmatpush2.msra.mxu0 0.0
  %1612 = vmatprep.subr.mxu0 0.0
  %1613 = vmatpush2.msra.mxu0 0.0
  %1614 = vmatprep.subr.mxu0 0.0
  %1615 = vmatpush2.msra.mxu0 0.0
  %1616 = vmatprep.subr.mxu0 0.0
  %1617 = vmatpush2.msra.mxu0 0.0
  %1618 = vmatprep.subr.mxu0 0.0
  %1619 = vmatpush2.msra.mxu0 0.0
  %1620 = vmatprep.subr.mxu0 0.0
  %1621 = vmatpush2.msra.mxu0 0.0
  %1622 = vmatprep.subr.mxu0 0.0
  %1623 = vmatpush2.msra.mxu0 0.0
  %1624 = vmatprep.subr.mxu0 0.0
  %1625 = vmatpush2.msra.mxu0 0.0
  %1626 = vmatprep.subr.mxu0 0.0
  %1627 = vmatpush2.msra.mxu0 0.0
  %1628 = vmatprep.subr.mxu0 0.0
  %1629 = vmatpush2.msra.mxu0 0.0
  %1630 = vmatprep.subr.mxu0 0.0
  %1631 = vmatpush2.msra.mxu0 0.0
  %1632 = vmatprep.subr.mxu0 0.0
  %1633 = vmatpush2.msra.mxu0 0.0
  %1634 = vmatprep.subr.mxu0 0.0
  %1635 = vmatpush2.msra.mxu0 0.0
  %1636 = vmatprep.subr.mxu0 0.0
  %1637 = vmatpush2.msra.mxu0 0.0
  %1638 = vmatprep.mubr.f32.mxu0 0.0
  %1639 = vmatmul.mubr.f32.gmra.mxu0 %v1380
  %v1640 = vpop.f32.mrf.mxu0
  %v1641 = vadd.f32 0.0, %v1640
  %v1642 = vpop.f32.mrf.mxu0
  %1643 = vmatprep.mubr.f32.mxu0 0.0
  %1644 = vmatmul.mubr.f32.gmra.mxu0 %v1383
  %v1645 = vpop.f32.mrf.mxu0
  %v1646 = vadd.f32 0.0, %v1645
  %v1647 = vpop.f32.mrf.mxu0
  %1648 = vmatprep.mubr.f32.mxu0 0.0
  %1649 = vmatmul.mubr.f32.gmra.mxu0 %v1386
  %v1650 = vpop.f32.mrf.mxu0
  %v1651 = vadd.f32 0.0, %v1650
  %v1652 = vpop.f32.mrf.mxu0
  %1653 = vmatprep.mubr.f32.mxu0 0.0
  %1654 = vmatmul.mubr.f32.gmra.mxu0 %v1389
  %v1655 = vpop.f32.mrf.mxu0
  %v1656 = vadd.f32 0.0, %v1655
  %v1657 = vpop.f32.mrf.mxu0
  %1658 = vmatprep.mubr.f32.mxu0 0.0
  %1659 = vmatmul.mubr.f32.gmra.mxu0 %v1392
  %v1660 = vpop.f32.mrf.mxu0
  %v1661 = vadd.f32 0.0, %v1660
  %v1662 = vpop.f32.mrf.mxu0
  %1663 = vmatprep.mubr.f32.mxu0 0.0
  %1664 = vmatmul.mubr.f32.gmra.mxu0 %v1395
  %v1665 = vpop.f32.mrf.mxu0
  %v1666 = vadd.f32 0.0, %v1665
  %v1667 = vpop.f32.mrf.mxu0
  %1668 = vmatprep.mubr.f32.mxu0 0.0
  %1669 = vmatmul.mubr.f32.gmra.mxu0 %v1398
  %v1670 = vpop.f32.mrf.mxu0
  %v1671 = vadd.f32 0.0, %v1670
  %v1672 = vpop.f32.mrf.mxu0
  %1673 = vmatprep.mubr.f32.mxu0 0.0
  %1674 = vmatmul.mubr.f32.gmra.mxu0 %v1401
  %v1675 = vpop.f32.mrf.mxu0
  %v1676 = vadd.f32 0.0, %v1675
  %v1677 = vpop.f32.mrf.mxu0
  %1678 = vmatprep.mubr.f32.mxu0 0.0
  %1679 = vmatmul.mubr.f32.gmra.mxu0 %v1404
  %v1680 = vpop.f32.mrf.mxu0
  %v1681 = vadd.f32 0.0, %v1680
  %v1682 = vpop.f32.mrf.mxu0
  %1683 = vmatprep.mubr.f32.mxu0 0.0
  %1684 = vmatmul.mubr.f32.gmra.mxu0 %v1407
  %v1685 = vpop.f32.mrf.mxu0
  %v1686 = vadd.f32 0.0, %v1685
  %v1687 = vpop.f32.mrf.mxu0
  %1688 = vmatprep.mubr.f32.mxu0 0.0
  %1689 = vmatmul.mubr.f32.gmra.mxu0 %v1410
  %v1690 = vpop.f32.mrf.mxu0
  %v1691 = vadd.f32 0.0, %v1690
  %v1692 = vpop.f32.mrf.mxu0
  %1693 = vmatprep.mubr.f32.mxu0 0.0
  %1694 = vmatmul.mubr.f32.gmra.mxu0 %v1413
  %v1695 = vpop.f32.mrf.mxu0
  %v1696 = vadd.f32 0.0, %v1695
  %v1697 = vpop.f32.mrf.mxu0
  %1698 = vmatprep.mubr.f32.mxu0 0.0
  %1699 = vmatmul.mubr.f32.gmra.mxu0 %v1416
  %v1700 = vpop.f32.mrf.mxu0
  %v1701 = vadd.f32 0.0, %v1700
  %v1702 = vpop.f32.mrf.mxu0
  %1703 = vmatprep.mubr.f32.mxu0 0.0
  %1704 = vmatmul.mubr.f32.gmra.mxu0 %v1419
  %v1705 = vpop.f32.mrf.mxu0
  %v1706 = vadd.f32 0.0, %v1705
  %v1707 = vpop.f32.mrf.mxu0
  %1708 = vmatprep.mubr.f32.mxu0 0.0
  %1709 = vmatmul.mubr.f32.gmra.mxu0 %v1422
  %v1710 = vpop.f32.mrf.mxu0
  %v1711 = vadd.f32 0.0, %v1710
  %v1712 = vpop.f32.mrf.mxu0
  %1713 = vmatprep.mubr.f32.mxu0 0.0
  %1714 = vmatmul.mubr.f32.gmra.mxu0 %v1425
  %v1715 = vpop.f32.mrf.mxu0
  %v1716 = vadd.f32 0.0, %v1715
  %v1717 = vpop.f32.mrf.mxu0
  %1718 = vmatprep.mubr.f32.mxu0 0.0
  %1719 = vmatmul.mubr.f32.gmra.mxu0 %v1428
  %v1720 = vpop.f32.mrf.mxu0
  %v1721 = vadd.f32 0.0, %v1720
  %v1722 = vpop.f32.mrf.mxu0
  %1723 = vmatprep.mubr.f32.mxu0 0.0
  %1724 = vmatmul.mubr.f32.gmra.mxu0 %v1431
  %v1725 = vpop.f32.mrf.mxu0
  %v1726 = vadd.f32 0.0, %v1725
  %v1727 = vpop.f32.mrf.mxu0
  %1728 = vmatprep.mubr.f32.mxu0 0.0
  %1729 = vmatmul.mubr.f32.gmra.mxu0 %v1434
  %v1730 = vpop.f32.mrf.mxu0
  %v1731 = vadd.f32 0.0, %v1730
  %v1732 = vpop.f32.mrf.mxu0
  %1733 = vmatprep.mubr.f32.mxu0 0.0
  %1734 = vmatmul.mubr.f32.gmra.mxu0 %v1437
  %v1735 = vpop.f32.mrf.mxu0
  %v1736 = vadd.f32 0.0, %v1735
  %v1737 = vpop.f32.mrf.mxu0
  %1738 = vmatprep.mubr.f32.mxu0 0.0
  %1739 = vmatmul.mubr.f32.gmra.mxu0 %v1440
  %v1740 = vpop.f32.mrf.mxu0
  %v1741 = vadd.f32 0.0, %v1740
  %v1742 = vpop.f32.mrf.mxu0
  %1743 = vmatprep.mubr.f32.mxu0 0.0
  %1744 = vmatmul.mubr.f32.gmra.mxu0 %v1443
  %v1745 = vpop.f32.mrf.mxu0
  %v1746 = vadd.f32 0.0, %v1745
  %v1747 = vpop.f32.mrf.mxu0
  %1748 = vmatprep.mubr.f32.mxu0 0.0
  %1749 = vmatmul.mubr.f32.gmra.mxu0 %v1446
  %v1750 = vpop.f32.mrf.mxu0
  %v1751 = vadd.f32 0.0, %v1750
  %v1752 = vpop.f32.mrf.mxu0
  %1753 = vmatprep.mubr.f32.mxu0 0.0
  %1754 = vmatmul.mubr.f32.gmra.mxu0 %v1449
  %v1755 = vpop.f32.mrf.mxu0
  %v1756 = vadd.f32 0.0, %v1755
  %v1757 = vpop.f32.mrf.mxu0
  %1758 = vmatprep.mubr.f32.mxu0 0.0
  %1759 = vmatmul.mubr.f32.gmra.mxu0 %v1452
  %v1760 = vpop.f32.mrf.mxu0
  %v1761 = vadd.f32 0.0, %v1760
  %v1762 = vpop.f32.mrf.mxu0
  %1763 = vmatprep.mubr.f32.mxu0 0.0
  %1764 = vmatmul.mubr.f32.gmra.mxu0 %v1455
  %v1765 = vpop.f32.mrf.mxu0
  %v1766 = vadd.f32 0.0, %v1765
  %v1767 = vpop.f32.mrf.mxu0
  %1768 = vmatprep.mubr.f32.mxu0 0.0
  %1769 = vmatmul.mubr.f32.gmra.mxu0 %v1458
  %v1770 = vpop.f32.mrf.mxu0
  %v1771 = vadd.f32 0.0, %v1770
  %v1772 = vpop.f32.mrf.mxu0
  %1773 = vmatprep.mubr.f32.mxu0 0.0
  %1774 = vmatmul.mubr.f32.gmra.mxu0 %v1461
  %v1775 = vpop.f32.mrf.mxu0
  %v1776 = vadd.f32 0.0, %v1775
  %v1777 = vpop.f32.mrf.mxu0
  %1778 = vmatprep.mubr.f32.mxu0 0.0
  %1779 = vmatmul.mubr.f32.gmra.mxu0 %v1464
  %v1780 = vpop.f32.mrf.mxu0
  %v1781 = vadd.f32 0.0, %v1780
  %v1782 = vpop.f32.mrf.mxu0
  %1783 = vmatprep.mubr.f32.mxu0 0.0
  %1784 = vmatmul.mubr.f32.gmra.mxu0 %v1467
  %v1785 = vpop.f32.mrf.mxu0
  %v1786 = vadd.f32 0.0, %v1785
  %v1787 = vpop.f32.mrf.mxu0
  %1788 = vmatprep.mubr.f32.mxu0 0.0
  %1789 = vmatmul.mubr.f32.gmra.mxu0 %v1470
  %v1790 = vpop.f32.mrf.mxu0
  %v1791 = vadd.f32 0.0, %v1790
  %v1792 = vpop.f32.mrf.mxu0
  %1793 = vmatprep.mubr.f32.mxu0 0.0
  %1794 = vmatmul.mubr.f32.gmra.mxu0 %v1473
  %v1795 = vpop.f32.mrf.mxu0
  %v1796 = vadd.f32 0.0, %v1795
  %v1797 = vpop.f32.mrf.mxu0
  %1798 = vmatprep.mubr.f32.mxu0 0.0
  %1799 = vmatmul.mubr.f32.gmra.mxu0 %v1476
  %v1800 = vpop.f32.mrf.mxu0
  %v1801 = vadd.f32 0.0, %v1800
  %v1802 = vpop.f32.mrf.mxu0
  %1803 = vmatprep.mubr.f32.mxu0 0.0
  %1804 = vmatmul.mubr.f32.gmra.mxu0 %v1479
  %v1805 = vpop.f32.mrf.mxu0
  %v1806 = vadd.f32 0.0, %v1805
  %v1807 = vpop.f32.mrf.mxu0
  %1808 = vmatprep.mubr.f32.mxu0 0.0
  %1809 = vmatmul.mubr.f32.gmra.mxu0 %v1482
  %v1810 = vpop.f32.mrf.mxu0
  %v1811 = vadd.f32 0.0, %v1810
  %v1812 = vpop.f32.mrf.mxu0
  %1813 = vmatprep.mubr.f32.mxu0 0.0
  %1814 = vmatmul.mubr.f32.gmra.mxu0 %v1485
  %v1815 = vpop.f32.mrf.mxu0
  %v1816 = vadd.f32 0.0, %v1815
  %v1817 = vpop.f32.mrf.mxu0
  %1818 = vmatprep.mubr.f32.mxu0 0.0
  %1819 = vmatmul.mubr.f32.gmra.mxu0 %v1488
  %v1820 = vpop.f32.mrf.mxu0
  %v1821 = vadd.f32 0.0, %v1820
  %v1822 = vpop.f32.mrf.mxu0
  %1823 = vmatprep.mubr.f32.mxu0 0.0
  %1824 = vmatmul.mubr.f32.gmra.mxu0 %v1491
  %v1825 = vpop.f32.mrf.mxu0
  %v1826 = vadd.f32 0.0, %v1825
  %v1827 = vpop.f32.mrf.mxu0
  %1828 = vmatprep.mubr.f32.mxu0 0.0
  %1829 = vmatmul.mubr.f32.gmra.mxu0 %v1494
  %v1830 = vpop.f32.mrf.mxu0
  %v1831 = vadd.f32 0.0, %v1830
  %v1832 = vpop.f32.mrf.mxu0
  %1833 = vmatprep.mubr.f32.mxu0 0.0
  %1834 = vmatmul.mubr.f32.gmra.mxu0 %v1497
  %v1835 = vpop.f32.mrf.mxu0
  %v1836 = vadd.f32 0.0, %v1835
  %v1837 = vpop.f32.mrf.mxu0
  %1838 = vmatprep.mubr.f32.mxu0 0.0
  %1839 = vmatmul.mubr.f32.gmra.mxu0 %v1500
  %v1840 = vpop.f32.mrf.mxu0
  %v1841 = vadd.f32 0.0, %v1840
  %v1842 = vpop.f32.mrf.mxu0
  %1843 = vmatprep.mubr.f32.mxu0 0.0
  %1844 = vmatmul.mubr.f32.gmra.mxu0 %v1503
  %v1845 = vpop.f32.mrf.mxu0
  %v1846 = vadd.f32 0.0, %v1845
  %v1847 = vpop.f32.mrf.mxu0
  %1848 = vmatprep.mubr.f32.mxu0 0.0
  %1849 = vmatmul.mubr.f32.gmra.mxu0 %v1506
  %v1850 = vpop.f32.mrf.mxu0
  %v1851 = vadd.f32 0.0, %v1850
  %v1852 = vpop.f32.mrf.mxu0
  %1853 = vmatprep.mubr.f32.mxu0 0.0
  %1854 = vmatmul.mubr.f32.gmra.mxu0 %v1509
  %v1855 = vpop.f32.mrf.mxu0
  %v1856 = vadd.f32 0.0, %v1855
  %v1857 = vpop.f32.mrf.mxu0
  %1858 = vmatprep.mubr.f32.mxu0 0.0
  %1859 = vmatmul.mubr.f32.gmra.mxu0 %v1512
  %v1860 = vpop.f32.mrf.mxu0
  %v1861 = vadd.f32 0.0, %v1860
  %v1862 = vpop.f32.mrf.mxu0
  %1863 = vmatprep.mubr.f32.mxu0 0.0
  %1864 = vmatmul.mubr.f32.gmra.mxu0 %v1515
  %v1865 = vpop.f32.mrf.mxu0
  %v1866 = vadd.f32 0.0, %v1865
  %v1867 = vpop.f32.mrf.mxu0
  %1868 = vmatprep.mubr.f32.mxu0 0.0
  %1869 = vmatmul.mubr.f32.gmra.mxu0 %v1518
  %v1870 = vpop.f32.mrf.mxu0
  %v1871 = vadd.f32 0.0, %v1870
  %v1872 = vpop.f32.mrf.mxu0
  %1873 = vmatprep.mubr.f32.mxu0 0.0
  %1874 = vmatmul.mubr.f32.gmra.mxu0 %v1521
  %v1875 = vpop.f32.mrf.mxu0
  %v1876 = vadd.f32 0.0, %v1875
  %v1877 = vpop.f32.mrf.mxu0
  %1878 = vmatprep.mubr.f32.mxu0 0.0
  %1879 = vmatmul.mubr.f32.gmra.mxu0 %v1524
  %v1880 = vpop.f32.mrf.mxu0
  %v1881 = vadd.f32 0.0, %v1880
  %v1882 = vpop.f32.mrf.mxu0
  %1883 = vmatprep.mubr.f32.mxu0 0.0
  %1884 = vmatmul.mubr.f32.gmra.mxu0 %v1527
  %v1885 = vpop.f32.mrf.mxu0
  %v1886 = vadd.f32 0.0, %v1885
  %v1887 = vpop.f32.mrf.mxu0
  %1888 = vmatprep.mubr.f32.mxu0 0.0
  %1889 = vmatmul.mubr.f32.gmra.mxu0 %v1530
  %v1890 = vpop.f32.mrf.mxu0
  %v1891 = vadd.f32 0.0, %v1890
  %v1892 = vpop.f32.mrf.mxu0
  %1893 = vmatprep.mubr.f32.mxu0 0.0
  %1894 = vmatmul.mubr.f32.gmra.mxu0 %v1533
  %v1895 = vpop.f32.mrf.mxu0
  %v1896 = vadd.f32 0.0, %v1895
  %v1897 = vpop.f32.mrf.mxu0
  %1898 = vmatprep.mubr.f32.mxu0 0.0
  %1899 = vmatmul.mubr.f32.gmra.mxu0 %v1536
  %v1900 = vpop.f32.mrf.mxu0
  %v1901 = vadd.f32 0.0, %v1900
  %v1902 = vpop.f32.mrf.mxu0
  %1903 = vmatprep.mubr.f32.mxu0 0.0
  %1904 = vmatmul.mubr.f32.gmra.mxu0 %v1539
  %v1905 = vpop.f32.mrf.mxu0
  %v1906 = vadd.f32 0.0, %v1905
  %v1907 = vpop.f32.mrf.mxu0
  %1908 = vmatprep.mubr.f32.mxu0 0.0
  %1909 = vmatmul.mubr.f32.gmra.mxu0 %v1542
  %v1910 = vpop.f32.mrf.mxu0
  %v1911 = vadd.f32 0.0, %v1910
  %v1912 = vpop.f32.mrf.mxu0
  %1913 = vmatprep.mubr.f32.mxu0 0.0
  %1914 = vmatmul.mubr.f32.gmra.mxu0 %v1545
  %v1915 = vpop.f32.mrf.mxu0
  %v1916 = vadd.f32 0.0, %v1915
  %v1917 = vpop.f32.mrf.mxu0
  %1918 = vmatprep.mubr.f32.mxu0 0.0
  %1919 = vmatmul.mubr.f32.gmra.mxu0 %v1548
  %v1920 = vpop.f32.mrf.mxu0
  %v1921 = vadd.f32 0.0, %v1920
  %v1922 = vpop.f32.mrf.mxu0
  %1923 = vmatprep.mubr.f32.mxu0 0.0
  %1924 = vmatmul.mubr.f32.gmra.mxu0 %v1551
  %v1925 = vpop.f32.mrf.mxu0
  %v1926 = vadd.f32 0.0, %v1925
  %v1927 = vpop.f32.mrf.mxu0
  %1928 = vmatprep.mubr.f32.mxu0 0.0
  %1929 = vmatmul.mubr.f32.gmra.mxu0 %v1554
  %v1930 = vpop.f32.mrf.mxu0
  %v1931 = vadd.f32 0.0, %v1930
  %v1932 = vpop.f32.mrf.mxu0
  %1933 = vmatprep.mubr.f32.mxu0 0.0
  %1934 = vmatmul.mubr.f32.gmra.mxu0 %v1557
  %v1935 = vpop.f32.mrf.mxu0
  %v1936 = vadd.f32 0.0, %v1935
  %v1937 = vpop.f32.mrf.mxu0
  %1938 = vmatprep.mubr.f32.mxu0 0.0
  %1939 = vmatmul.mubr.f32.gmra.mxu0 %v1560
  %v1940 = vpop.f32.mrf.mxu0
  %v1941 = vadd.f32 0.0, %v1940
  %v1942 = vpop.f32.mrf.mxu0
  %1943 = vmatprep.mubr.f32.mxu0 0.0
  %1944 = vmatmul.mubr.f32.gmra.mxu0 %v1563
  %v1945 = vpop.f32.mrf.mxu0
  %v1946 = vadd.f32 0.0, %v1945
  %v1947 = vpop.f32.mrf.mxu0
  %1948 = vmatprep.mubr.f32.mxu0 0.0
  %1949 = vmatmul.mubr.f32.gmra.mxu0 %v1566
  %v1950 = vpop.f32.mrf.mxu0
  %v1951 = vadd.f32 0.0, %v1950
  %v1952 = vpop.f32.mrf.mxu0
  %1953 = vmatprep.mubr.f32.mxu0 0.0
  %1954 = vmatmul.mubr.f32.gmra.mxu0 %v1569
  %v1955 = vpop.f32.mrf.mxu0
  %v1956 = vadd.f32 0.0, %v1955
  %v1957 = vpop.f32.mrf.mxu0
  %1958 = vdwg.mxu0
  %v1959 = vadd.f32 %v995, %v1641
  %v1960 = vadd.f32 %v1000, %v1646
  %v1961 = vadd.f32 %v1005, %v1651
  %v1962 = vadd.f32 %v1010, %v1656
  %v1963 = vadd.f32 %v1015, %v1661
  %v1964 = vadd.f32 %v1020, %v1666
  %v1965 = vadd.f32 %v1025, %v1671
  %v1966 = vadd.f32 %v1030, %v1676
  %v1967 = vadd.f32 %v1035, %v1681
  %v1968 = vadd.f32 %v1040, %v1686
  %v1969 = vadd.f32 %v1045, %v1691
  %v1970 = vadd.f32 %v1050, %v1696
  %v1971 = vadd.f32 %v1055, %v1701
  %v1972 = vadd.f32 %v1060, %v1706
  %v1973 = vadd.f32 %v1065, %v1711
  %v1974 = vadd.f32 %v1070, %v1716
  %v1975 = vadd.f32 %v1075, %v1721
  %v1976 = vadd.f32 %v1080, %v1726
  %v1977 = vadd.f32 %v1085, %v1731
  %v1978 = vadd.f32 %v1090, %v1736
  %v1979 = vadd.f32 %v1095, %v1741
  %v1980 = vadd.f32 %v1100, %v1746
  %v1981 = vadd.f32 %v1105, %v1751
  %v1982 = vadd.f32 %v1110, %v1756
  %v1983 = vadd.f32 %v1115, %v1761
  %v1984 = vadd.f32 %v1120, %v1766
  %v1985 = vadd.f32 %v1125, %v1771
  %v1986 = vadd.f32 %v1130, %v1776
  %v1987 = vadd.f32 %v1135, %v1781
  %v1988 = vadd.f32 %v1140, %v1786
  %v1989 = vadd.f32 %v1145, %v1791
  %v1990 = vadd.f32 %v1150, %v1796
  %v1991 = vadd.f32 %v1155, %v1801
  %v1992 = vadd.f32 %v1160, %v1806
  %v1993 = vadd.f32 %v1165, %v1811
  %v1994 = vadd.f32 %v1170, %v1816
  %v1995 = vadd.f32 %v1175, %v1821
  %v1996 = vadd.f32 %v1180, %v1826
  %v1997 = vadd.f32 %v1185, %v1831
  %v1998 = vadd.f32 %v1190, %v1836
  %v1999 = vadd.f32 %v1195, %v1841
  %v2000 = vadd.f32 %v1200, %v1846
  %v2001 = vadd.f32 %v1205, %v1851
  %v2002 = vadd.f32 %v1210, %v1856
  %v2003 = vadd.f32 %v1215, %v1861
  %v2004 = vadd.f32 %v1220, %v1866
  %v2005 = vadd.f32 %v1225, %v1871
  %v2006 = vadd.f32 %v1230, %v1876
  %v2007 = vadd.f32 %v1235, %v1881
  %v2008 = vadd.f32 %v1240, %v1886
  %v2009 = vadd.f32 %v1245, %v1891
  %v2010 = vadd.f32 %v1250, %v1896
  %v2011 = vadd.f32 %v1255, %v1901
  %v2012 = vadd.f32 %v1260, %v1906
  %v2013 = vadd.f32 %v1265, %v1911
  %v2014 = vadd.f32 %v1270, %v1916
  %v2015 = vadd.f32 %v1275, %v1921
  %v2016 = vadd.f32 %v1280, %v1926
  %v2017 = vadd.f32 %v1285, %v1931
  %v2018 = vadd.f32 %v1290, %v1936
  %v2019 = vadd.f32 %v1295, %v1941
  %v2020 = vadd.f32 %v1300, %v1946
  %v2021 = vadd.f32 %v1305, %v1951
  %v2022 = vadd.f32 %v1310, %v1956
  %v2023 = vld [vmem:[%s1] sm:$0xff]
  %v2024 = vld [vmem:[%s1 + $0x8] sm:$0xff]
  %v2025 = vld [vmem:[%s1 + $0x18] sm:$0xff]
  %v2026 = vld [vmem:[%s1 + $0x20] sm:$0xff]
  %v2027 = vld [vmem:[%s1 + $0x30] sm:$0xff]
  %v2028 = vld [vmem:[%s1 + $0x38] sm:$0xff]
  %v2029 = vld [vmem:[%s1 + $0x48] sm:$0xff]
  %v2030 = vld [vmem:[%s1 + $0x50] sm:$0xff]
  %v2031 = vld [vmem:[%s1 + $0x60] sm:$0xff]
  %v2032 = vld [vmem:[%s1 + $0x68] sm:$0xff]
  %v2033 = vld [vmem:[%s1 + $0x78] sm:$0xff]
  %v2034 = vld [vmem:[%s1 + $0x80] sm:$0xff]
  %v2035 = vld [vmem:[%s1 + $0x90] sm:$0xff]
  %v2036 = vld [vmem:[%s1 + $0x98] sm:$0xff]
  %v2037 = vld [vmem:[%s1 + $0xa8] sm:$0xff]
  %v2038 = vld [vmem:[%s1 + $0xb0] sm:$0xff]
  %v2039 = vld [vmem:[%s1 + $0xc0] sm:$0xff]
  %v2040 = vld [vmem:[%s1 + $0xc8] sm:$0xff]
  %v2041 = vld [vmem:[%s1 + $0xd8] sm:$0xff]
  %v2042 = vld [vmem:[%s1 + $0xe0] sm:$0xff]
  %v2043 = vld [vmem:[%s1 + $0xf0] sm:$0xff]
  %v2044 = vld [vmem:[%s1 + $0xf8] sm:$0xff]
  %v2045 = vld [vmem:[%s1 + $0x108] sm:$0xff]
  %v2046 = vld [vmem:[%s1 + $0x110] sm:$0xff]
  %v2047 = vld [vmem:[%s1 + $0x120] sm:$0xff]
  %v2048 = vld [vmem:[%s1 + $0x128] sm:$0xff]
  %v2049 = vld [vmem:[%s1 + $0x138] sm:$0xff]
  %v2050 = vld [vmem:[%s1 + $0x140] sm:$0xff]
  %v2051 = vld [vmem:[%s1 + $0x150] sm:$0xff]
  %v2052 = vld [vmem:[%s1 + $0x158] sm:$0xff]
  %v2053 = vld [vmem:[%s1 + $0x168] sm:$0xff]
  %v2054 = vld [vmem:[%s1 + $0x170] sm:$0xff]
  %v2055 = vld [vmem:[%s1 + $0x180] sm:$0xff]
  %v2056 = vld [vmem:[%s1 + $0x188] sm:$0xff]
  %v2057 = vld [vmem:[%s1 + $0x198] sm:$0xff]
  %v2058 = vld [vmem:[%s1 + $0x1a0] sm:$0xff]
  %v2059 = vld [vmem:[%s1 + $0x1b0] sm:$0xff]
  %v2060 = vld [vmem:[%s1 + $0x1b8] sm:$0xff]
  %v2061 = vld [vmem:[%s1 + $0x1c8] sm:$0xff]
  %v2062 = vld [vmem:[%s1 + $0x1d0] sm:$0xff]
  %v2063 = vld [vmem:[%s1 + $0x1e0] sm:$0xff]
  %v2064 = vld [vmem:[%s1 + $0x1e8] sm:$0xff]
  %v2065 = vld [vmem:[%s1 + $0x1f8] sm:$0xff]
  %v2066 = vld [vmem:[%s1 + $0x200] sm:$0xff]
  %v2067 = vld [vmem:[%s1 + $0x210] sm:$0xff]
  %v2068 = vld [vmem:[%s1 + $0x218] sm:$0xff]
  %v2069 = vld [vmem:[%s1 + $0x228] sm:$0xff]
  %v2070 = vld [vmem:[%s1 + $0x230] sm:$0xff]
  %v2071 = vld [vmem:[%s1 + $0x240] sm:$0xff]
  %v2072 = vld [vmem:[%s1 + $0x248] sm:$0xff]
  %v2073 = vld [vmem:[%s1 + $0x258] sm:$0xff]
  %v2074 = vld [vmem:[%s1 + $0x260] sm:$0xff]
  %v2075 = vld [vmem:[%s1 + $0x270] sm:$0xff]
  %v2076 = vld [vmem:[%s1 + $0x278] sm:$0xff]
  %v2077 = vld [vmem:[%s1 + $0x288] sm:$0xff]
  %v2078 = vld [vmem:[%s1 + $0x290] sm:$0xff]
  %v2079 = vld [vmem:[%s1 + $0x2a0] sm:$0xff]
  %v2080 = vld [vmem:[%s1 + $0x2a8] sm:$0xff]
  %v2081 = vld [vmem:[%s1 + $0x2b8] sm:$0xff]
  %v2082 = vld [vmem:[%s1 + $0x2c0] sm:$0xff]
  %v2083 = vld [vmem:[%s1 + $0x2d0] sm:$0xff]
  %v2084 = vld [vmem:[%s1 + $0x2d8] sm:$0xff]
  %v2085 = vld [vmem:[%s1 + $0x2e8] sm:$0xff]
  %v2086 = vld [vmem:[%s1 + $0x2f0] sm:$0xff]
  %s2087 = scalar_lea.vmem %s3, 12
  %v2088 = vld [vmem:[%s2087] sm:$0xf]
  %v2090 = vsel %vm151, %v2023, 0
  %v2093 = vsel %vm151, %v2024, 0
  %v2096 = vsel %vm151, %v2025, 0
  %v2099 = vsel %vm151, %v2026, 0
  %v2102 = vsel %vm151, %v2027, 0
  %v2105 = vsel %vm151, %v2028, 0
  %v2108 = vsel %vm151, %v2029, 0
  %v2111 = vsel %vm151, %v2030, 0
  %v2114 = vsel %vm151, %v2031, 0
  %v2117 = vsel %vm151, %v2032, 0
  %v2120 = vsel %vm151, %v2033, 0
  %v2123 = vsel %vm151, %v2034, 0
  %v2126 = vsel %vm151, %v2035, 0
  %v2129 = vsel %vm151, %v2036, 0
  %v2132 = vsel %vm151, %v2037, 0
  %v2135 = vsel %vm151, %v2038, 0
  %v2138 = vsel %vm151, %v2039, 0
  %v2141 = vsel %vm151, %v2040, 0
  %v2144 = vsel %vm151, %v2041, 0
  %v2147 = vsel %vm151, %v2042, 0
  %v2150 = vsel %vm151, %v2043, 0
  %v2153 = vsel %vm151, %v2044, 0
  %v2156 = vsel %vm151, %v2045, 0
  %v2159 = vsel %vm151, %v2046, 0
  %v2162 = vsel %vm151, %v2047, 0
  %v2165 = vsel %vm151, %v2048, 0
  %v2168 = vsel %vm151, %v2049, 0
  %v2171 = vsel %vm151, %v2050, 0
  %v2174 = vsel %vm151, %v2051, 0
  %v2177 = vsel %vm151, %v2052, 0
  %v2180 = vsel %vm151, %v2053, 0
  %v2183 = vsel %vm151, %v2054, 0
  %v2186 = vsel %vm151, %v2055, 0
  %v2189 = vsel %vm151, %v2056, 0
  %v2192 = vsel %vm151, %v2057, 0
  %v2195 = vsel %vm151, %v2058, 0
  %v2198 = vsel %vm151, %v2059, 0
  %v2201 = vsel %vm151, %v2060, 0
  %v2204 = vsel %vm151, %v2061, 0
  %v2207 = vsel %vm151, %v2062, 0
  %v2210 = vsel %vm151, %v2063, 0
  %v2213 = vsel %vm151, %v2064, 0
  %v2216 = vsel %vm151, %v2065, 0
  %v2219 = vsel %vm151, %v2066, 0
  %v2222 = vsel %vm151, %v2067, 0
  %v2225 = vsel %vm151, %v2068, 0
  %v2228 = vsel %vm151, %v2069, 0
  %v2231 = vsel %vm151, %v2070, 0
  %v2234 = vsel %vm151, %v2071, 0
  %v2237 = vsel %vm151, %v2072, 0
  %v2240 = vsel %vm151, %v2073, 0
  %v2243 = vsel %vm151, %v2074, 0
  %v2246 = vsel %vm151, %v2075, 0
  %v2249 = vsel %vm151, %v2076, 0
  %v2252 = vsel %vm151, %v2077, 0
  %v2255 = vsel %vm151, %v2078, 0
  %v2258 = vsel %vm151, %v2079, 0
  %v2261 = vsel %vm151, %v2080, 0
  %v2264 = vsel %vm151, %v2081, 0
  %v2267 = vsel %vm151, %v2082, 0
  %v2270 = vsel %vm151, %v2083, 0
  %v2273 = vsel %vm151, %v2084, 0
  %v2276 = vsel %vm151, %v2085, 0
  %v2279 = vsel %vm151, %v2086, 0
  %v2282 = vsel %vm344, %v2088, 0
  %2284 = vmatprep.subr.mxu0 0.0
  %2285 = vmatpush1.msra.mxu0 0.0
  %2286 = vmatprep.subr.mxu0 0.0
  %2287 = vmatpush1.msra.mxu0 0.0
  %2288 = vmatprep.subr.mxu0 0.0
  %2289 = vmatpush1.msra.mxu0 0.0
  %2290 = vmatprep.subr.mxu0 0.0
  %2291 = vmatpush1.msra.mxu0 0.0
  %2292 = vmatprep.subr.mxu0 0.0
  %2293 = vmatpush1.msra.mxu0 0.0
  %2294 = vmatprep.subr.mxu0 0.0
  %2295 = vmatpush1.msra.mxu0 0.0
  %2296 = vmatprep.subr.mxu0 0.0
  %2297 = vmatpush1.msra.mxu0 0.0
  %2298 = vmatprep.subr.mxu0 0.0
  %2299 = vmatpush1.msra.mxu0 0.0
  %2300 = vmatprep.subr.mxu0 0.0
  %2301 = vmatpush1.msra.mxu0 0.0
  %2302 = vmatprep.subr.mxu0 0.0
  %2303 = vmatpush1.msra.mxu0 0.0
  %2304 = vmatprep.subr.mxu0 0.0
  %2305 = vmatpush1.msra.mxu0 0.0
  %2306 = vmatprep.subr.mxu0 0.0
  %2307 = vmatpush1.msra.mxu0 0.0
  %2308 = vmatprep.subr.mxu0 0.0
  %2309 = vmatpush1.msra.mxu0 0.0
  %2310 = vmatprep.subr.mxu0 0.0
  %2311 = vmatpush1.msra.mxu0 0.0
  %2312 = vmatprep.subr.mxu0 0.0
  %2313 = vmatpush1.msra.mxu0 0.0
  %2314 = vmatprep.subr.mxu0 0.0
  %2315 = vmatpush1.msra.mxu0 %v2282
  %2316 = vmatprep.subr.mxu0 0.0
  %2317 = vmatpush2.msra.mxu0 0.0
  %2318 = vmatprep.subr.mxu0 0.0
  %2319 = vmatpush2.msra.mxu0 0.0
  %2320 = vmatprep.subr.mxu0 0.0
  %2321 = vmatpush2.msra.mxu0 0.0
  %2322 = vmatprep.subr.mxu0 0.0
  %2323 = vmatpush2.msra.mxu0 0.0
  %2324 = vmatprep.subr.mxu0 0.0
  %2325 = vmatpush2.msra.mxu0 0.0
  %2326 = vmatprep.subr.mxu0 0.0
  %2327 = vmatpush2.msra.mxu0 0.0
  %2328 = vmatprep.subr.mxu0 0.0
  %2329 = vmatpush2.msra.mxu0 0.0
  %2330 = vmatprep.subr.mxu0 0.0
  %2331 = vmatpush2.msra.mxu0 0.0
  %2332 = vmatprep.subr.mxu0 0.0
  %2333 = vmatpush2.msra.mxu0 0.0
  %2334 = vmatprep.subr.mxu0 0.0
  %2335 = vmatpush2.msra.mxu0 0.0
  %2336 = vmatprep.subr.mxu0 0.0
  %2337 = vmatpush2.msra.mxu0 0.0
  %2338 = vmatprep.subr.mxu0 0.0
  %2339 = vmatpush2.msra.mxu0 0.0
  %2340 = vmatprep.subr.mxu0 0.0
  %2341 = vmatpush2.msra.mxu0 0.0
  %2342 = vmatprep.subr.mxu0 0.0
  %2343 = vmatpush2.msra.mxu0 0.0
  %2344 = vmatprep.subr.mxu0 0.0
  %2345 = vmatpush2.msra.mxu0 0.0
  %2346 = vmatprep.subr.mxu0 0.0
  %2347 = vmatpush2.msra.mxu0 0.0
  %2348 = vmatprep.mubr.f32.mxu0 0.0
  %2349 = vmatmul.mubr.f32.gmra.mxu0 %v2090
  %v2350 = vpop.f32.mrf.mxu0
  %v2351 = vadd.f32 0.0, %v2350
  %v2352 = vpop.f32.mrf.mxu0
  %2353 = vmatprep.mubr.f32.mxu0 0.0
  %2354 = vmatmul.mubr.f32.gmra.mxu0 %v2093
  %v2355 = vpop.f32.mrf.mxu0
  %v2356 = vadd.f32 0.0, %v2355
  %v2357 = vpop.f32.mrf.mxu0
  %2358 = vmatprep.mubr.f32.mxu0 0.0
  %2359 = vmatmul.mubr.f32.gmra.mxu0 %v2096
  %v2360 = vpop.f32.mrf.mxu0
  %v2361 = vadd.f32 0.0, %v2360
  %v2362 = vpop.f32.mrf.mxu0
  %2363 = vmatprep.mubr.f32.mxu0 0.0
  %2364 = vmatmul.mubr.f32.gmra.mxu0 %v2099
  %v2365 = vpop.f32.mrf.mxu0
  %v2366 = vadd.f32 0.0, %v2365
  %v2367 = vpop.f32.mrf.mxu0
  %2368 = vmatprep.mubr.f32.mxu0 0.0
  %2369 = vmatmul.mubr.f32.gmra.mxu0 %v2102
  %v2370 = vpop.f32.mrf.mxu0
  %v2371 = vadd.f32 0.0, %v2370
  %v2372 = vpop.f32.mrf.mxu0
  %2373 = vmatprep.mubr.f32.mxu0 0.0
  %2374 = vmatmul.mubr.f32.gmra.mxu0 %v2105
  %v2375 = vpop.f32.mrf.mxu0
  %v2376 = vadd.f32 0.0, %v2375
  %v2377 = vpop.f32.mrf.mxu0
  %2378 = vmatprep.mubr.f32.mxu0 0.0
  %2379 = vmatmul.mubr.f32.gmra.mxu0 %v2108
  %v2380 = vpop.f32.mrf.mxu0
  %v2381 = vadd.f32 0.0, %v2380
  %v2382 = vpop.f32.mrf.mxu0
  %2383 = vmatprep.mubr.f32.mxu0 0.0
  %2384 = vmatmul.mubr.f32.gmra.mxu0 %v2111
  %v2385 = vpop.f32.mrf.mxu0
  %v2386 = vadd.f32 0.0, %v2385
  %v2387 = vpop.f32.mrf.mxu0
  %2388 = vmatprep.mubr.f32.mxu0 0.0
  %2389 = vmatmul.mubr.f32.gmra.mxu0 %v2114
  %v2390 = vpop.f32.mrf.mxu0
  %v2391 = vadd.f32 0.0, %v2390
  %v2392 = vpop.f32.mrf.mxu0
  %2393 = vmatprep.mubr.f32.mxu0 0.0
  %2394 = vmatmul.mubr.f32.gmra.mxu0 %v2117
  %v2395 = vpop.f32.mrf.mxu0
  %v2396 = vadd.f32 0.0, %v2395
  %v2397 = vpop.f32.mrf.mxu0
  %2398 = vmatprep.mubr.f32.mxu0 0.0
  %2399 = vmatmul.mubr.f32.gmra.mxu0 %v2120
  %v2400 = vpop.f32.mrf.mxu0
  %v2401 = vadd.f32 0.0, %v2400
  %v2402 = vpop.f32.mrf.mxu0
  %2403 = vmatprep.mubr.f32.mxu0 0.0
  %2404 = vmatmul.mubr.f32.gmra.mxu0 %v2123
  %v2405 = vpop.f32.mrf.mxu0
  %v2406 = vadd.f32 0.0, %v2405
  %v2407 = vpop.f32.mrf.mxu0
  %2408 = vmatprep.mubr.f32.mxu0 0.0
  %2409 = vmatmul.mubr.f32.gmra.mxu0 %v2126
  %v2410 = vpop.f32.mrf.mxu0
  %v2411 = vadd.f32 0.0, %v2410
  %v2412 = vpop.f32.mrf.mxu0
  %2413 = vmatprep.mubr.f32.mxu0 0.0
  %2414 = vmatmul.mubr.f32.gmra.mxu0 %v2129
  %v2415 = vpop.f32.mrf.mxu0
  %v2416 = vadd.f32 0.0, %v2415
  %v2417 = vpop.f32.mrf.mxu0
  %2418 = vmatprep.mubr.f32.mxu0 0.0
  %2419 = vmatmul.mubr.f32.gmra.mxu0 %v2132
  %v2420 = vpop.f32.mrf.mxu0
  %v2421 = vadd.f32 0.0, %v2420
  %v2422 = vpop.f32.mrf.mxu0
  %2423 = vmatprep.mubr.f32.mxu0 0.0
  %2424 = vmatmul.mubr.f32.gmra.mxu0 %v2135
  %v2425 = vpop.f32.mrf.mxu0
  %v2426 = vadd.f32 0.0, %v2425
  %v2427 = vpop.f32.mrf.mxu0
  %2428 = vmatprep.mubr.f32.mxu0 0.0
  %2429 = vmatmul.mubr.f32.gmra.mxu0 %v2138
  %v2430 = vpop.f32.mrf.mxu0
  %v2431 = vadd.f32 0.0, %v2430
  %v2432 = vpop.f32.mrf.mxu0
  %2433 = vmatprep.mubr.f32.mxu0 0.0
  %2434 = vmatmul.mubr.f32.gmra.mxu0 %v2141
  %v2435 = vpop.f32.mrf.mxu0
  %v2436 = vadd.f32 0.0, %v2435
  %v2437 = vpop.f32.mrf.mxu0
  %2438 = vmatprep.mubr.f32.mxu0 0.0
  %2439 = vmatmul.mubr.f32.gmra.mxu0 %v2144
  %v2440 = vpop.f32.mrf.mxu0
  %v2441 = vadd.f32 0.0, %v2440
  %v2442 = vpop.f32.mrf.mxu0
  %2443 = vmatprep.mubr.f32.mxu0 0.0
  %2444 = vmatmul.mubr.f32.gmra.mxu0 %v2147
  %v2445 = vpop.f32.mrf.mxu0
  %v2446 = vadd.f32 0.0, %v2445
  %v2447 = vpop.f32.mrf.mxu0
  %2448 = vmatprep.mubr.f32.mxu0 0.0
  %2449 = vmatmul.mubr.f32.gmra.mxu0 %v2150
  %v2450 = vpop.f32.mrf.mxu0
  %v2451 = vadd.f32 0.0, %v2450
  %v2452 = vpop.f32.mrf.mxu0
  %2453 = vmatprep.mubr.f32.mxu0 0.0
  %2454 = vmatmul.mubr.f32.gmra.mxu0 %v2153
  %v2455 = vpop.f32.mrf.mxu0
  %v2456 = vadd.f32 0.0, %v2455
  %v2457 = vpop.f32.mrf.mxu0
  %2458 = vmatprep.mubr.f32.mxu0 0.0
  %2459 = vmatmul.mubr.f32.gmra.mxu0 %v2156
  %v2460 = vpop.f32.mrf.mxu0
  %v2461 = vadd.f32 0.0, %v2460
  %v2462 = vpop.f32.mrf.mxu0
  %2463 = vmatprep.mubr.f32.mxu0 0.0
  %2464 = vmatmul.mubr.f32.gmra.mxu0 %v2159
  %v2465 = vpop.f32.mrf.mxu0
  %v2466 = vadd.f32 0.0, %v2465
  %v2467 = vpop.f32.mrf.mxu0
  %2468 = vmatprep.mubr.f32.mxu0 0.0
  %2469 = vmatmul.mubr.f32.gmra.mxu0 %v2162
  %v2470 = vpop.f32.mrf.mxu0
  %v2471 = vadd.f32 0.0, %v2470
  %v2472 = vpop.f32.mrf.mxu0
  %2473 = vmatprep.mubr.f32.mxu0 0.0
  %2474 = vmatmul.mubr.f32.gmra.mxu0 %v2165
  %v2475 = vpop.f32.mrf.mxu0
  %v2476 = vadd.f32 0.0, %v2475
  %v2477 = vpop.f32.mrf.mxu0
  %2478 = vmatprep.mubr.f32.mxu0 0.0
  %2479 = vmatmul.mubr.f32.gmra.mxu0 %v2168
  %v2480 = vpop.f32.mrf.mxu0
  %v2481 = vadd.f32 0.0, %v2480
  %v2482 = vpop.f32.mrf.mxu0
  %2483 = vmatprep.mubr.f32.mxu0 0.0
  %2484 = vmatmul.mubr.f32.gmra.mxu0 %v2171
  %v2485 = vpop.f32.mrf.mxu0
  %v2486 = vadd.f32 0.0, %v2485
  %v2487 = vpop.f32.mrf.mxu0
  %2488 = vmatprep.mubr.f32.mxu0 0.0
  %2489 = vmatmul.mubr.f32.gmra.mxu0 %v2174
  %v2490 = vpop.f32.mrf.mxu0
  %v2491 = vadd.f32 0.0, %v2490
  %v2492 = vpop.f32.mrf.mxu0
  %2493 = vmatprep.mubr.f32.mxu0 0.0
  %2494 = vmatmul.mubr.f32.gmra.mxu0 %v2177
  %v2495 = vpop.f32.mrf.mxu0
  %v2496 = vadd.f32 0.0, %v2495
  %v2497 = vpop.f32.mrf.mxu0
  %2498 = vmatprep.mubr.f32.mxu0 0.0
  %2499 = vmatmul.mubr.f32.gmra.mxu0 %v2180
  %v2500 = vpop.f32.mrf.mxu0
  %v2501 = vadd.f32 0.0, %v2500
  %v2502 = vpop.f32.mrf.mxu0
  %2503 = vmatprep.mubr.f32.mxu0 0.0
  %2504 = vmatmul.mubr.f32.gmra.mxu0 %v2183
  %v2505 = vpop.f32.mrf.mxu0
  %v2506 = vadd.f32 0.0, %v2505
  %v2507 = vpop.f32.mrf.mxu0
  %2508 = vmatprep.mubr.f32.mxu0 0.0
  %2509 = vmatmul.mubr.f32.gmra.mxu0 %v2186
  %v2510 = vpop.f32.mrf.mxu0
  %v2511 = vadd.f32 0.0, %v2510
  %v2512 = vpop.f32.mrf.mxu0
  %2513 = vmatprep.mubr.f32.mxu0 0.0
  %2514 = vmatmul.mubr.f32.gmra.mxu0 %v2189
  %v2515 = vpop.f32.mrf.mxu0
  %v2516 = vadd.f32 0.0, %v2515
  %v2517 = vpop.f32.mrf.mxu0
  %2518 = vmatprep.mubr.f32.mxu0 0.0
  %2519 = vmatmul.mubr.f32.gmra.mxu0 %v2192
  %v2520 = vpop.f32.mrf.mxu0
  %v2521 = vadd.f32 0.0, %v2520
  %v2522 = vpop.f32.mrf.mxu0
  %2523 = vmatprep.mubr.f32.mxu0 0.0
  %2524 = vmatmul.mubr.f32.gmra.mxu0 %v2195
  %v2525 = vpop.f32.mrf.mxu0
  %v2526 = vadd.f32 0.0, %v2525
  %v2527 = vpop.f32.mrf.mxu0
  %2528 = vmatprep.mubr.f32.mxu0 0.0
  %2529 = vmatmul.mubr.f32.gmra.mxu0 %v2198
  %v2530 = vpop.f32.mrf.mxu0
  %v2531 = vadd.f32 0.0, %v2530
  %v2532 = vpop.f32.mrf.mxu0
  %2533 = vmatprep.mubr.f32.mxu0 0.0
  %2534 = vmatmul.mubr.f32.gmra.mxu0 %v2201
  %v2535 = vpop.f32.mrf.mxu0
  %v2536 = vadd.f32 0.0, %v2535
  %v2537 = vpop.f32.mrf.mxu0
  %2538 = vmatprep.mubr.f32.mxu0 0.0
  %2539 = vmatmul.mubr.f32.gmra.mxu0 %v2204
  %v2540 = vpop.f32.mrf.mxu0
  %v2541 = vadd.f32 0.0, %v2540
  %v2542 = vpop.f32.mrf.mxu0
  %2543 = vmatprep.mubr.f32.mxu0 0.0
  %2544 = vmatmul.mubr.f32.gmra.mxu0 %v2207
  %v2545 = vpop.f32.mrf.mxu0
  %v2546 = vadd.f32 0.0, %v2545
  %v2547 = vpop.f32.mrf.mxu0
  %2548 = vmatprep.mubr.f32.mxu0 0.0
  %2549 = vmatmul.mubr.f32.gmra.mxu0 %v2210
  %v2550 = vpop.f32.mrf.mxu0
  %v2551 = vadd.f32 0.0, %v2550
  %v2552 = vpop.f32.mrf.mxu0
  %2553 = vmatprep.mubr.f32.mxu0 0.0
  %2554 = vmatmul.mubr.f32.gmra.mxu0 %v2213
  %v2555 = vpop.f32.mrf.mxu0
  %v2556 = vadd.f32 0.0, %v2555
  %v2557 = vpop.f32.mrf.mxu0
  %2558 = vmatprep.mubr.f32.mxu0 0.0
  %2559 = vmatmul.mubr.f32.gmra.mxu0 %v2216
  %v2560 = vpop.f32.mrf.mxu0
  %v2561 = vadd.f32 0.0, %v2560
  %v2562 = vpop.f32.mrf.mxu0
  %2563 = vmatprep.mubr.f32.mxu0 0.0
  %2564 = vmatmul.mubr.f32.gmra.mxu0 %v2219
  %v2565 = vpop.f32.mrf.mxu0
  %v2566 = vadd.f32 0.0, %v2565
  %v2567 = vpop.f32.mrf.mxu0
  %2568 = vmatprep.mubr.f32.mxu0 0.0
  %2569 = vmatmul.mubr.f32.gmra.mxu0 %v2222
  %v2570 = vpop.f32.mrf.mxu0
  %v2571 = vadd.f32 0.0, %v2570
  %v2572 = vpop.f32.mrf.mxu0
  %2573 = vmatprep.mubr.f32.mxu0 0.0
  %2574 = vmatmul.mubr.f32.gmra.mxu0 %v2225
  %v2575 = vpop.f32.mrf.mxu0
  %v2576 = vadd.f32 0.0, %v2575
  %v2577 = vpop.f32.mrf.mxu0
  %2578 = vmatprep.mubr.f32.mxu0 0.0
  %2579 = vmatmul.mubr.f32.gmra.mxu0 %v2228
  %v2580 = vpop.f32.mrf.mxu0
  %v2581 = vadd.f32 0.0, %v2580
  %v2582 = vpop.f32.mrf.mxu0
  %2583 = vmatprep.mubr.f32.mxu0 0.0
  %2584 = vmatmul.mubr.f32.gmra.mxu0 %v2231
  %v2585 = vpop.f32.mrf.mxu0
  %v2586 = vadd.f32 0.0, %v2585
  %v2587 = vpop.f32.mrf.mxu0
  %2588 = vmatprep.mubr.f32.mxu0 0.0
  %2589 = vmatmul.mubr.f32.gmra.mxu0 %v2234
  %v2590 = vpop.f32.mrf.mxu0
  %v2591 = vadd.f32 0.0, %v2590
  %v2592 = vpop.f32.mrf.mxu0
  %2593 = vmatprep.mubr.f32.mxu0 0.0
  %2594 = vmatmul.mubr.f32.gmra.mxu0 %v2237
  %v2595 = vpop.f32.mrf.mxu0
  %v2596 = vadd.f32 0.0, %v2595
  %v2597 = vpop.f32.mrf.mxu0
  %2598 = vmatprep.mubr.f32.mxu0 0.0
  %2599 = vmatmul.mubr.f32.gmra.mxu0 %v2240
  %v2600 = vpop.f32.mrf.mxu0
  %v2601 = vadd.f32 0.0, %v2600
  %v2602 = vpop.f32.mrf.mxu0
  %2603 = vmatprep.mubr.f32.mxu0 0.0
  %2604 = vmatmul.mubr.f32.gmra.mxu0 %v2243
  %v2605 = vpop.f32.mrf.mxu0
  %v2606 = vadd.f32 0.0, %v2605
  %v2607 = vpop.f32.mrf.mxu0
  %2608 = vmatprep.mubr.f32.mxu0 0.0
  %2609 = vmatmul.mubr.f32.gmra.mxu0 %v2246
  %v2610 = vpop.f32.mrf.mxu0
  %v2611 = vadd.f32 0.0, %v2610
  %v2612 = vpop.f32.mrf.mxu0
  %2613 = vmatprep.mubr.f32.mxu0 0.0
  %2614 = vmatmul.mubr.f32.gmra.mxu0 %v2249
  %v2615 = vpop.f32.mrf.mxu0
  %v2616 = vadd.f32 0.0, %v2615
  %v2617 = vpop.f32.mrf.mxu0
  %2618 = vmatprep.mubr.f32.mxu0 0.0
  %2619 = vmatmul.mubr.f32.gmra.mxu0 %v2252
  %v2620 = vpop.f32.mrf.mxu0
  %v2621 = vadd.f32 0.0, %v2620
  %v2622 = vpop.f32.mrf.mxu0
  %2623 = vmatprep.mubr.f32.mxu0 0.0
  %2624 = vmatmul.mubr.f32.gmra.mxu0 %v2255
  %v2625 = vpop.f32.mrf.mxu0
  %v2626 = vadd.f32 0.0, %v2625
  %v2627 = vpop.f32.mrf.mxu0
  %2628 = vmatprep.mubr.f32.mxu0 0.0
  %2629 = vmatmul.mubr.f32.gmra.mxu0 %v2258
  %v2630 = vpop.f32.mrf.mxu0
  %v2631 = vadd.f32 0.0, %v2630
  %v2632 = vpop.f32.mrf.mxu0
  %2633 = vmatprep.mubr.f32.mxu0 0.0
  %2634 = vmatmul.mubr.f32.gmra.mxu0 %v2261
  %v2635 = vpop.f32.mrf.mxu0
  %v2636 = vadd.f32 0.0, %v2635
  %v2637 = vpop.f32.mrf.mxu0
  %2638 = vmatprep.mubr.f32.mxu0 0.0
  %2639 = vmatmul.mubr.f32.gmra.mxu0 %v2264
  %v2640 = vpop.f32.mrf.mxu0
  %v2641 = vadd.f32 0.0, %v2640
  %v2642 = vpop.f32.mrf.mxu0
  %2643 = vmatprep.mubr.f32.mxu0 0.0
  %2644 = vmatmul.mubr.f32.gmra.mxu0 %v2267
  %v2645 = vpop.f32.mrf.mxu0
  %v2646 = vadd.f32 0.0, %v2645
  %v2647 = vpop.f32.mrf.mxu0
  %2648 = vmatprep.mubr.f32.mxu0 0.0
  %2649 = vmatmul.mubr.f32.gmra.mxu0 %v2270
  %v2650 = vpop.f32.mrf.mxu0
  %v2651 = vadd.f32 0.0, %v2650
  %v2652 = vpop.f32.mrf.mxu0
  %2653 = vmatprep.mubr.f32.mxu0 0.0
  %2654 = vmatmul.mubr.f32.gmra.mxu0 %v2273
  %v2655 = vpop.f32.mrf.mxu0
  %v2656 = vadd.f32 0.0, %v2655
  %v2657 = vpop.f32.mrf.mxu0
  %2658 = vmatprep.mubr.f32.mxu0 0.0
  %2659 = vmatmul.mubr.f32.gmra.mxu0 %v2276
  %v2660 = vpop.f32.mrf.mxu0
  %v2661 = vadd.f32 0.0, %v2660
  %v2662 = vpop.f32.mrf.mxu0
  %2663 = vmatprep.mubr.f32.mxu0 0.0
  %2664 = vmatmul.mubr.f32.gmra.mxu0 %v2279
  %v2665 = vpop.f32.mrf.mxu0
  %v2666 = vadd.f32 0.0, %v2665
  %v2667 = vpop.f32.mrf.mxu0
  %2668 = vdwg.mxu0
  %v2669 = vadd.f32 %v1959, %v2351
  %v2670 = vadd.f32 %v1960, %v2356
  %v2671 = vadd.f32 %v1961, %v2361
  %v2672 = vadd.f32 %v1962, %v2366
  %v2673 = vadd.f32 %v1963, %v2371
  %v2674 = vadd.f32 %v1964, %v2376
  %v2675 = vadd.f32 %v1965, %v2381
  %v2676 = vadd.f32 %v1966, %v2386
  %v2677 = vadd.f32 %v1967, %v2391
  %v2678 = vadd.f32 %v1968, %v2396
  %v2679 = vadd.f32 %v1969, %v2401
  %v2680 = vadd.f32 %v1970, %v2406
  %v2681 = vadd.f32 %v1971, %v2411
  %v2682 = vadd.f32 %v1972, %v2416
  %v2683 = vadd.f32 %v1973, %v2421
  %v2684 = vadd.f32 %v1974, %v2426
  %v2685 = vadd.f32 %v1975, %v2431
  %v2686 = vadd.f32 %v1976, %v2436
  %v2687 = vadd.f32 %v1977, %v2441
  %v2688 = vadd.f32 %v1978, %v2446
  %v2689 = vadd.f32 %v1979, %v2451
  %v2690 = vadd.f32 %v1980, %v2456
  %v2691 = vadd.f32 %v1981, %v2461
  %v2692 = vadd.f32 %v1982, %v2466
  %v2693 = vadd.f32 %v1983, %v2471
  %v2694 = vadd.f32 %v1984, %v2476
  %v2695 = vadd.f32 %v1985, %v2481
  %v2696 = vadd.f32 %v1986, %v2486
  %v2697 = vadd.f32 %v1987, %v2491
  %v2698 = vadd.f32 %v1988, %v2496
  %v2699 = vadd.f32 %v1989, %v2501
  %v2700 = vadd.f32 %v1990, %v2506
  %v2701 = vadd.f32 %v1991, %v2511
  %v2702 = vadd.f32 %v1992, %v2516
  %v2703 = vadd.f32 %v1993, %v2521
  %v2704 = vadd.f32 %v1994, %v2526
  %v2705 = vadd.f32 %v1995, %v2531
  %v2706 = vadd.f32 %v1996, %v2536
  %v2707 = vadd.f32 %v1997, %v2541
  %v2708 = vadd.f32 %v1998, %v2546
  %v2709 = vadd.f32 %v1999, %v2551
  %v2710 = vadd.f32 %v2000, %v2556
  %v2711 = vadd.f32 %v2001, %v2561
  %v2712 = vadd.f32 %v2002, %v2566
  %v2713 = vadd.f32 %v2003, %v2571
  %v2714 = vadd.f32 %v2004, %v2576
  %v2715 = vadd.f32 %v2005, %v2581
  %v2716 = vadd.f32 %v2006, %v2586
  %v2717 = vadd.f32 %v2007, %v2591
  %v2718 = vadd.f32 %v2008, %v2596
  %v2719 = vadd.f32 %v2009, %v2601
  %v2720 = vadd.f32 %v2010, %v2606
  %v2721 = vadd.f32 %v2011, %v2611
  %v2722 = vadd.f32 %v2012, %v2616
  %v2723 = vadd.f32 %v2013, %v2621
  %v2724 = vadd.f32 %v2014, %v2626
  %v2725 = vadd.f32 %v2015, %v2631
  %v2726 = vadd.f32 %v2016, %v2636
  %v2727 = vadd.f32 %v2017, %v2641
  %v2728 = vadd.f32 %v2018, %v2646
  %v2729 = vadd.f32 %v2019, %v2651
  %v2730 = vadd.f32 %v2020, %v2656
  %v2731 = vadd.f32 %v2021, %v2661
  %v2732 = vadd.f32 %v2022, %v2666
  %v2733 = vld [vmem:[%s1 + $0x1] sm:$0xff]
  %v2734 = vld [vmem:[%s1 + $0x9] sm:$0xff]
  %v2735 = vld [vmem:[%s1 + $0x19] sm:$0xff]
  %v2736 = vld [vmem:[%s1 + $0x21] sm:$0xff]
  %v2737 = vld [vmem:[%s1 + $0x31] sm:$0xff]
  %v2738 = vld [vmem:[%s1 + $0x39] sm:$0xff]
  %v2739 = vld [vmem:[%s1 + $0x49] sm:$0xff]
  %v2740 = vld [vmem:[%s1 + $0x51] sm:$0xff]
  %v2741 = vld [vmem:[%s1 + $0x61] sm:$0xff]
  %v2742 = vld [vmem:[%s1 + $0x69] sm:$0xff]
  %v2743 = vld [vmem:[%s1 + $0x79] sm:$0xff]
  %v2744 = vld [vmem:[%s1 + $0x81] sm:$0xff]
  %v2745 = vld [vmem:[%s1 + $0x91] sm:$0xff]
  %v2746 = vld [vmem:[%s1 + $0x99] sm:$0xff]
  %v2747 = vld [vmem:[%s1 + $0xa9] sm:$0xff]
  %v2748 = vld [vmem:[%s1 + $0xb1] sm:$0xff]
  %v2749 = vld [vmem:[%s1 + $0xc1] sm:$0xff]
  %v2750 = vld [vmem:[%s1 + $0xc9] sm:$0xff]
  %v2751 = vld [vmem:[%s1 + $0xd9] sm:$0xff]
  %v2752 = vld [vmem:[%s1 + $0xe1] sm:$0xff]
  %v2753 = vld [vmem:[%s1 + $0xf1] sm:$0xff]
  %v2754 = vld [vmem:[%s1 + $0xf9] sm:$0xff]
  %v2755 = vld [vmem:[%s1 + $0x109] sm:$0xff]
  %v2756 = vld [vmem:[%s1 + $0x111] sm:$0xff]
  %v2757 = vld [vmem:[%s1 + $0x121] sm:$0xff]
  %v2758 = vld [vmem:[%s1 + $0x129] sm:$0xff]
  %v2759 = vld [vmem:[%s1 + $0x139] sm:$0xff]
  %v2760 = vld [vmem:[%s1 + $0x141] sm:$0xff]
  %v2761 = vld [vmem:[%s1 + $0x151] sm:$0xff]
  %v2762 = vld [vmem:[%s1 + $0x159] sm:$0xff]
  %v2763 = vld [vmem:[%s1 + $0x169] sm:$0xff]
  %v2764 = vld [vmem:[%s1 + $0x171] sm:$0xff]
  %v2765 = vld [vmem:[%s1 + $0x181] sm:$0xff]
  %v2766 = vld [vmem:[%s1 + $0x189] sm:$0xff]
  %v2767 = vld [vmem:[%s1 + $0x199] sm:$0xff]
  %v2768 = vld [vmem:[%s1 + $0x1a1] sm:$0xff]
  %v2769 = vld [vmem:[%s1 + $0x1b1] sm:$0xff]
  %v2770 = vld [vmem:[%s1 + $0x1b9] sm:$0xff]
  %v2771 = vld [vmem:[%s1 + $0x1c9] sm:$0xff]
  %v2772 = vld [vmem:[%s1 + $0x1d1] sm:$0xff]
  %v2773 = vld [vmem:[%s1 + $0x1e1] sm:$0xff]
  %v2774 = vld [vmem:[%s1 + $0x1e9] sm:$0xff]
  %v2775 = vld [vmem:[%s1 + $0x1f9] sm:$0xff]
  %v2776 = vld [vmem:[%s1 + $0x201] sm:$0xff]
  %v2777 = vld [vmem:[%s1 + $0x211] sm:$0xff]
  %v2778 = vld [vmem:[%s1 + $0x219] sm:$0xff]
  %v2779 = vld [vmem:[%s1 + $0x229] sm:$0xff]
  %v2780 = vld [vmem:[%s1 + $0x231] sm:$0xff]
  %v2781 = vld [vmem:[%s1 + $0x241] sm:$0xff]
  %v2782 = vld [vmem:[%s1 + $0x249] sm:$0xff]
  %v2783 = vld [vmem:[%s1 + $0x259] sm:$0xff]
  %v2784 = vld [vmem:[%s1 + $0x261] sm:$0xff]
  %v2785 = vld [vmem:[%s1 + $0x271] sm:$0xff]
  %v2786 = vld [vmem:[%s1 + $0x279] sm:$0xff]
  %v2787 = vld [vmem:[%s1 + $0x289] sm:$0xff]
  %v2788 = vld [vmem:[%s1 + $0x291] sm:$0xff]
  %v2789 = vld [vmem:[%s1 + $0x2a1] sm:$0xff]
  %v2790 = vld [vmem:[%s1 + $0x2a9] sm:$0xff]
  %v2791 = vld [vmem:[%s1 + $0x2b9] sm:$0xff]
  %v2792 = vld [vmem:[%s1 + $0x2c1] sm:$0xff]
  %v2793 = vld [vmem:[%s1 + $0x2d1] sm:$0xff]
  %v2794 = vld [vmem:[%s1 + $0x2d9] sm:$0xff]
  %v2795 = vld [vmem:[%s1 + $0x2e9] sm:$0xff]
  %v2796 = vld [vmem:[%s1 + $0x2f1] sm:$0xff]
  %s2797 = scalar_lea.vmem %s3, 16
  %v2798 = vld [vmem:[%s2797] sm:$0xf]
  %v2800 = vsel %vm151, %v2733, 0
  %v2803 = vsel %vm151, %v2734, 0
  %v2806 = vsel %vm151, %v2735, 0
  %v2809 = vsel %vm151, %v2736, 0
  %v2812 = vsel %vm151, %v2737, 0
  %v2815 = vsel %vm151, %v2738, 0
  %v2818 = vsel %vm151, %v2739, 0
  %v2821 = vsel %vm151, %v2740, 0
  %v2824 = vsel %vm151, %v2741, 0
  %v2827 = vsel %vm151, %v2742, 0
  %v2830 = vsel %vm151, %v2743, 0
  %v2833 = vsel %vm151, %v2744, 0
  %v2836 = vsel %vm151, %v2745, 0
  %v2839 = vsel %vm151, %v2746, 0
  %v2842 = vsel %vm151, %v2747, 0
  %v2845 = vsel %vm151, %v2748, 0
  %v2848 = vsel %vm151, %v2749, 0
  %v2851 = vsel %vm151, %v2750, 0
  %v2854 = vsel %vm151, %v2751, 0
  %v2857 = vsel %vm151, %v2752, 0
  %v2860 = vsel %vm151, %v2753, 0
  %v2863 = vsel %vm151, %v2754, 0
  %v2866 = vsel %vm151, %v2755, 0
  %v2869 = vsel %vm151, %v2756, 0
  %v2872 = vsel %vm151, %v2757, 0
  %v2875 = vsel %vm151, %v2758, 0
  %v2878 = vsel %vm151, %v2759, 0
  %v2881 = vsel %vm151, %v2760, 0
  %v2884 = vsel %vm151, %v2761, 0
  %v2887 = vsel %vm151, %v2762, 0
  %v2890 = vsel %vm151, %v2763, 0
  %v2893 = vsel %vm151, %v2764, 0
  %v2896 = vsel %vm151, %v2765, 0
  %v2899 = vsel %vm151, %v2766, 0
  %v2902 = vsel %vm151, %v2767, 0
  %v2905 = vsel %vm151, %v2768, 0
  %v2908 = vsel %vm151, %v2769, 0
  %v2911 = vsel %vm151, %v2770, 0
  %v2914 = vsel %vm151, %v2771, 0
  %v2917 = vsel %vm151, %v2772, 0
  %v2920 = vsel %vm151, %v2773, 0
  %v2923 = vsel %vm151, %v2774, 0
  %v2926 = vsel %vm151, %v2775, 0
  %v2929 = vsel %vm151, %v2776, 0
  %v2932 = vsel %vm151, %v2777, 0
  %v2935 = vsel %vm151, %v2778, 0
  %v2938 = vsel %vm151, %v2779, 0
  %v2941 = vsel %vm151, %v2780, 0
  %v2944 = vsel %vm151, %v2781, 0
  %v2947 = vsel %vm151, %v2782, 0
  %v2950 = vsel %vm151, %v2783, 0
  %v2953 = vsel %vm151, %v2784, 0
  %v2956 = vsel %vm151, %v2785, 0
  %v2959 = vsel %vm151, %v2786, 0
  %v2962 = vsel %vm151, %v2787, 0
  %v2965 = vsel %vm151, %v2788, 0
  %v2968 = vsel %vm151, %v2789, 0
  %v2971 = vsel %vm151, %v2790, 0
  %v2974 = vsel %vm151, %v2791, 0
  %v2977 = vsel %vm151, %v2792, 0
  %v2980 = vsel %vm151, %v2793, 0
  %v2983 = vsel %vm151, %v2794, 0
  %v2986 = vsel %vm151, %v2795, 0
  %v2989 = vsel %vm151, %v2796, 0
  %v2992 = vsel %vm344, %v2798, 0
  %2994 = vmatprep.subr.mxu0 0.0
  %2995 = vmatpush1.msra.mxu0 0.0
  %2996 = vmatprep.subr.mxu0 0.0
  %2997 = vmatpush1.msra.mxu0 0.0
  %2998 = vmatprep.subr.mxu0 0.0
  %2999 = vmatpush1.msra.mxu0 0.0
  %3000 = vmatprep.subr.mxu0 0.0
  %3001 = vmatpush1.msra.mxu0 0.0
  %3002 = vmatprep.subr.mxu0 0.0
  %3003 = vmatpush1.msra.mxu0 0.0
  %3004 = vmatprep.subr.mxu0 0.0
  %3005 = vmatpush1.msra.mxu0 0.0
  %3006 = vmatprep.subr.mxu0 0.0
  %3007 = vmatpush1.msra.mxu0 0.0
  %3008 = vmatprep.subr.mxu0 0.0
  %3009 = vmatpush1.msra.mxu0 0.0
  %3010 = vmatprep.subr.mxu0 0.0
  %3011 = vmatpush1.msra.mxu0 0.0
  %3012 = vmatprep.subr.mxu0 0.0
  %3013 = vmatpush1.msra.mxu0 0.0
  %3014 = vmatprep.subr.mxu0 0.0
  %3015 = vmatpush1.msra.mxu0 0.0
  %3016 = vmatprep.subr.mxu0 0.0
  %3017 = vmatpush1.msra.mxu0 0.0
  %3018 = vmatprep.subr.mxu0 0.0
  %3019 = vmatpush1.msra.mxu0 0.0
  %3020 = vmatprep.subr.mxu0 0.0
  %3021 = vmatpush1.msra.mxu0 0.0
  %3022 = vmatprep.subr.mxu0 0.0
  %3023 = vmatpush1.msra.mxu0 0.0
  %3024 = vmatprep.subr.mxu0 0.0
  %3025 = vmatpush1.msra.mxu0 %v2992
  %3026 = vmatprep.subr.mxu0 0.0
  %3027 = vmatpush2.msra.mxu0 0.0
  %3028 = vmatprep.subr.mxu0 0.0
  %3029 = vmatpush2.msra.mxu0 0.0
  %3030 = vmatprep.subr.mxu0 0.0
  %3031 = vmatpush2.msra.mxu0 0.0
  %3032 = vmatprep.subr.mxu0 0.0
  %3033 = vmatpush2.msra.mxu0 0.0
  %3034 = vmatprep.subr.mxu0 0.0
  %3035 = vmatpush2.msra.mxu0 0.0
  %3036 = vmatprep.subr.mxu0 0.0
  %3037 = vmatpush2.msra.mxu0 0.0
  %3038 = vmatprep.subr.mxu0 0.0
  %3039 = vmatpush2.msra.mxu0 0.0
  %3040 = vmatprep.subr.mxu0 0.0
  %3041 = vmatpush2.msra.mxu0 0.0
  %3042 = vmatprep.subr.mxu0 0.0
  %3043 = vmatpush2.msra.mxu0 0.0
  %3044 = vmatprep.subr.mxu0 0.0
  %3045 = vmatpush2.msra.mxu0 0.0
  %3046 = vmatprep.subr.mxu0 0.0
  %3047 = vmatpush2.msra.mxu0 0.0
  %3048 = vmatprep.subr.mxu0 0.0
  %3049 = vmatpush2.msra.mxu0 0.0
  %3050 = vmatprep.subr.mxu0 0.0
  %3051 = vmatpush2.msra.mxu0 0.0
  %3052 = vmatprep.subr.mxu0 0.0
  %3053 = vmatpush2.msra.mxu0 0.0
  %3054 = vmatprep.subr.mxu0 0.0
  %3055 = vmatpush2.msra.mxu0 0.0
  %3056 = vmatprep.subr.mxu0 0.0
  %3057 = vmatpush2.msra.mxu0 0.0
  %3058 = vmatprep.mubr.f32.mxu0 0.0
  %3059 = vmatmul.mubr.f32.gmra.mxu0 %v2800
  %v3060 = vpop.f32.mrf.mxu0
  %v3061 = vadd.f32 0.0, %v3060
  %v3062 = vpop.f32.mrf.mxu0
  %3063 = vmatprep.mubr.f32.mxu0 0.0
  %3064 = vmatmul.mubr.f32.gmra.mxu0 %v2803
  %v3065 = vpop.f32.mrf.mxu0
  %v3066 = vadd.f32 0.0, %v3065
  %v3067 = vpop.f32.mrf.mxu0
  %3068 = vmatprep.mubr.f32.mxu0 0.0
  %3069 = vmatmul.mubr.f32.gmra.mxu0 %v2806
  %v3070 = vpop.f32.mrf.mxu0
  %v3071 = vadd.f32 0.0, %v3070
  %v3072 = vpop.f32.mrf.mxu0
  %3073 = vmatprep.mubr.f32.mxu0 0.0
  %3074 = vmatmul.mubr.f32.gmra.mxu0 %v2809
  %v3075 = vpop.f32.mrf.mxu0
  %v3076 = vadd.f32 0.0, %v3075
  %v3077 = vpop.f32.mrf.mxu0
  %3078 = vmatprep.mubr.f32.mxu0 0.0
  %3079 = vmatmul.mubr.f32.gmra.mxu0 %v2812
  %v3080 = vpop.f32.mrf.mxu0
  %v3081 = vadd.f32 0.0, %v3080
  %v3082 = vpop.f32.mrf.mxu0
  %3083 = vmatprep.mubr.f32.mxu0 0.0
  %3084 = vmatmul.mubr.f32.gmra.mxu0 %v2815
  %v3085 = vpop.f32.mrf.mxu0
  %v3086 = vadd.f32 0.0, %v3085
  %v3087 = vpop.f32.mrf.mxu0
  %3088 = vmatprep.mubr.f32.mxu0 0.0
  %3089 = vmatmul.mubr.f32.gmra.mxu0 %v2818
  %v3090 = vpop.f32.mrf.mxu0
  %v3091 = vadd.f32 0.0, %v3090
  %v3092 = vpop.f32.mrf.mxu0
  %3093 = vmatprep.mubr.f32.mxu0 0.0
  %3094 = vmatmul.mubr.f32.gmra.mxu0 %v2821
  %v3095 = vpop.f32.mrf.mxu0
  %v3096 = vadd.f32 0.0, %v3095
  %v3097 = vpop.f32.mrf.mxu0
  %3098 = vmatprep.mubr.f32.mxu0 0.0
  %3099 = vmatmul.mubr.f32.gmra.mxu0 %v2824
  %v3100 = vpop.f32.mrf.mxu0
  %v3101 = vadd.f32 0.0, %v3100
  %v3102 = vpop.f32.mrf.mxu0
  %3103 = vmatprep.mubr.f32.mxu0 0.0
  %3104 = vmatmul.mubr.f32.gmra.mxu0 %v2827
  %v3105 = vpop.f32.mrf.mxu0
  %v3106 = vadd.f32 0.0, %v3105
  %v3107 = vpop.f32.mrf.mxu0
  %3108 = vmatprep.mubr.f32.mxu0 0.0
  %3109 = vmatmul.mubr.f32.gmra.mxu0 %v2830
  %v3110 = vpop.f32.mrf.mxu0
  %v3111 = vadd.f32 0.0, %v3110
  %v3112 = vpop.f32.mrf.mxu0
  %3113 = vmatprep.mubr.f32.mxu0 0.0
  %3114 = vmatmul.mubr.f32.gmra.mxu0 %v2833
  %v3115 = vpop.f32.mrf.mxu0
  %v3116 = vadd.f32 0.0, %v3115
  %v3117 = vpop.f32.mrf.mxu0
  %3118 = vmatprep.mubr.f32.mxu0 0.0
  %3119 = vmatmul.mubr.f32.gmra.mxu0 %v2836
  %v3120 = vpop.f32.mrf.mxu0
  %v3121 = vadd.f32 0.0, %v3120
  %v3122 = vpop.f32.mrf.mxu0
  %3123 = vmatprep.mubr.f32.mxu0 0.0
  %3124 = vmatmul.mubr.f32.gmra.mxu0 %v2839
  %v3125 = vpop.f32.mrf.mxu0
  %v3126 = vadd.f32 0.0, %v3125
  %v3127 = vpop.f32.mrf.mxu0
  %3128 = vmatprep.mubr.f32.mxu0 0.0
  %3129 = vmatmul.mubr.f32.gmra.mxu0 %v2842
  %v3130 = vpop.f32.mrf.mxu0
  %v3131 = vadd.f32 0.0, %v3130
  %v3132 = vpop.f32.mrf.mxu0
  %3133 = vmatprep.mubr.f32.mxu0 0.0
  %3134 = vmatmul.mubr.f32.gmra.mxu0 %v2845
  %v3135 = vpop.f32.mrf.mxu0
  %v3136 = vadd.f32 0.0, %v3135
  %v3137 = vpop.f32.mrf.mxu0
  %3138 = vmatprep.mubr.f32.mxu0 0.0
  %3139 = vmatmul.mubr.f32.gmra.mxu0 %v2848
  %v3140 = vpop.f32.mrf.mxu0
  %v3141 = vadd.f32 0.0, %v3140
  %v3142 = vpop.f32.mrf.mxu0
  %3143 = vmatprep.mubr.f32.mxu0 0.0
  %3144 = vmatmul.mubr.f32.gmra.mxu0 %v2851
  %v3145 = vpop.f32.mrf.mxu0
  %v3146 = vadd.f32 0.0, %v3145
  %v3147 = vpop.f32.mrf.mxu0
  %3148 = vmatprep.mubr.f32.mxu0 0.0
  %3149 = vmatmul.mubr.f32.gmra.mxu0 %v2854
  %v3150 = vpop.f32.mrf.mxu0
  %v3151 = vadd.f32 0.0, %v3150
  %v3152 = vpop.f32.mrf.mxu0
  %3153 = vmatprep.mubr.f32.mxu0 0.0
  %3154 = vmatmul.mubr.f32.gmra.mxu0 %v2857
  %v3155 = vpop.f32.mrf.mxu0
  %v3156 = vadd.f32 0.0, %v3155
  %v3157 = vpop.f32.mrf.mxu0
  %3158 = vmatprep.mubr.f32.mxu0 0.0
  %3159 = vmatmul.mubr.f32.gmra.mxu0 %v2860
  %v3160 = vpop.f32.mrf.mxu0
  %v3161 = vadd.f32 0.0, %v3160
  %v3162 = vpop.f32.mrf.mxu0
  %3163 = vmatprep.mubr.f32.mxu0 0.0
  %3164 = vmatmul.mubr.f32.gmra.mxu0 %v2863
  %v3165 = vpop.f32.mrf.mxu0
  %v3166 = vadd.f32 0.0, %v3165
  %v3167 = vpop.f32.mrf.mxu0
  %3168 = vmatprep.mubr.f32.mxu0 0.0
  %3169 = vmatmul.mubr.f32.gmra.mxu0 %v2866
  %v3170 = vpop.f32.mrf.mxu0
  %v3171 = vadd.f32 0.0, %v3170
  %v3172 = vpop.f32.mrf.mxu0
  %3173 = vmatprep.mubr.f32.mxu0 0.0
  %3174 = vmatmul.mubr.f32.gmra.mxu0 %v2869
  %v3175 = vpop.f32.mrf.mxu0
  %v3176 = vadd.f32 0.0, %v3175
  %v3177 = vpop.f32.mrf.mxu0
  %3178 = vmatprep.mubr.f32.mxu0 0.0
  %3179 = vmatmul.mubr.f32.gmra.mxu0 %v2872
  %v3180 = vpop.f32.mrf.mxu0
  %v3181 = vadd.f32 0.0, %v3180
  %v3182 = vpop.f32.mrf.mxu0
  %3183 = vmatprep.mubr.f32.mxu0 0.0
  %3184 = vmatmul.mubr.f32.gmra.mxu0 %v2875
  %v3185 = vpop.f32.mrf.mxu0
  %v3186 = vadd.f32 0.0, %v3185
  %v3187 = vpop.f32.mrf.mxu0
  %3188 = vmatprep.mubr.f32.mxu0 0.0
  %3189 = vmatmul.mubr.f32.gmra.mxu0 %v2878
  %v3190 = vpop.f32.mrf.mxu0
  %v3191 = vadd.f32 0.0, %v3190
  %v3192 = vpop.f32.mrf.mxu0
  %3193 = vmatprep.mubr.f32.mxu0 0.0
  %3194 = vmatmul.mubr.f32.gmra.mxu0 %v2881
  %v3195 = vpop.f32.mrf.mxu0
  %v3196 = vadd.f32 0.0, %v3195
  %v3197 = vpop.f32.mrf.mxu0
  %3198 = vmatprep.mubr.f32.mxu0 0.0
  %3199 = vmatmul.mubr.f32.gmra.mxu0 %v2884
  %v3200 = vpop.f32.mrf.mxu0
  %v3201 = vadd.f32 0.0, %v3200
  %v3202 = vpop.f32.mrf.mxu0
  %3203 = vmatprep.mubr.f32.mxu0 0.0
  %3204 = vmatmul.mubr.f32.gmra.mxu0 %v2887
  %v3205 = vpop.f32.mrf.mxu0
  %v3206 = vadd.f32 0.0, %v3205
  %v3207 = vpop.f32.mrf.mxu0
  %3208 = vmatprep.mubr.f32.mxu0 0.0
  %3209 = vmatmul.mubr.f32.gmra.mxu0 %v2890
  %v3210 = vpop.f32.mrf.mxu0
  %v3211 = vadd.f32 0.0, %v3210
  %v3212 = vpop.f32.mrf.mxu0
  %3213 = vmatprep.mubr.f32.mxu0 0.0
  %3214 = vmatmul.mubr.f32.gmra.mxu0 %v2893
  %v3215 = vpop.f32.mrf.mxu0
  %v3216 = vadd.f32 0.0, %v3215
  %v3217 = vpop.f32.mrf.mxu0
  %3218 = vmatprep.mubr.f32.mxu0 0.0
  %3219 = vmatmul.mubr.f32.gmra.mxu0 %v2896
  %v3220 = vpop.f32.mrf.mxu0
  %v3221 = vadd.f32 0.0, %v3220
  %v3222 = vpop.f32.mrf.mxu0
  %3223 = vmatprep.mubr.f32.mxu0 0.0
  %3224 = vmatmul.mubr.f32.gmra.mxu0 %v2899
  %v3225 = vpop.f32.mrf.mxu0
  %v3226 = vadd.f32 0.0, %v3225
  %v3227 = vpop.f32.mrf.mxu0
  %3228 = vmatprep.mubr.f32.mxu0 0.0
  %3229 = vmatmul.mubr.f32.gmra.mxu0 %v2902
  %v3230 = vpop.f32.mrf.mxu0
  %v3231 = vadd.f32 0.0, %v3230
  %v3232 = vpop.f32.mrf.mxu0
  %3233 = vmatprep.mubr.f32.mxu0 0.0
  %3234 = vmatmul.mubr.f32.gmra.mxu0 %v2905
  %v3235 = vpop.f32.mrf.mxu0
  %v3236 = vadd.f32 0.0, %v3235
  %v3237 = vpop.f32.mrf.mxu0
  %3238 = vmatprep.mubr.f32.mxu0 0.0
  %3239 = vmatmul.mubr.f32.gmra.mxu0 %v2908
  %v3240 = vpop.f32.mrf.mxu0
  %v3241 = vadd.f32 0.0, %v3240
  %v3242 = vpop.f32.mrf.mxu0
  %3243 = vmatprep.mubr.f32.mxu0 0.0
  %3244 = vmatmul.mubr.f32.gmra.mxu0 %v2911
  %v3245 = vpop.f32.mrf.mxu0
  %v3246 = vadd.f32 0.0, %v3245
  %v3247 = vpop.f32.mrf.mxu0
  %3248 = vmatprep.mubr.f32.mxu0 0.0
  %3249 = vmatmul.mubr.f32.gmra.mxu0 %v2914
  %v3250 = vpop.f32.mrf.mxu0
  %v3251 = vadd.f32 0.0, %v3250
  %v3252 = vpop.f32.mrf.mxu0
  %3253 = vmatprep.mubr.f32.mxu0 0.0
  %3254 = vmatmul.mubr.f32.gmra.mxu0 %v2917
  %v3255 = vpop.f32.mrf.mxu0
  %v3256 = vadd.f32 0.0, %v3255
  %v3257 = vpop.f32.mrf.mxu0
  %3258 = vmatprep.mubr.f32.mxu0 0.0
  %3259 = vmatmul.mubr.f32.gmra.mxu0 %v2920
  %v3260 = vpop.f32.mrf.mxu0
  %v3261 = vadd.f32 0.0, %v3260
  %v3262 = vpop.f32.mrf.mxu0
  %3263 = vmatprep.mubr.f32.mxu0 0.0
  %3264 = vmatmul.mubr.f32.gmra.mxu0 %v2923
  %v3265 = vpop.f32.mrf.mxu0
  %v3266 = vadd.f32 0.0, %v3265
  %v3267 = vpop.f32.mrf.mxu0
  %3268 = vmatprep.mubr.f32.mxu0 0.0
  %3269 = vmatmul.mubr.f32.gmra.mxu0 %v2926
  %v3270 = vpop.f32.mrf.mxu0
  %v3271 = vadd.f32 0.0, %v3270
  %v3272 = vpop.f32.mrf.mxu0
  %3273 = vmatprep.mubr.f32.mxu0 0.0
  %3274 = vmatmul.mubr.f32.gmra.mxu0 %v2929
  %v3275 = vpop.f32.mrf.mxu0
  %v3276 = vadd.f32 0.0, %v3275
  %v3277 = vpop.f32.mrf.mxu0
  %3278 = vmatprep.mubr.f32.mxu0 0.0
  %3279 = vmatmul.mubr.f32.gmra.mxu0 %v2932
  %v3280 = vpop.f32.mrf.mxu0
  %v3281 = vadd.f32 0.0, %v3280
  %v3282 = vpop.f32.mrf.mxu0
  %3283 = vmatprep.mubr.f32.mxu0 0.0
  %3284 = vmatmul.mubr.f32.gmra.mxu0 %v2935
  %v3285 = vpop.f32.mrf.mxu0
  %v3286 = vadd.f32 0.0, %v3285
  %v3287 = vpop.f32.mrf.mxu0
  %3288 = vmatprep.mubr.f32.mxu0 0.0
  %3289 = vmatmul.mubr.f32.gmra.mxu0 %v2938
  %v3290 = vpop.f32.mrf.mxu0
  %v3291 = vadd.f32 0.0, %v3290
  %v3292 = vpop.f32.mrf.mxu0
  %3293 = vmatprep.mubr.f32.mxu0 0.0
  %3294 = vmatmul.mubr.f32.gmra.mxu0 %v2941
  %v3295 = vpop.f32.mrf.mxu0
  %v3296 = vadd.f32 0.0, %v3295
  %v3297 = vpop.f32.mrf.mxu0
  %3298 = vmatprep.mubr.f32.mxu0 0.0
  %3299 = vmatmul.mubr.f32.gmra.mxu0 %v2944
  %v3300 = vpop.f32.mrf.mxu0
  %v3301 = vadd.f32 0.0, %v3300
  %v3302 = vpop.f32.mrf.mxu0
  %3303 = vmatprep.mubr.f32.mxu0 0.0
  %3304 = vmatmul.mubr.f32.gmra.mxu0 %v2947
  %v3305 = vpop.f32.mrf.mxu0
  %v3306 = vadd.f32 0.0, %v3305
  %v3307 = vpop.f32.mrf.mxu0
  %3308 = vmatprep.mubr.f32.mxu0 0.0
  %3309 = vmatmul.mubr.f32.gmra.mxu0 %v2950
  %v3310 = vpop.f32.mrf.mxu0
  %v3311 = vadd.f32 0.0, %v3310
  %v3312 = vpop.f32.mrf.mxu0
  %3313 = vmatprep.mubr.f32.mxu0 0.0
  %3314 = vmatmul.mubr.f32.gmra.mxu0 %v2953
  %v3315 = vpop.f32.mrf.mxu0
  %v3316 = vadd.f32 0.0, %v3315
  %v3317 = vpop.f32.mrf.mxu0
  %3318 = vmatprep.mubr.f32.mxu0 0.0
  %3319 = vmatmul.mubr.f32.gmra.mxu0 %v2956
  %v3320 = vpop.f32.mrf.mxu0
  %v3321 = vadd.f32 0.0, %v3320
  %v3322 = vpop.f32.mrf.mxu0
  %3323 = vmatprep.mubr.f32.mxu0 0.0
  %3324 = vmatmul.mubr.f32.gmra.mxu0 %v2959
  %v3325 = vpop.f32.mrf.mxu0
  %v3326 = vadd.f32 0.0, %v3325
  %v3327 = vpop.f32.mrf.mxu0
  %3328 = vmatprep.mubr.f32.mxu0 0.0
  %3329 = vmatmul.mubr.f32.gmra.mxu0 %v2962
  %v3330 = vpop.f32.mrf.mxu0
  %v3331 = vadd.f32 0.0, %v3330
  %v3332 = vpop.f32.mrf.mxu0
  %3333 = vmatprep.mubr.f32.mxu0 0.0
  %3334 = vmatmul.mubr.f32.gmra.mxu0 %v2965
  %v3335 = vpop.f32.mrf.mxu0
  %v3336 = vadd.f32 0.0, %v3335
  %v3337 = vpop.f32.mrf.mxu0
  %3338 = vmatprep.mubr.f32.mxu0 0.0
  %3339 = vmatmul.mubr.f32.gmra.mxu0 %v2968
  %v3340 = vpop.f32.mrf.mxu0
  %v3341 = vadd.f32 0.0, %v3340
  %v3342 = vpop.f32.mrf.mxu0
  %3343 = vmatprep.mubr.f32.mxu0 0.0
  %3344 = vmatmul.mubr.f32.gmra.mxu0 %v2971
  %v3345 = vpop.f32.mrf.mxu0
  %v3346 = vadd.f32 0.0, %v3345
  %v3347 = vpop.f32.mrf.mxu0
  %3348 = vmatprep.mubr.f32.mxu0 0.0
  %3349 = vmatmul.mubr.f32.gmra.mxu0 %v2974
  %v3350 = vpop.f32.mrf.mxu0
  %v3351 = vadd.f32 0.0, %v3350
  %v3352 = vpop.f32.mrf.mxu0
  %3353 = vmatprep.mubr.f32.mxu0 0.0
  %3354 = vmatmul.mubr.f32.gmra.mxu0 %v2977
  %v3355 = vpop.f32.mrf.mxu0
  %v3356 = vadd.f32 0.0, %v3355
  %v3357 = vpop.f32.mrf.mxu0
  %3358 = vmatprep.mubr.f32.mxu0 0.0
  %3359 = vmatmul.mubr.f32.gmra.mxu0 %v2980
  %v3360 = vpop.f32.mrf.mxu0
  %v3361 = vadd.f32 0.0, %v3360
  %v3362 = vpop.f32.mrf.mxu0
  %3363 = vmatprep.mubr.f32.mxu0 0.0
  %3364 = vmatmul.mubr.f32.gmra.mxu0 %v2983
  %v3365 = vpop.f32.mrf.mxu0
  %v3366 = vadd.f32 0.0, %v3365
  %v3367 = vpop.f32.mrf.mxu0
  %3368 = vmatprep.mubr.f32.mxu0 0.0
  %3369 = vmatmul.mubr.f32.gmra.mxu0 %v2986
  %v3370 = vpop.f32.mrf.mxu0
  %v3371 = vadd.f32 0.0, %v3370
  %v3372 = vpop.f32.mrf.mxu0
  %3373 = vmatprep.mubr.f32.mxu0 0.0
  %3374 = vmatmul.mubr.f32.gmra.mxu0 %v2989
  %v3375 = vpop.f32.mrf.mxu0
  %v3376 = vadd.f32 0.0, %v3375
  %v3377 = vpop.f32.mrf.mxu0
  %3378 = vdwg.mxu0
  %v3379 = vadd.f32 %v2669, %v3061
  %v3380 = vadd.f32 %v2670, %v3066
  %v3381 = vadd.f32 %v2671, %v3071
  %v3382 = vadd.f32 %v2672, %v3076
  %v3383 = vadd.f32 %v2673, %v3081
  %v3384 = vadd.f32 %v2674, %v3086
  %v3385 = vadd.f32 %v2675, %v3091
  %v3386 = vadd.f32 %v2676, %v3096
  %v3387 = vadd.f32 %v2677, %v3101
  %v3388 = vadd.f32 %v2678, %v3106
  %v3389 = vadd.f32 %v2679, %v3111
  %v3390 = vadd.f32 %v2680, %v3116
  %v3391 = vadd.f32 %v2681, %v3121
  %v3392 = vadd.f32 %v2682, %v3126
  %v3393 = vadd.f32 %v2683, %v3131
  %v3394 = vadd.f32 %v2684, %v3136
  %v3395 = vadd.f32 %v2685, %v3141
  %v3396 = vadd.f32 %v2686, %v3146
  %v3397 = vadd.f32 %v2687, %v3151
  %v3398 = vadd.f32 %v2688, %v3156
  %v3399 = vadd.f32 %v2689, %v3161
  %v3400 = vadd.f32 %v2690, %v3166
  %v3401 = vadd.f32 %v2691, %v3171
  %v3402 = vadd.f32 %v2692, %v3176
  %v3403 = vadd.f32 %v2693, %v3181
  %v3404 = vadd.f32 %v2694, %v3186
  %v3405 = vadd.f32 %v2695, %v3191
  %v3406 = vadd.f32 %v2696, %v3196
  %v3407 = vadd.f32 %v2697, %v3201
  %v3408 = vadd.f32 %v2698, %v3206
  %v3409 = vadd.f32 %v2699, %v3211
  %v3410 = vadd.f32 %v2700, %v3216
  %v3411 = vadd.f32 %v2701, %v3221
  %v3412 = vadd.f32 %v2702, %v3226
  %v3413 = vadd.f32 %v2703, %v3231
  %v3414 = vadd.f32 %v2704, %v3236
  %v3415 = vadd.f32 %v2705, %v3241
  %v3416 = vadd.f32 %v2706, %v3246
  %v3417 = vadd.f32 %v2707, %v3251
  %v3418 = vadd.f32 %v2708, %v3256
  %v3419 = vadd.f32 %v2709, %v3261
  %v3420 = vadd.f32 %v2710, %v3266
  %v3421 = vadd.f32 %v2711, %v3271
  %v3422 = vadd.f32 %v2712, %v3276
  %v3423 = vadd.f32 %v2713, %v3281
  %v3424 = vadd.f32 %v2714, %v3286
  %v3425 = vadd.f32 %v2715, %v3291
  %v3426 = vadd.f32 %v2716, %v3296
  %v3427 = vadd.f32 %v2717, %v3301
  %v3428 = vadd.f32 %v2718, %v3306
  %v3429 = vadd.f32 %v2719, %v3311
  %v3430 = vadd.f32 %v2720, %v3316
  %v3431 = vadd.f32 %v2721, %v3321
  %v3432 = vadd.f32 %v2722, %v3326
  %v3433 = vadd.f32 %v2723, %v3331
  %v3434 = vadd.f32 %v2724, %v3336
  %v3435 = vadd.f32 %v2725, %v3341
  %v3436 = vadd.f32 %v2726, %v3346
  %v3437 = vadd.f32 %v2727, %v3351
  %v3438 = vadd.f32 %v2728, %v3356
  %v3439 = vadd.f32 %v2729, %v3361
  %v3440 = vadd.f32 %v2730, %v3366
  %v3441 = vadd.f32 %v2731, %v3371
  %v3442 = vadd.f32 %v2732, %v3376
  %v3443 = vld [vmem:[%s1 + $0x2] sm:$0xff]
  %v3444 = vld [vmem:[%s1 + $0xa] sm:$0xff]
  %v3445 = vld [vmem:[%s1 + $0x1a] sm:$0xff]
  %v3446 = vld [vmem:[%s1 + $0x22] sm:$0xff]
  %v3447 = vld [vmem:[%s1 + $0x32] sm:$0xff]
  %v3448 = vld [vmem:[%s1 + $0x3a] sm:$0xff]
  %v3449 = vld [vmem:[%s1 + $0x4a] sm:$0xff]
  %v3450 = vld [vmem:[%s1 + $0x52] sm:$0xff]
  %v3451 = vld [vmem:[%s1 + $0x62] sm:$0xff]
  %v3452 = vld [vmem:[%s1 + $0x6a] sm:$0xff]
  %v3453 = vld [vmem:[%s1 + $0x7a] sm:$0xff]
  %v3454 = vld [vmem:[%s1 + $0x82] sm:$0xff]
  %v3455 = vld [vmem:[%s1 + $0x92] sm:$0xff]
  %v3456 = vld [vmem:[%s1 + $0x9a] sm:$0xff]
  %v3457 = vld [vmem:[%s1 + $0xaa] sm:$0xff]
  %v3458 = vld [vmem:[%s1 + $0xb2] sm:$0xff]
  %v3459 = vld [vmem:[%s1 + $0xc2] sm:$0xff]
  %v3460 = vld [vmem:[%s1 + $0xca] sm:$0xff]
  %v3461 = vld [vmem:[%s1 + $0xda] sm:$0xff]
  %v3462 = vld [vmem:[%s1 + $0xe2] sm:$0xff]
  %v3463 = vld [vmem:[%s1 + $0xf2] sm:$0xff]
  %v3464 = vld [vmem:[%s1 + $0xfa] sm:$0xff]
  %v3465 = vld [vmem:[%s1 + $0x10a] sm:$0xff]
  %v3466 = vld [vmem:[%s1 + $0x112] sm:$0xff]
  %v3467 = vld [vmem:[%s1 + $0x122] sm:$0xff]
  %v3468 = vld [vmem:[%s1 + $0x12a] sm:$0xff]
  %v3469 = vld [vmem:[%s1 + $0x13a] sm:$0xff]
  %v3470 = vld [vmem:[%s1 + $0x142] sm:$0xff]
  %v3471 = vld [vmem:[%s1 + $0x152] sm:$0xff]
  %v3472 = vld [vmem:[%s1 + $0x15a] sm:$0xff]
  %v3473 = vld [vmem:[%s1 + $0x16a] sm:$0xff]
  %v3474 = vld [vmem:[%s1 + $0x172] sm:$0xff]
  %v3475 = vld [vmem:[%s1 + $0x182] sm:$0xff]
  %v3476 = vld [vmem:[%s1 + $0x18a] sm:$0xff]
  %v3477 = vld [vmem:[%s1 + $0x19a] sm:$0xff]
  %v3478 = vld [vmem:[%s1 + $0x1a2] sm:$0xff]
  %v3479 = vld [vmem:[%s1 + $0x1b2] sm:$0xff]
  %v3480 = vld [vmem:[%s1 + $0x1ba] sm:$0xff]
  %v3481 = vld [vmem:[%s1 + $0x1ca] sm:$0xff]
  %v3482 = vld [vmem:[%s1 + $0x1d2] sm:$0xff]
  %v3483 = vld [vmem:[%s1 + $0x1e2] sm:$0xff]
  %v3484 = vld [vmem:[%s1 + $0x1ea] sm:$0xff]
  %v3485 = vld [vmem:[%s1 + $0x1fa] sm:$0xff]
  %v3486 = vld [vmem:[%s1 + $0x202] sm:$0xff]
  %v3487 = vld [vmem:[%s1 + $0x212] sm:$0xff]
  %v3488 = vld [vmem:[%s1 + $0x21a] sm:$0xff]
  %v3489 = vld [vmem:[%s1 + $0x22a] sm:$0xff]
  %v3490 = vld [vmem:[%s1 + $0x232] sm:$0xff]
  %v3491 = vld [vmem:[%s1 + $0x242] sm:$0xff]
  %v3492 = vld [vmem:[%s1 + $0x24a] sm:$0xff]
  %v3493 = vld [vmem:[%s1 + $0x25a] sm:$0xff]
  %v3494 = vld [vmem:[%s1 + $0x262] sm:$0xff]
  %v3495 = vld [vmem:[%s1 + $0x272] sm:$0xff]
  %v3496 = vld [vmem:[%s1 + $0x27a] sm:$0xff]
  %v3497 = vld [vmem:[%s1 + $0x28a] sm:$0xff]
  %v3498 = vld [vmem:[%s1 + $0x292] sm:$0xff]
  %v3499 = vld [vmem:[%s1 + $0x2a2] sm:$0xff]
  %v3500 = vld [vmem:[%s1 + $0x2aa] sm:$0xff]
  %v3501 = vld [vmem:[%s1 + $0x2ba] sm:$0xff]
  %v3502 = vld [vmem:[%s1 + $0x2c2] sm:$0xff]
  %v3503 = vld [vmem:[%s1 + $0x2d2] sm:$0xff]
  %v3504 = vld [vmem:[%s1 + $0x2da] sm:$0xff]
  %v3505 = vld [vmem:[%s1 + $0x2ea] sm:$0xff]
  %v3506 = vld [vmem:[%s1 + $0x2f2] sm:$0xff]
  %s3507 = scalar_lea.vmem %s3, 20
  %v3508 = vld [vmem:[%s3507] sm:$0xf]
  %v3510 = vsel %vm151, %v3443, 0
  %v3513 = vsel %vm151, %v3444, 0
  %v3516 = vsel %vm151, %v3445, 0
  %v3519 = vsel %vm151, %v3446, 0
  %v3522 = vsel %vm151, %v3447, 0
  %v3525 = vsel %vm151, %v3448, 0
  %v3528 = vsel %vm151, %v3449, 0
  %v3531 = vsel %vm151, %v3450, 0
  %v3534 = vsel %vm151, %v3451, 0
  %v3537 = vsel %vm151, %v3452, 0
  %v3540 = vsel %vm151, %v3453, 0
  %v3543 = vsel %vm151, %v3454, 0
  %v3546 = vsel %vm151, %v3455, 0
  %v3549 = vsel %vm151, %v3456, 0
  %v3552 = vsel %vm151, %v3457, 0
  %v3555 = vsel %vm151, %v3458, 0
  %v3558 = vsel %vm151, %v3459, 0
  %v3561 = vsel %vm151, %v3460, 0
  %v3564 = vsel %vm151, %v3461, 0
  %v3567 = vsel %vm151, %v3462, 0
  %v3570 = vsel %vm151, %v3463, 0
  %v3573 = vsel %vm151, %v3464, 0
  %v3576 = vsel %vm151, %v3465, 0
  %v3579 = vsel %vm151, %v3466, 0
  %v3582 = vsel %vm151, %v3467, 0
  %v3585 = vsel %vm151, %v3468, 0
  %v3588 = vsel %vm151, %v3469, 0
  %v3591 = vsel %vm151, %v3470, 0
  %v3594 = vsel %vm151, %v3471, 0
  %v3597 = vsel %vm151, %v3472, 0
  %v3600 = vsel %vm151, %v3473, 0
  %v3603 = vsel %vm151, %v3474, 0
  %v3606 = vsel %vm151, %v3475, 0
  %v3609 = vsel %vm151, %v3476, 0
  %v3612 = vsel %vm151, %v3477, 0
  %v3615 = vsel %vm151, %v3478, 0
  %v3618 = vsel %vm151, %v3479, 0
  %v3621 = vsel %vm151, %v3480, 0
  %v3624 = vsel %vm151, %v3481, 0
  %v3627 = vsel %vm151, %v3482, 0
  %v3630 = vsel %vm151, %v3483, 0
  %v3633 = vsel %vm151, %v3484, 0
  %v3636 = vsel %vm151, %v3485, 0
  %v3639 = vsel %vm151, %v3486, 0
  %v3642 = vsel %vm151, %v3487, 0
  %v3645 = vsel %vm151, %v3488, 0
  %v3648 = vsel %vm151, %v3489, 0
  %v3651 = vsel %vm151, %v3490, 0
  %v3654 = vsel %vm151, %v3491, 0
  %v3657 = vsel %vm151, %v3492, 0
  %v3660 = vsel %vm151, %v3493, 0
  %v3663 = vsel %vm151, %v3494, 0
  %v3666 = vsel %vm151, %v3495, 0
  %v3669 = vsel %vm151, %v3496, 0
  %v3672 = vsel %vm151, %v3497, 0
  %v3675 = vsel %vm151, %v3498, 0
  %v3678 = vsel %vm151, %v3499, 0
  %v3681 = vsel %vm151, %v3500, 0
  %v3684 = vsel %vm151, %v3501, 0
  %v3687 = vsel %vm151, %v3502, 0
  %v3690 = vsel %vm151, %v3503, 0
  %v3693 = vsel %vm151, %v3504, 0
  %v3696 = vsel %vm151, %v3505, 0
  %v3699 = vsel %vm151, %v3506, 0
  %v3702 = vsel %vm344, %v3508, 0
  %3704 = vmatprep.subr.mxu0 0.0
  %3705 = vmatpush1.msra.mxu0 0.0
  %3706 = vmatprep.subr.mxu0 0.0
  %3707 = vmatpush1.msra.mxu0 0.0
  %3708 = vmatprep.subr.mxu0 0.0
  %3709 = vmatpush1.msra.mxu0 0.0
  %3710 = vmatprep.subr.mxu0 0.0
  %3711 = vmatpush1.msra.mxu0 0.0
  %3712 = vmatprep.subr.mxu0 0.0
  %3713 = vmatpush1.msra.mxu0 0.0
  %3714 = vmatprep.subr.mxu0 0.0
  %3715 = vmatpush1.msra.mxu0 0.0
  %3716 = vmatprep.subr.mxu0 0.0
  %3717 = vmatpush1.msra.mxu0 0.0
  %3718 = vmatprep.subr.mxu0 0.0
  %3719 = vmatpush1.msra.mxu0 0.0
  %3720 = vmatprep.subr.mxu0 0.0
  %3721 = vmatpush1.msra.mxu0 0.0
  %3722 = vmatprep.subr.mxu0 0.0
  %3723 = vmatpush1.msra.mxu0 0.0
  %3724 = vmatprep.subr.mxu0 0.0
  %3725 = vmatpush1.msra.mxu0 0.0
  %3726 = vmatprep.subr.mxu0 0.0
  %3727 = vmatpush1.msra.mxu0 0.0
  %3728 = vmatprep.subr.mxu0 0.0
  %3729 = vmatpush1.msra.mxu0 0.0
  %3730 = vmatprep.subr.mxu0 0.0
  %3731 = vmatpush1.msra.mxu0 0.0
  %3732 = vmatprep.subr.mxu0 0.0
  %3733 = vmatpush1.msra.mxu0 0.0
  %3734 = vmatprep.subr.mxu0 0.0
  %3735 = vmatpush1.msra.mxu0 %v3702
  %3736 = vmatprep.subr.mxu0 0.0
  %3737 = vmatpush2.msra.mxu0 0.0
  %3738 = vmatprep.subr.mxu0 0.0
  %3739 = vmatpush2.msra.mxu0 0.0
  %3740 = vmatprep.subr.mxu0 0.0
  %3741 = vmatpush2.msra.mxu0 0.0
  %3742 = vmatprep.subr.mxu0 0.0
  %3743 = vmatpush2.msra.mxu0 0.0
  %3744 = vmatprep.subr.mxu0 0.0
  %3745 = vmatpush2.msra.mxu0 0.0
  %3746 = vmatprep.subr.mxu0 0.0
  %3747 = vmatpush2.msra.mxu0 0.0
  %3748 = vmatprep.subr.mxu0 0.0
  %3749 = vmatpush2.msra.mxu0 0.0
  %3750 = vmatprep.subr.mxu0 0.0
  %3751 = vmatpush2.msra.mxu0 0.0
  %3752 = vmatprep.subr.mxu0 0.0
  %3753 = vmatpush2.msra.mxu0 0.0
  %3754 = vmatprep.subr.mxu0 0.0
  %3755 = vmatpush2.msra.mxu0 0.0
  %3756 = vmatprep.subr.mxu0 0.0
  %3757 = vmatpush2.msra.mxu0 0.0
  %3758 = vmatprep.subr.mxu0 0.0
  %3759 = vmatpush2.msra.mxu0 0.0
  %3760 = vmatprep.subr.mxu0 0.0
  %3761 = vmatpush2.msra.mxu0 0.0
  %3762 = vmatprep.subr.mxu0 0.0
  %3763 = vmatpush2.msra.mxu0 0.0
  %3764 = vmatprep.subr.mxu0 0.0
  %3765 = vmatpush2.msra.mxu0 0.0
  %3766 = vmatprep.subr.mxu0 0.0
  %3767 = vmatpush2.msra.mxu0 0.0
  %3768 = vmatprep.mubr.f32.mxu0 0.0
  %3769 = vmatmul.mubr.f32.gmra.mxu0 %v3510
  %v3770 = vpop.f32.mrf.mxu0
  %v3771 = vadd.f32 0.0, %v3770
  %v3772 = vpop.f32.mrf.mxu0
  %3773 = vmatprep.mubr.f32.mxu0 0.0
  %3774 = vmatmul.mubr.f32.gmra.mxu0 %v3513
  %v3775 = vpop.f32.mrf.mxu0
  %v3776 = vadd.f32 0.0, %v3775
  %v3777 = vpop.f32.mrf.mxu0
  %3778 = vmatprep.mubr.f32.mxu0 0.0
  %3779 = vmatmul.mubr.f32.gmra.mxu0 %v3516
  %v3780 = vpop.f32.mrf.mxu0
  %v3781 = vadd.f32 0.0, %v3780
  %v3782 = vpop.f32.mrf.mxu0
  %3783 = vmatprep.mubr.f32.mxu0 0.0
  %3784 = vmatmul.mubr.f32.gmra.mxu0 %v3519
  %v3785 = vpop.f32.mrf.mxu0
  %v3786 = vadd.f32 0.0, %v3785
  %v3787 = vpop.f32.mrf.mxu0
  %3788 = vmatprep.mubr.f32.mxu0 0.0
  %3789 = vmatmul.mubr.f32.gmra.mxu0 %v3522
  %v3790 = vpop.f32.mrf.mxu0
  %v3791 = vadd.f32 0.0, %v3790
  %v3792 = vpop.f32.mrf.mxu0
  %3793 = vmatprep.mubr.f32.mxu0 0.0
  %3794 = vmatmul.mubr.f32.gmra.mxu0 %v3525
  %v3795 = vpop.f32.mrf.mxu0
  %v3796 = vadd.f32 0.0, %v3795
  %v3797 = vpop.f32.mrf.mxu0
  %3798 = vmatprep.mubr.f32.mxu0 0.0
  %3799 = vmatmul.mubr.f32.gmra.mxu0 %v3528
  %v3800 = vpop.f32.mrf.mxu0
  %v3801 = vadd.f32 0.0, %v3800
  %v3802 = vpop.f32.mrf.mxu0
  %3803 = vmatprep.mubr.f32.mxu0 0.0
  %3804 = vmatmul.mubr.f32.gmra.mxu0 %v3531
  %v3805 = vpop.f32.mrf.mxu0
  %v3806 = vadd.f32 0.0, %v3805
  %v3807 = vpop.f32.mrf.mxu0
  %3808 = vmatprep.mubr.f32.mxu0 0.0
  %3809 = vmatmul.mubr.f32.gmra.mxu0 %v3534
  %v3810 = vpop.f32.mrf.mxu0
  %v3811 = vadd.f32 0.0, %v3810
  %v3812 = vpop.f32.mrf.mxu0
  %3813 = vmatprep.mubr.f32.mxu0 0.0
  %3814 = vmatmul.mubr.f32.gmra.mxu0 %v3537
  %v3815 = vpop.f32.mrf.mxu0
  %v3816 = vadd.f32 0.0, %v3815
  %v3817 = vpop.f32.mrf.mxu0
  %3818 = vmatprep.mubr.f32.mxu0 0.0
  %3819 = vmatmul.mubr.f32.gmra.mxu0 %v3540
  %v3820 = vpop.f32.mrf.mxu0
  %v3821 = vadd.f32 0.0, %v3820
  %v3822 = vpop.f32.mrf.mxu0
  %3823 = vmatprep.mubr.f32.mxu0 0.0
  %3824 = vmatmul.mubr.f32.gmra.mxu0 %v3543
  %v3825 = vpop.f32.mrf.mxu0
  %v3826 = vadd.f32 0.0, %v3825
  %v3827 = vpop.f32.mrf.mxu0
  %3828 = vmatprep.mubr.f32.mxu0 0.0
  %3829 = vmatmul.mubr.f32.gmra.mxu0 %v3546
  %v3830 = vpop.f32.mrf.mxu0
  %v3831 = vadd.f32 0.0, %v3830
  %v3832 = vpop.f32.mrf.mxu0
  %3833 = vmatprep.mubr.f32.mxu0 0.0
  %3834 = vmatmul.mubr.f32.gmra.mxu0 %v3549
  %v3835 = vpop.f32.mrf.mxu0
  %v3836 = vadd.f32 0.0, %v3835
  %v3837 = vpop.f32.mrf.mxu0
  %3838 = vmatprep.mubr.f32.mxu0 0.0
  %3839 = vmatmul.mubr.f32.gmra.mxu0 %v3552
  %v3840 = vpop.f32.mrf.mxu0
  %v3841 = vadd.f32 0.0, %v3840
  %v3842 = vpop.f32.mrf.mxu0
  %3843 = vmatprep.mubr.f32.mxu0 0.0
  %3844 = vmatmul.mubr.f32.gmra.mxu0 %v3555
  %v3845 = vpop.f32.mrf.mxu0
  %v3846 = vadd.f32 0.0, %v3845
  %v3847 = vpop.f32.mrf.mxu0
  %3848 = vmatprep.mubr.f32.mxu0 0.0
  %3849 = vmatmul.mubr.f32.gmra.mxu0 %v3558
  %v3850 = vpop.f32.mrf.mxu0
  %v3851 = vadd.f32 0.0, %v3850
  %v3852 = vpop.f32.mrf.mxu0
  %3853 = vmatprep.mubr.f32.mxu0 0.0
  %3854 = vmatmul.mubr.f32.gmra.mxu0 %v3561
  %v3855 = vpop.f32.mrf.mxu0
  %v3856 = vadd.f32 0.0, %v3855
  %v3857 = vpop.f32.mrf.mxu0
  %3858 = vmatprep.mubr.f32.mxu0 0.0
  %3859 = vmatmul.mubr.f32.gmra.mxu0 %v3564
  %v3860 = vpop.f32.mrf.mxu0
  %v3861 = vadd.f32 0.0, %v3860
  %v3862 = vpop.f32.mrf.mxu0
  %3863 = vmatprep.mubr.f32.mxu0 0.0
  %3864 = vmatmul.mubr.f32.gmra.mxu0 %v3567
  %v3865 = vpop.f32.mrf.mxu0
  %v3866 = vadd.f32 0.0, %v3865
  %v3867 = vpop.f32.mrf.mxu0
  %3868 = vmatprep.mubr.f32.mxu0 0.0
  %3869 = vmatmul.mubr.f32.gmra.mxu0 %v3570
  %v3870 = vpop.f32.mrf.mxu0
  %v3871 = vadd.f32 0.0, %v3870
  %v3872 = vpop.f32.mrf.mxu0
  %3873 = vmatprep.mubr.f32.mxu0 0.0
  %3874 = vmatmul.mubr.f32.gmra.mxu0 %v3573
  %v3875 = vpop.f32.mrf.mxu0
  %v3876 = vadd.f32 0.0, %v3875
  %v3877 = vpop.f32.mrf.mxu0
  %3878 = vmatprep.mubr.f32.mxu0 0.0
  %3879 = vmatmul.mubr.f32.gmra.mxu0 %v3576
  %v3880 = vpop.f32.mrf.mxu0
  %v3881 = vadd.f32 0.0, %v3880
  %v3882 = vpop.f32.mrf.mxu0
  %3883 = vmatprep.mubr.f32.mxu0 0.0
  %3884 = vmatmul.mubr.f32.gmra.mxu0 %v3579
  %v3885 = vpop.f32.mrf.mxu0
  %v3886 = vadd.f32 0.0, %v3885
  %v3887 = vpop.f32.mrf.mxu0
  %3888 = vmatprep.mubr.f32.mxu0 0.0
  %3889 = vmatmul.mubr.f32.gmra.mxu0 %v3582
  %v3890 = vpop.f32.mrf.mxu0
  %v3891 = vadd.f32 0.0, %v3890
  %v3892 = vpop.f32.mrf.mxu0
  %3893 = vmatprep.mubr.f32.mxu0 0.0
  %3894 = vmatmul.mubr.f32.gmra.mxu0 %v3585
  %v3895 = vpop.f32.mrf.mxu0
  %v3896 = vadd.f32 0.0, %v3895
  %v3897 = vpop.f32.mrf.mxu0
  %3898 = vmatprep.mubr.f32.mxu0 0.0
  %3899 = vmatmul.mubr.f32.gmra.mxu0 %v3588
  %v3900 = vpop.f32.mrf.mxu0
  %v3901 = vadd.f32 0.0, %v3900
  %v3902 = vpop.f32.mrf.mxu0
  %3903 = vmatprep.mubr.f32.mxu0 0.0
  %3904 = vmatmul.mubr.f32.gmra.mxu0 %v3591
  %v3905 = vpop.f32.mrf.mxu0
  %v3906 = vadd.f32 0.0, %v3905
  %v3907 = vpop.f32.mrf.mxu0
  %3908 = vmatprep.mubr.f32.mxu0 0.0
  %3909 = vmatmul.mubr.f32.gmra.mxu0 %v3594
  %v3910 = vpop.f32.mrf.mxu0
  %v3911 = vadd.f32 0.0, %v3910
  %v3912 = vpop.f32.mrf.mxu0
  %3913 = vmatprep.mubr.f32.mxu0 0.0
  %3914 = vmatmul.mubr.f32.gmra.mxu0 %v3597
  %v3915 = vpop.f32.mrf.mxu0
  %v3916 = vadd.f32 0.0, %v3915
  %v3917 = vpop.f32.mrf.mxu0
  %3918 = vmatprep.mubr.f32.mxu0 0.0
  %3919 = vmatmul.mubr.f32.gmra.mxu0 %v3600
  %v3920 = vpop.f32.mrf.mxu0
  %v3921 = vadd.f32 0.0, %v3920
  %v3922 = vpop.f32.mrf.mxu0
  %3923 = vmatprep.mubr.f32.mxu0 0.0
  %3924 = vmatmul.mubr.f32.gmra.mxu0 %v3603
  %v3925 = vpop.f32.mrf.mxu0
  %v3926 = vadd.f32 0.0, %v3925
  %v3927 = vpop.f32.mrf.mxu0
  %3928 = vmatprep.mubr.f32.mxu0 0.0
  %3929 = vmatmul.mubr.f32.gmra.mxu0 %v3606
  %v3930 = vpop.f32.mrf.mxu0
  %v3931 = vadd.f32 0.0, %v3930
  %v3932 = vpop.f32.mrf.mxu0
  %3933 = vmatprep.mubr.f32.mxu0 0.0
  %3934 = vmatmul.mubr.f32.gmra.mxu0 %v3609
  %v3935 = vpop.f32.mrf.mxu0
  %v3936 = vadd.f32 0.0, %v3935
  %v3937 = vpop.f32.mrf.mxu0
  %3938 = vmatprep.mubr.f32.mxu0 0.0
  %3939 = vmatmul.mubr.f32.gmra.mxu0 %v3612
  %v3940 = vpop.f32.mrf.mxu0
  %v3941 = vadd.f32 0.0, %v3940
  %v3942 = vpop.f32.mrf.mxu0
  %3943 = vmatprep.mubr.f32.mxu0 0.0
  %3944 = vmatmul.mubr.f32.gmra.mxu0 %v3615
  %v3945 = vpop.f32.mrf.mxu0
  %v3946 = vadd.f32 0.0, %v3945
  %v3947 = vpop.f32.mrf.mxu0
  %3948 = vmatprep.mubr.f32.mxu0 0.0
  %3949 = vmatmul.mubr.f32.gmra.mxu0 %v3618
  %v3950 = vpop.f32.mrf.mxu0
  %v3951 = vadd.f32 0.0, %v3950
  %v3952 = vpop.f32.mrf.mxu0
  %3953 = vmatprep.mubr.f32.mxu0 0.0
  %3954 = vmatmul.mubr.f32.gmra.mxu0 %v3621
  %v3955 = vpop.f32.mrf.mxu0
  %v3956 = vadd.f32 0.0, %v3955
  %v3957 = vpop.f32.mrf.mxu0
  %3958 = vmatprep.mubr.f32.mxu0 0.0
  %3959 = vmatmul.mubr.f32.gmra.mxu0 %v3624
  %v3960 = vpop.f32.mrf.mxu0
  %v3961 = vadd.f32 0.0, %v3960
  %v3962 = vpop.f32.mrf.mxu0
  %3963 = vmatprep.mubr.f32.mxu0 0.0
  %3964 = vmatmul.mubr.f32.gmra.mxu0 %v3627
  %v3965 = vpop.f32.mrf.mxu0
  %v3966 = vadd.f32 0.0, %v3965
  %v3967 = vpop.f32.mrf.mxu0
  %3968 = vmatprep.mubr.f32.mxu0 0.0
  %3969 = vmatmul.mubr.f32.gmra.mxu0 %v3630
  %v3970 = vpop.f32.mrf.mxu0
  %v3971 = vadd.f32 0.0, %v3970
  %v3972 = vpop.f32.mrf.mxu0
  %3973 = vmatprep.mubr.f32.mxu0 0.0
  %3974 = vmatmul.mubr.f32.gmra.mxu0 %v3633
  %v3975 = vpop.f32.mrf.mxu0
  %v3976 = vadd.f32 0.0, %v3975
  %v3977 = vpop.f32.mrf.mxu0
  %3978 = vmatprep.mubr.f32.mxu0 0.0
  %3979 = vmatmul.mubr.f32.gmra.mxu0 %v3636
  %v3980 = vpop.f32.mrf.mxu0
  %v3981 = vadd.f32 0.0, %v3980
  %v3982 = vpop.f32.mrf.mxu0
  %3983 = vmatprep.mubr.f32.mxu0 0.0
  %3984 = vmatmul.mubr.f32.gmra.mxu0 %v3639
  %v3985 = vpop.f32.mrf.mxu0
  %v3986 = vadd.f32 0.0, %v3985
  %v3987 = vpop.f32.mrf.mxu0
  %3988 = vmatprep.mubr.f32.mxu0 0.0
  %3989 = vmatmul.mubr.f32.gmra.mxu0 %v3642
  %v3990 = vpop.f32.mrf.mxu0
  %v3991 = vadd.f32 0.0, %v3990
  %v3992 = vpop.f32.mrf.mxu0
  %3993 = vmatprep.mubr.f32.mxu0 0.0
  %3994 = vmatmul.mubr.f32.gmra.mxu0 %v3645
  %v3995 = vpop.f32.mrf.mxu0
  %v3996 = vadd.f32 0.0, %v3995
  %v3997 = vpop.f32.mrf.mxu0
  %3998 = vmatprep.mubr.f32.mxu0 0.0
  %3999 = vmatmul.mubr.f32.gmra.mxu0 %v3648
  %v4000 = vpop.f32.mrf.mxu0
  %v4001 = vadd.f32 0.0, %v4000
  %v4002 = vpop.f32.mrf.mxu0
  %4003 = vmatprep.mubr.f32.mxu0 0.0
  %4004 = vmatmul.mubr.f32.gmra.mxu0 %v3651
  %v4005 = vpop.f32.mrf.mxu0
  %v4006 = vadd.f32 0.0, %v4005
  %v4007 = vpop.f32.mrf.mxu0
  %4008 = vmatprep.mubr.f32.mxu0 0.0
  %4009 = vmatmul.mubr.f32.gmra.mxu0 %v3654
  %v4010 = vpop.f32.mrf.mxu0
  %v4011 = vadd.f32 0.0, %v4010
  %v4012 = vpop.f32.mrf.mxu0
  %4013 = vmatprep.mubr.f32.mxu0 0.0
  %4014 = vmatmul.mubr.f32.gmra.mxu0 %v3657
  %v4015 = vpop.f32.mrf.mxu0
  %v4016 = vadd.f32 0.0, %v4015
  %v4017 = vpop.f32.mrf.mxu0
  %4018 = vmatprep.mubr.f32.mxu0 0.0
  %4019 = vmatmul.mubr.f32.gmra.mxu0 %v3660
  %v4020 = vpop.f32.mrf.mxu0
  %v4021 = vadd.f32 0.0, %v4020
  %v4022 = vpop.f32.mrf.mxu0
  %4023 = vmatprep.mubr.f32.mxu0 0.0
  %4024 = vmatmul.mubr.f32.gmra.mxu0 %v3663
  %v4025 = vpop.f32.mrf.mxu0
  %v4026 = vadd.f32 0.0, %v4025
  %v4027 = vpop.f32.mrf.mxu0
  %4028 = vmatprep.mubr.f32.mxu0 0.0
  %4029 = vmatmul.mubr.f32.gmra.mxu0 %v3666
  %v4030 = vpop.f32.mrf.mxu0
  %v4031 = vadd.f32 0.0, %v4030
  %v4032 = vpop.f32.mrf.mxu0
  %4033 = vmatprep.mubr.f32.mxu0 0.0
  %4034 = vmatmul.mubr.f32.gmra.mxu0 %v3669
  %v4035 = vpop.f32.mrf.mxu0
  %v4036 = vadd.f32 0.0, %v4035
  %v4037 = vpop.f32.mrf.mxu0
  %4038 = vmatprep.mubr.f32.mxu0 0.0
  %4039 = vmatmul.mubr.f32.gmra.mxu0 %v3672
  %v4040 = vpop.f32.mrf.mxu0
  %v4041 = vadd.f32 0.0, %v4040
  %v4042 = vpop.f32.mrf.mxu0
  %4043 = vmatprep.mubr.f32.mxu0 0.0
  %4044 = vmatmul.mubr.f32.gmra.mxu0 %v3675
  %v4045 = vpop.f32.mrf.mxu0
  %v4046 = vadd.f32 0.0, %v4045
  %v4047 = vpop.f32.mrf.mxu0
  %4048 = vmatprep.mubr.f32.mxu0 0.0
  %4049 = vmatmul.mubr.f32.gmra.mxu0 %v3678
  %v4050 = vpop.f32.mrf.mxu0
  %v4051 = vadd.f32 0.0, %v4050
  %v4052 = vpop.f32.mrf.mxu0
  %4053 = vmatprep.mubr.f32.mxu0 0.0
  %4054 = vmatmul.mubr.f32.gmra.mxu0 %v3681
  %v4055 = vpop.f32.mrf.mxu0
  %v4056 = vadd.f32 0.0, %v4055
  %v4057 = vpop.f32.mrf.mxu0
  %4058 = vmatprep.mubr.f32.mxu0 0.0
  %4059 = vmatmul.mubr.f32.gmra.mxu0 %v3684
  %v4060 = vpop.f32.mrf.mxu0
  %v4061 = vadd.f32 0.0, %v4060
  %v4062 = vpop.f32.mrf.mxu0
  %4063 = vmatprep.mubr.f32.mxu0 0.0
  %4064 = vmatmul.mubr.f32.gmra.mxu0 %v3687
  %v4065 = vpop.f32.mrf.mxu0
  %v4066 = vadd.f32 0.0, %v4065
  %v4067 = vpop.f32.mrf.mxu0
  %4068 = vmatprep.mubr.f32.mxu0 0.0
  %4069 = vmatmul.mubr.f32.gmra.mxu0 %v3690
  %v4070 = vpop.f32.mrf.mxu0
  %v4071 = vadd.f32 0.0, %v4070
  %v4072 = vpop.f32.mrf.mxu0
  %4073 = vmatprep.mubr.f32.mxu0 0.0
  %4074 = vmatmul.mubr.f32.gmra.mxu0 %v3693
  %v4075 = vpop.f32.mrf.mxu0
  %v4076 = vadd.f32 0.0, %v4075
  %v4077 = vpop.f32.mrf.mxu0
  %4078 = vmatprep.mubr.f32.mxu0 0.0
  %4079 = vmatmul.mubr.f32.gmra.mxu0 %v3696
  %v4080 = vpop.f32.mrf.mxu0
  %v4081 = vadd.f32 0.0, %v4080
  %v4082 = vpop.f32.mrf.mxu0
  %4083 = vmatprep.mubr.f32.mxu0 0.0
  %4084 = vmatmul.mubr.f32.gmra.mxu0 %v3699
  %v4085 = vpop.f32.mrf.mxu0
  %v4086 = vadd.f32 0.0, %v4085
  %v4087 = vpop.f32.mrf.mxu0
  %4088 = vdwg.mxu0
  %v4089 = vadd.f32 %v3379, %v3771
  %v4090 = vadd.f32 %v3380, %v3776
  %v4091 = vadd.f32 %v3381, %v3781
  %v4092 = vadd.f32 %v3382, %v3786
  %v4093 = vadd.f32 %v3383, %v3791
  %v4094 = vadd.f32 %v3384, %v3796
  %v4095 = vadd.f32 %v3385, %v3801
  %v4096 = vadd.f32 %v3386, %v3806
  %v4097 = vadd.f32 %v3387, %v3811
  %v4098 = vadd.f32 %v3388, %v3816
  %v4099 = vadd.f32 %v3389, %v3821
  %v4100 = vadd.f32 %v3390, %v3826
  %v4101 = vadd.f32 %v3391, %v3831
  %v4102 = vadd.f32 %v3392, %v3836
  %v4103 = vadd.f32 %v3393, %v3841
  %v4104 = vadd.f32 %v3394, %v3846
  %v4105 = vadd.f32 %v3395, %v3851
  %v4106 = vadd.f32 %v3396, %v3856
  %v4107 = vadd.f32 %v3397, %v3861
  %v4108 = vadd.f32 %v3398, %v3866
  %v4109 = vadd.f32 %v3399, %v3871
  %v4110 = vadd.f32 %v3400, %v3876
  %v4111 = vadd.f32 %v3401, %v3881
  %v4112 = vadd.f32 %v3402, %v3886
  %v4113 = vadd.f32 %v3403, %v3891
  %v4114 = vadd.f32 %v3404, %v3896
  %v4115 = vadd.f32 %v3405, %v3901
  %v4116 = vadd.f32 %v3406, %v3906
  %v4117 = vadd.f32 %v3407, %v3911
  %v4118 = vadd.f32 %v3408, %v3916
  %v4119 = vadd.f32 %v3409, %v3921
  %v4120 = vadd.f32 %v3410, %v3926
  %v4121 = vadd.f32 %v3411, %v3931
  %v4122 = vadd.f32 %v3412, %v3936
  %v4123 = vadd.f32 %v3413, %v3941
  %v4124 = vadd.f32 %v3414, %v3946
  %v4125 = vadd.f32 %v3415, %v3951
  %v4126 = vadd.f32 %v3416, %v3956
  %v4127 = vadd.f32 %v3417, %v3961
  %v4128 = vadd.f32 %v3418, %v3966
  %v4129 = vadd.f32 %v3419, %v3971
  %v4130 = vadd.f32 %v3420, %v3976
  %v4131 = vadd.f32 %v3421, %v3981
  %v4132 = vadd.f32 %v3422, %v3986
  %v4133 = vadd.f32 %v3423, %v3991
  %v4134 = vadd.f32 %v3424, %v3996
  %v4135 = vadd.f32 %v3425, %v4001
  %v4136 = vadd.f32 %v3426, %v4006
  %v4137 = vadd.f32 %v3427, %v4011
  %v4138 = vadd.f32 %v3428, %v4016
  %v4139 = vadd.f32 %v3429, %v4021
  %v4140 = vadd.f32 %v3430, %v4026
  %v4141 = vadd.f32 %v3431, %v4031
  %v4142 = vadd.f32 %v3432, %v4036
  %v4143 = vadd.f32 %v3433, %v4041
  %v4144 = vadd.f32 %v3434, %v4046
  %v4145 = vadd.f32 %v3435, %v4051
  %v4146 = vadd.f32 %v3436, %v4056
  %v4147 = vadd.f32 %v3437, %v4061
  %v4148 = vadd.f32 %v3438, %v4066
  %v4149 = vadd.f32 %v3439, %v4071
  %v4150 = vadd.f32 %v3440, %v4076
  %v4151 = vadd.f32 %v3441, %v4081
  %v4152 = vadd.f32 %v3442, %v4086
  %v4153 = vld [vmem:[%s2] sm:$0xff]
  %v4154 = vld [vmem:[%s2 + $0x8] sm:$0xff]
  %v4155 = vld [vmem:[%s2 + $0x18] sm:$0xff]
  %v4156 = vld [vmem:[%s2 + $0x20] sm:$0xff]
  %v4157 = vld [vmem:[%s2 + $0x30] sm:$0xff]
  %v4158 = vld [vmem:[%s2 + $0x38] sm:$0xff]
  %v4159 = vld [vmem:[%s2 + $0x48] sm:$0xff]
  %v4160 = vld [vmem:[%s2 + $0x50] sm:$0xff]
  %v4161 = vld [vmem:[%s2 + $0x60] sm:$0xff]
  %v4162 = vld [vmem:[%s2 + $0x68] sm:$0xff]
  %v4163 = vld [vmem:[%s2 + $0x78] sm:$0xff]
  %v4164 = vld [vmem:[%s2 + $0x80] sm:$0xff]
  %v4165 = vld [vmem:[%s2 + $0x90] sm:$0xff]
  %v4166 = vld [vmem:[%s2 + $0x98] sm:$0xff]
  %v4167 = vld [vmem:[%s2 + $0xa8] sm:$0xff]
  %v4168 = vld [vmem:[%s2 + $0xb0] sm:$0xff]
  %v4169 = vld [vmem:[%s2 + $0xc0] sm:$0xff]
  %v4170 = vld [vmem:[%s2 + $0xc8] sm:$0xff]
  %v4171 = vld [vmem:[%s2 + $0xd8] sm:$0xff]
  %v4172 = vld [vmem:[%s2 + $0xe0] sm:$0xff]
  %v4173 = vld [vmem:[%s2 + $0xf0] sm:$0xff]
  %v4174 = vld [vmem:[%s2 + $0xf8] sm:$0xff]
  %v4175 = vld [vmem:[%s2 + $0x108] sm:$0xff]
  %v4176 = vld [vmem:[%s2 + $0x110] sm:$0xff]
  %v4177 = vld [vmem:[%s2 + $0x120] sm:$0xff]
  %v4178 = vld [vmem:[%s2 + $0x128] sm:$0xff]
  %v4179 = vld [vmem:[%s2 + $0x138] sm:$0xff]
  %v4180 = vld [vmem:[%s2 + $0x140] sm:$0xff]
  %v4181 = vld [vmem:[%s2 + $0x150] sm:$0xff]
  %v4182 = vld [vmem:[%s2 + $0x158] sm:$0xff]
  %v4183 = vld [vmem:[%s2 + $0x168] sm:$0xff]
  %v4184 = vld [vmem:[%s2 + $0x170] sm:$0xff]
  %v4185 = vld [vmem:[%s2 + $0x180] sm:$0xff]
  %v4186 = vld [vmem:[%s2 + $0x188] sm:$0xff]
  %v4187 = vld [vmem:[%s2 + $0x198] sm:$0xff]
  %v4188 = vld [vmem:[%s2 + $0x1a0] sm:$0xff]
  %v4189 = vld [vmem:[%s2 + $0x1b0] sm:$0xff]
  %v4190 = vld [vmem:[%s2 + $0x1b8] sm:$0xff]
  %v4191 = vld [vmem:[%s2 + $0x1c8] sm:$0xff]
  %v4192 = vld [vmem:[%s2 + $0x1d0] sm:$0xff]
  %v4193 = vld [vmem:[%s2 + $0x1e0] sm:$0xff]
  %v4194 = vld [vmem:[%s2 + $0x1e8] sm:$0xff]
  %v4195 = vld [vmem:[%s2 + $0x1f8] sm:$0xff]
  %v4196 = vld [vmem:[%s2 + $0x200] sm:$0xff]
  %v4197 = vld [vmem:[%s2 + $0x210] sm:$0xff]
  %v4198 = vld [vmem:[%s2 + $0x218] sm:$0xff]
  %v4199 = vld [vmem:[%s2 + $0x228] sm:$0xff]
  %v4200 = vld [vmem:[%s2 + $0x230] sm:$0xff]
  %v4201 = vld [vmem:[%s2 + $0x240] sm:$0xff]
  %v4202 = vld [vmem:[%s2 + $0x248] sm:$0xff]
  %v4203 = vld [vmem:[%s2 + $0x258] sm:$0xff]
  %v4204 = vld [vmem:[%s2 + $0x260] sm:$0xff]
  %v4205 = vld [vmem:[%s2 + $0x270] sm:$0xff]
  %v4206 = vld [vmem:[%s2 + $0x278] sm:$0xff]
  %v4207 = vld [vmem:[%s2 + $0x288] sm:$0xff]
  %v4208 = vld [vmem:[%s2 + $0x290] sm:$0xff]
  %v4209 = vld [vmem:[%s2 + $0x2a0] sm:$0xff]
  %v4210 = vld [vmem:[%s2 + $0x2a8] sm:$0xff]
  %v4211 = vld [vmem:[%s2 + $0x2b8] sm:$0xff]
  %v4212 = vld [vmem:[%s2 + $0x2c0] sm:$0xff]
  %v4213 = vld [vmem:[%s2 + $0x2d0] sm:$0xff]
  %v4214 = vld [vmem:[%s2 + $0x2d8] sm:$0xff]
  %v4215 = vld [vmem:[%s2 + $0x2e8] sm:$0xff]
  %v4216 = vld [vmem:[%s2 + $0x2f0] sm:$0xff]
  %s4217 = scalar_lea.vmem %s3, 24
  %v4218 = vld [vmem:[%s4217] sm:$0xf]
  %v4220 = vsel %vm151, %v4153, 0
  %v4223 = vsel %vm151, %v4154, 0
  %v4226 = vsel %vm151, %v4155, 0
  %v4229 = vsel %vm151, %v4156, 0
  %v4232 = vsel %vm151, %v4157, 0
  %v4235 = vsel %vm151, %v4158, 0
  %v4238 = vsel %vm151, %v4159, 0
  %v4241 = vsel %vm151, %v4160, 0
  %v4244 = vsel %vm151, %v4161, 0
  %v4247 = vsel %vm151, %v4162, 0
  %v4250 = vsel %vm151, %v4163, 0
  %v4253 = vsel %vm151, %v4164, 0
  %v4256 = vsel %vm151, %v4165, 0
  %v4259 = vsel %vm151, %v4166, 0
  %v4262 = vsel %vm151, %v4167, 0
  %v4265 = vsel %vm151, %v4168, 0
  %v4268 = vsel %vm151, %v4169, 0
  %v4271 = vsel %vm151, %v4170, 0
  %v4274 = vsel %vm151, %v4171, 0
  %v4277 = vsel %vm151, %v4172, 0
  %v4280 = vsel %vm151, %v4173, 0
  %v4283 = vsel %vm151, %v4174, 0
  %v4286 = vsel %vm151, %v4175, 0
  %v4289 = vsel %vm151, %v4176, 0
  %v4292 = vsel %vm151, %v4177, 0
  %v4295 = vsel %vm151, %v4178, 0
  %v4298 = vsel %vm151, %v4179, 0
  %v4301 = vsel %vm151, %v4180, 0
  %v4304 = vsel %vm151, %v4181, 0
  %v4307 = vsel %vm151, %v4182, 0
  %v4310 = vsel %vm151, %v4183, 0
  %v4313 = vsel %vm151, %v4184, 0
  %v4316 = vsel %vm151, %v4185, 0
  %v4319 = vsel %vm151, %v4186, 0
  %v4322 = vsel %vm151, %v4187, 0
  %v4325 = vsel %vm151, %v4188, 0
  %v4328 = vsel %vm151, %v4189, 0
  %v4331 = vsel %vm151, %v4190, 0
  %v4334 = vsel %vm151, %v4191, 0
  %v4337 = vsel %vm151, %v4192, 0
  %v4340 = vsel %vm151, %v4193, 0
  %v4343 = vsel %vm151, %v4194, 0
  %v4346 = vsel %vm151, %v4195, 0
  %v4349 = vsel %vm151, %v4196, 0
  %v4352 = vsel %vm151, %v4197, 0
  %v4355 = vsel %vm151, %v4198, 0
  %v4358 = vsel %vm151, %v4199, 0
  %v4361 = vsel %vm151, %v4200, 0
  %v4364 = vsel %vm151, %v4201, 0
  %v4367 = vsel %vm151, %v4202, 0
  %v4370 = vsel %vm151, %v4203, 0
  %v4373 = vsel %vm151, %v4204, 0
  %v4376 = vsel %vm151, %v4205, 0
  %v4379 = vsel %vm151, %v4206, 0
  %v4382 = vsel %vm151, %v4207, 0
  %v4385 = vsel %vm151, %v4208, 0
  %v4388 = vsel %vm151, %v4209, 0
  %v4391 = vsel %vm151, %v4210, 0
  %v4394 = vsel %vm151, %v4211, 0
  %v4397 = vsel %vm151, %v4212, 0
  %v4400 = vsel %vm151, %v4213, 0
  %v4403 = vsel %vm151, %v4214, 0
  %v4406 = vsel %vm151, %v4215, 0
  %v4409 = vsel %vm151, %v4216, 0
  %v4412 = vsel %vm344, %v4218, 0
  %4414 = vmatprep.subr.mxu0 0.0
  %4415 = vmatpush1.msra.mxu0 0.0
  %4416 = vmatprep.subr.mxu0 0.0
  %4417 = vmatpush1.msra.mxu0 0.0
  %4418 = vmatprep.subr.mxu0 0.0
  %4419 = vmatpush1.msra.mxu0 0.0
  %4420 = vmatprep.subr.mxu0 0.0
  %4421 = vmatpush1.msra.mxu0 0.0
  %4422 = vmatprep.subr.mxu0 0.0
  %4423 = vmatpush1.msra.mxu0 0.0
  %4424 = vmatprep.subr.mxu0 0.0
  %4425 = vmatpush1.msra.mxu0 0.0
  %4426 = vmatprep.subr.mxu0 0.0
  %4427 = vmatpush1.msra.mxu0 0.0
  %4428 = vmatprep.subr.mxu0 0.0
  %4429 = vmatpush1.msra.mxu0 0.0
  %4430 = vmatprep.subr.mxu0 0.0
  %4431 = vmatpush1.msra.mxu0 0.0
  %4432 = vmatprep.subr.mxu0 0.0
  %4433 = vmatpush1.msra.mxu0 0.0
  %4434 = vmatprep.subr.mxu0 0.0
  %4435 = vmatpush1.msra.mxu0 0.0
  %4436 = vmatprep.subr.mxu0 0.0
  %4437 = vmatpush1.msra.mxu0 0.0
  %4438 = vmatprep.subr.mxu0 0.0
  %4439 = vmatpush1.msra.mxu0 0.0
  %4440 = vmatprep.subr.mxu0 0.0
  %4441 = vmatpush1.msra.mxu0 0.0
  %4442 = vmatprep.subr.mxu0 0.0
  %4443 = vmatpush1.msra.mxu0 0.0
  %4444 = vmatprep.subr.mxu0 0.0
  %4445 = vmatpush1.msra.mxu0 %v4412
  %4446 = vmatprep.subr.mxu0 0.0
  %4447 = vmatpush2.msra.mxu0 0.0
  %4448 = vmatprep.subr.mxu0 0.0
  %4449 = vmatpush2.msra.mxu0 0.0
  %4450 = vmatprep.subr.mxu0 0.0
  %4451 = vmatpush2.msra.mxu0 0.0
  %4452 = vmatprep.subr.mxu0 0.0
  %4453 = vmatpush2.msra.mxu0 0.0
  %4454 = vmatprep.subr.mxu0 0.0
  %4455 = vmatpush2.msra.mxu0 0.0
  %4456 = vmatprep.subr.mxu0 0.0
  %4457 = vmatpush2.msra.mxu0 0.0
  %4458 = vmatprep.subr.mxu0 0.0
  %4459 = vmatpush2.msra.mxu0 0.0
  %4460 = vmatprep.subr.mxu0 0.0
  %4461 = vmatpush2.msra.mxu0 0.0
  %4462 = vmatprep.subr.mxu0 0.0
  %4463 = vmatpush2.msra.mxu0 0.0
  %4464 = vmatprep.subr.mxu0 0.0
  %4465 = vmatpush2.msra.mxu0 0.0
  %4466 = vmatprep.subr.mxu0 0.0
  %4467 = vmatpush2.msra.mxu0 0.0
  %4468 = vmatprep.subr.mxu0 0.0
  %4469 = vmatpush2.msra.mxu0 0.0
  %4470 = vmatprep.subr.mxu0 0.0
  %4471 = vmatpush2.msra.mxu0 0.0
  %4472 = vmatprep.subr.mxu0 0.0
  %4473 = vmatpush2.msra.mxu0 0.0
  %4474 = vmatprep.subr.mxu0 0.0
  %4475 = vmatpush2.msra.mxu0 0.0
  %4476 = vmatprep.subr.mxu0 0.0
  %4477 = vmatpush2.msra.mxu0 0.0
  %4478 = vmatprep.mubr.f32.mxu0 0.0
  %4479 = vmatmul.mubr.f32.gmra.mxu0 %v4220
  %v4480 = vpop.f32.mrf.mxu0
  %v4481 = vadd.f32 0.0, %v4480
  %v4482 = vpop.f32.mrf.mxu0
  %4483 = vmatprep.mubr.f32.mxu0 0.0
  %4484 = vmatmul.mubr.f32.gmra.mxu0 %v4223
  %v4485 = vpop.f32.mrf.mxu0
  %v4486 = vadd.f32 0.0, %v4485
  %v4487 = vpop.f32.mrf.mxu0
  %4488 = vmatprep.mubr.f32.mxu0 0.0
  %4489 = vmatmul.mubr.f32.gmra.mxu0 %v4226
  %v4490 = vpop.f32.mrf.mxu0
  %v4491 = vadd.f32 0.0, %v4490
  %v4492 = vpop.f32.mrf.mxu0
  %4493 = vmatprep.mubr.f32.mxu0 0.0
  %4494 = vmatmul.mubr.f32.gmra.mxu0 %v4229
  %v4495 = vpop.f32.mrf.mxu0
  %v4496 = vadd.f32 0.0, %v4495
  %v4497 = vpop.f32.mrf.mxu0
  %4498 = vmatprep.mubr.f32.mxu0 0.0
  %4499 = vmatmul.mubr.f32.gmra.mxu0 %v4232
  %v4500 = vpop.f32.mrf.mxu0
  %v4501 = vadd.f32 0.0, %v4500
  %v4502 = vpop.f32.mrf.mxu0
  %4503 = vmatprep.mubr.f32.mxu0 0.0
  %4504 = vmatmul.mubr.f32.gmra.mxu0 %v4235
  %v4505 = vpop.f32.mrf.mxu0
  %v4506 = vadd.f32 0.0, %v4505
  %v4507 = vpop.f32.mrf.mxu0
  %4508 = vmatprep.mubr.f32.mxu0 0.0
  %4509 = vmatmul.mubr.f32.gmra.mxu0 %v4238
  %v4510 = vpop.f32.mrf.mxu0
  %v4511 = vadd.f32 0.0, %v4510
  %v4512 = vpop.f32.mrf.mxu0
  %4513 = vmatprep.mubr.f32.mxu0 0.0
  %4514 = vmatmul.mubr.f32.gmra.mxu0 %v4241
  %v4515 = vpop.f32.mrf.mxu0
  %v4516 = vadd.f32 0.0, %v4515
  %v4517 = vpop.f32.mrf.mxu0
  %4518 = vmatprep.mubr.f32.mxu0 0.0
  %4519 = vmatmul.mubr.f32.gmra.mxu0 %v4244
  %v4520 = vpop.f32.mrf.mxu0
  %v4521 = vadd.f32 0.0, %v4520
  %v4522 = vpop.f32.mrf.mxu0
  %4523 = vmatprep.mubr.f32.mxu0 0.0
  %4524 = vmatmul.mubr.f32.gmra.mxu0 %v4247
  %v4525 = vpop.f32.mrf.mxu0
  %v4526 = vadd.f32 0.0, %v4525
  %v4527 = vpop.f32.mrf.mxu0
  %4528 = vmatprep.mubr.f32.mxu0 0.0
  %4529 = vmatmul.mubr.f32.gmra.mxu0 %v4250
  %v4530 = vpop.f32.mrf.mxu0
  %v4531 = vadd.f32 0.0, %v4530
  %v4532 = vpop.f32.mrf.mxu0
  %4533 = vmatprep.mubr.f32.mxu0 0.0
  %4534 = vmatmul.mubr.f32.gmra.mxu0 %v4253
  %v4535 = vpop.f32.mrf.mxu0
  %v4536 = vadd.f32 0.0, %v4535
  %v4537 = vpop.f32.mrf.mxu0
  %4538 = vmatprep.mubr.f32.mxu0 0.0
  %4539 = vmatmul.mubr.f32.gmra.mxu0 %v4256
  %v4540 = vpop.f32.mrf.mxu0
  %v4541 = vadd.f32 0.0, %v4540
  %v4542 = vpop.f32.mrf.mxu0
  %4543 = vmatprep.mubr.f32.mxu0 0.0
  %4544 = vmatmul.mubr.f32.gmra.mxu0 %v4259
  %v4545 = vpop.f32.mrf.mxu0
  %v4546 = vadd.f32 0.0, %v4545
  %v4547 = vpop.f32.mrf.mxu0
  %4548 = vmatprep.mubr.f32.mxu0 0.0
  %4549 = vmatmul.mubr.f32.gmra.mxu0 %v4262
  %v4550 = vpop.f32.mrf.mxu0
  %v4551 = vadd.f32 0.0, %v4550
  %v4552 = vpop.f32.mrf.mxu0
  %4553 = vmatprep.mubr.f32.mxu0 0.0
  %4554 = vmatmul.mubr.f32.gmra.mxu0 %v4265
  %v4555 = vpop.f32.mrf.mxu0
  %v4556 = vadd.f32 0.0, %v4555
  %v4557 = vpop.f32.mrf.mxu0
  %4558 = vmatprep.mubr.f32.mxu0 0.0
  %4559 = vmatmul.mubr.f32.gmra.mxu0 %v4268
  %v4560 = vpop.f32.mrf.mxu0
  %v4561 = vadd.f32 0.0, %v4560
  %v4562 = vpop.f32.mrf.mxu0
  %4563 = vmatprep.mubr.f32.mxu0 0.0
  %4564 = vmatmul.mubr.f32.gmra.mxu0 %v4271
  %v4565 = vpop.f32.mrf.mxu0
  %v4566 = vadd.f32 0.0, %v4565
  %v4567 = vpop.f32.mrf.mxu0
  %4568 = vmatprep.mubr.f32.mxu0 0.0
  %4569 = vmatmul.mubr.f32.gmra.mxu0 %v4274
  %v4570 = vpop.f32.mrf.mxu0
  %v4571 = vadd.f32 0.0, %v4570
  %v4572 = vpop.f32.mrf.mxu0
  %4573 = vmatprep.mubr.f32.mxu0 0.0
  %4574 = vmatmul.mubr.f32.gmra.mxu0 %v4277
  %v4575 = vpop.f32.mrf.mxu0
  %v4576 = vadd.f32 0.0, %v4575
  %v4577 = vpop.f32.mrf.mxu0
  %4578 = vmatprep.mubr.f32.mxu0 0.0
  %4579 = vmatmul.mubr.f32.gmra.mxu0 %v4280
  %v4580 = vpop.f32.mrf.mxu0
  %v4581 = vadd.f32 0.0, %v4580
  %v4582 = vpop.f32.mrf.mxu0
  %4583 = vmatprep.mubr.f32.mxu0 0.0
  %4584 = vmatmul.mubr.f32.gmra.mxu0 %v4283
  %v4585 = vpop.f32.mrf.mxu0
  %v4586 = vadd.f32 0.0, %v4585
  %v4587 = vpop.f32.mrf.mxu0
  %4588 = vmatprep.mubr.f32.mxu0 0.0
  %4589 = vmatmul.mubr.f32.gmra.mxu0 %v4286
  %v4590 = vpop.f32.mrf.mxu0
  %v4591 = vadd.f32 0.0, %v4590
  %v4592 = vpop.f32.mrf.mxu0
  %4593 = vmatprep.mubr.f32.mxu0 0.0
  %4594 = vmatmul.mubr.f32.gmra.mxu0 %v4289
  %v4595 = vpop.f32.mrf.mxu0
  %v4596 = vadd.f32 0.0, %v4595
  %v4597 = vpop.f32.mrf.mxu0
  %4598 = vmatprep.mubr.f32.mxu0 0.0
  %4599 = vmatmul.mubr.f32.gmra.mxu0 %v4292
  %v4600 = vpop.f32.mrf.mxu0
  %v4601 = vadd.f32 0.0, %v4600
  %v4602 = vpop.f32.mrf.mxu0
  %4603 = vmatprep.mubr.f32.mxu0 0.0
  %4604 = vmatmul.mubr.f32.gmra.mxu0 %v4295
  %v4605 = vpop.f32.mrf.mxu0
  %v4606 = vadd.f32 0.0, %v4605
  %v4607 = vpop.f32.mrf.mxu0
  %4608 = vmatprep.mubr.f32.mxu0 0.0
  %4609 = vmatmul.mubr.f32.gmra.mxu0 %v4298
  %v4610 = vpop.f32.mrf.mxu0
  %v4611 = vadd.f32 0.0, %v4610
  %v4612 = vpop.f32.mrf.mxu0
  %4613 = vmatprep.mubr.f32.mxu0 0.0
  %4614 = vmatmul.mubr.f32.gmra.mxu0 %v4301
  %v4615 = vpop.f32.mrf.mxu0
  %v4616 = vadd.f32 0.0, %v4615
  %v4617 = vpop.f32.mrf.mxu0
  %4618 = vmatprep.mubr.f32.mxu0 0.0
  %4619 = vmatmul.mubr.f32.gmra.mxu0 %v4304
  %v4620 = vpop.f32.mrf.mxu0
  %v4621 = vadd.f32 0.0, %v4620
  %v4622 = vpop.f32.mrf.mxu0
  %4623 = vmatprep.mubr.f32.mxu0 0.0
  %4624 = vmatmul.mubr.f32.gmra.mxu0 %v4307
  %v4625 = vpop.f32.mrf.mxu0
  %v4626 = vadd.f32 0.0, %v4625
  %v4627 = vpop.f32.mrf.mxu0
  %4628 = vmatprep.mubr.f32.mxu0 0.0
  %4629 = vmatmul.mubr.f32.gmra.mxu0 %v4310
  %v4630 = vpop.f32.mrf.mxu0
  %v4631 = vadd.f32 0.0, %v4630
  %v4632 = vpop.f32.mrf.mxu0
  %4633 = vmatprep.mubr.f32.mxu0 0.0
  %4634 = vmatmul.mubr.f32.gmra.mxu0 %v4313
  %v4635 = vpop.f32.mrf.mxu0
  %v4636 = vadd.f32 0.0, %v4635
  %v4637 = vpop.f32.mrf.mxu0
  %4638 = vmatprep.mubr.f32.mxu0 0.0
  %4639 = vmatmul.mubr.f32.gmra.mxu0 %v4316
  %v4640 = vpop.f32.mrf.mxu0
  %v4641 = vadd.f32 0.0, %v4640
  %v4642 = vpop.f32.mrf.mxu0
  %4643 = vmatprep.mubr.f32.mxu0 0.0
  %4644 = vmatmul.mubr.f32.gmra.mxu0 %v4319
  %v4645 = vpop.f32.mrf.mxu0
  %v4646 = vadd.f32 0.0, %v4645
  %v4647 = vpop.f32.mrf.mxu0
  %4648 = vmatprep.mubr.f32.mxu0 0.0
  %4649 = vmatmul.mubr.f32.gmra.mxu0 %v4322
  %v4650 = vpop.f32.mrf.mxu0
  %v4651 = vadd.f32 0.0, %v4650
  %v4652 = vpop.f32.mrf.mxu0
  %4653 = vmatprep.mubr.f32.mxu0 0.0
  %4654 = vmatmul.mubr.f32.gmra.mxu0 %v4325
  %v4655 = vpop.f32.mrf.mxu0
  %v4656 = vadd.f32 0.0, %v4655
  %v4657 = vpop.f32.mrf.mxu0
  %4658 = vmatprep.mubr.f32.mxu0 0.0
  %4659 = vmatmul.mubr.f32.gmra.mxu0 %v4328
  %v4660 = vpop.f32.mrf.mxu0
  %v4661 = vadd.f32 0.0, %v4660
  %v4662 = vpop.f32.mrf.mxu0
  %4663 = vmatprep.mubr.f32.mxu0 0.0
  %4664 = vmatmul.mubr.f32.gmra.mxu0 %v4331
  %v4665 = vpop.f32.mrf.mxu0
  %v4666 = vadd.f32 0.0, %v4665
  %v4667 = vpop.f32.mrf.mxu0
  %4668 = vmatprep.mubr.f32.mxu0 0.0
  %4669 = vmatmul.mubr.f32.gmra.mxu0 %v4334
  %v4670 = vpop.f32.mrf.mxu0
  %v4671 = vadd.f32 0.0, %v4670
  %v4672 = vpop.f32.mrf.mxu0
  %4673 = vmatprep.mubr.f32.mxu0 0.0
  %4674 = vmatmul.mubr.f32.gmra.mxu0 %v4337
  %v4675 = vpop.f32.mrf.mxu0
  %v4676 = vadd.f32 0.0, %v4675
  %v4677 = vpop.f32.mrf.mxu0
  %4678 = vmatprep.mubr.f32.mxu0 0.0
  %4679 = vmatmul.mubr.f32.gmra.mxu0 %v4340
  %v4680 = vpop.f32.mrf.mxu0
  %v4681 = vadd.f32 0.0, %v4680
  %v4682 = vpop.f32.mrf.mxu0
  %4683 = vmatprep.mubr.f32.mxu0 0.0
  %4684 = vmatmul.mubr.f32.gmra.mxu0 %v4343
  %v4685 = vpop.f32.mrf.mxu0
  %v4686 = vadd.f32 0.0, %v4685
  %v4687 = vpop.f32.mrf.mxu0
  %4688 = vmatprep.mubr.f32.mxu0 0.0
  %4689 = vmatmul.mubr.f32.gmra.mxu0 %v4346
  %v4690 = vpop.f32.mrf.mxu0
  %v4691 = vadd.f32 0.0, %v4690
  %v4692 = vpop.f32.mrf.mxu0
  %4693 = vmatprep.mubr.f32.mxu0 0.0
  %4694 = vmatmul.mubr.f32.gmra.mxu0 %v4349
  %v4695 = vpop.f32.mrf.mxu0
  %v4696 = vadd.f32 0.0, %v4695
  %v4697 = vpop.f32.mrf.mxu0
  %4698 = vmatprep.mubr.f32.mxu0 0.0
  %4699 = vmatmul.mubr.f32.gmra.mxu0 %v4352
  %v4700 = vpop.f32.mrf.mxu0
  %v4701 = vadd.f32 0.0, %v4700
  %v4702 = vpop.f32.mrf.mxu0
  %4703 = vmatprep.mubr.f32.mxu0 0.0
  %4704 = vmatmul.mubr.f32.gmra.mxu0 %v4355
  %v4705 = vpop.f32.mrf.mxu0
  %v4706 = vadd.f32 0.0, %v4705
  %v4707 = vpop.f32.mrf.mxu0
  %4708 = vmatprep.mubr.f32.mxu0 0.0
  %4709 = vmatmul.mubr.f32.gmra.mxu0 %v4358
  %v4710 = vpop.f32.mrf.mxu0
  %v4711 = vadd.f32 0.0, %v4710
  %v4712 = vpop.f32.mrf.mxu0
  %4713 = vmatprep.mubr.f32.mxu0 0.0
  %4714 = vmatmul.mubr.f32.gmra.mxu0 %v4361
  %v4715 = vpop.f32.mrf.mxu0
  %v4716 = vadd.f32 0.0, %v4715
  %v4717 = vpop.f32.mrf.mxu0
  %4718 = vmatprep.mubr.f32.mxu0 0.0
  %4719 = vmatmul.mubr.f32.gmra.mxu0 %v4364
  %v4720 = vpop.f32.mrf.mxu0
  %v4721 = vadd.f32 0.0, %v4720
  %v4722 = vpop.f32.mrf.mxu0
  %4723 = vmatprep.mubr.f32.mxu0 0.0
  %4724 = vmatmul.mubr.f32.gmra.mxu0 %v4367
  %v4725 = vpop.f32.mrf.mxu0
  %v4726 = vadd.f32 0.0, %v4725
  %v4727 = vpop.f32.mrf.mxu0
  %4728 = vmatprep.mubr.f32.mxu0 0.0
  %4729 = vmatmul.mubr.f32.gmra.mxu0 %v4370
  %v4730 = vpop.f32.mrf.mxu0
  %v4731 = vadd.f32 0.0, %v4730
  %v4732 = vpop.f32.mrf.mxu0
  %4733 = vmatprep.mubr.f32.mxu0 0.0
  %4734 = vmatmul.mubr.f32.gmra.mxu0 %v4373
  %v4735 = vpop.f32.mrf.mxu0
  %v4736 = vadd.f32 0.0, %v4735
  %v4737 = vpop.f32.mrf.mxu0
  %4738 = vmatprep.mubr.f32.mxu0 0.0
  %4739 = vmatmul.mubr.f32.gmra.mxu0 %v4376
  %v4740 = vpop.f32.mrf.mxu0
  %v4741 = vadd.f32 0.0, %v4740
  %v4742 = vpop.f32.mrf.mxu0
  %4743 = vmatprep.mubr.f32.mxu0 0.0
  %4744 = vmatmul.mubr.f32.gmra.mxu0 %v4379
  %v4745 = vpop.f32.mrf.mxu0
  %v4746 = vadd.f32 0.0, %v4745
  %v4747 = vpop.f32.mrf.mxu0
  %4748 = vmatprep.mubr.f32.mxu0 0.0
  %4749 = vmatmul.mubr.f32.gmra.mxu0 %v4382
  %v4750 = vpop.f32.mrf.mxu0
  %v4751 = vadd.f32 0.0, %v4750
  %v4752 = vpop.f32.mrf.mxu0
  %4753 = vmatprep.mubr.f32.mxu0 0.0
  %4754 = vmatmul.mubr.f32.gmra.mxu0 %v4385
  %v4755 = vpop.f32.mrf.mxu0
  %v4756 = vadd.f32 0.0, %v4755
  %v4757 = vpop.f32.mrf.mxu0
  %4758 = vmatprep.mubr.f32.mxu0 0.0
  %4759 = vmatmul.mubr.f32.gmra.mxu0 %v4388
  %v4760 = vpop.f32.mrf.mxu0
  %v4761 = vadd.f32 0.0, %v4760
  %v4762 = vpop.f32.mrf.mxu0
  %4763 = vmatprep.mubr.f32.mxu0 0.0
  %4764 = vmatmul.mubr.f32.gmra.mxu0 %v4391
  %v4765 = vpop.f32.mrf.mxu0
  %v4766 = vadd.f32 0.0, %v4765
  %v4767 = vpop.f32.mrf.mxu0
  %4768 = vmatprep.mubr.f32.mxu0 0.0
  %4769 = vmatmul.mubr.f32.gmra.mxu0 %v4394
  %v4770 = vpop.f32.mrf.mxu0
  %v4771 = vadd.f32 0.0, %v4770
  %v4772 = vpop.f32.mrf.mxu0
  %4773 = vmatprep.mubr.f32.mxu0 0.0
  %4774 = vmatmul.mubr.f32.gmra.mxu0 %v4397
  %v4775 = vpop.f32.mrf.mxu0
  %v4776 = vadd.f32 0.0, %v4775
  %v4777 = vpop.f32.mrf.mxu0
  %4778 = vmatprep.mubr.f32.mxu0 0.0
  %4779 = vmatmul.mubr.f32.gmra.mxu0 %v4400
  %v4780 = vpop.f32.mrf.mxu0
  %v4781 = vadd.f32 0.0, %v4780
  %v4782 = vpop.f32.mrf.mxu0
  %4783 = vmatprep.mubr.f32.mxu0 0.0
  %4784 = vmatmul.mubr.f32.gmra.mxu0 %v4403
  %v4785 = vpop.f32.mrf.mxu0
  %v4786 = vadd.f32 0.0, %v4785
  %v4787 = vpop.f32.mrf.mxu0
  %4788 = vmatprep.mubr.f32.mxu0 0.0
  %4789 = vmatmul.mubr.f32.gmra.mxu0 %v4406
  %v4790 = vpop.f32.mrf.mxu0
  %v4791 = vadd.f32 0.0, %v4790
  %v4792 = vpop.f32.mrf.mxu0
  %4793 = vmatprep.mubr.f32.mxu0 0.0
  %4794 = vmatmul.mubr.f32.gmra.mxu0 %v4409
  %v4795 = vpop.f32.mrf.mxu0
  %v4796 = vadd.f32 0.0, %v4795
  %v4797 = vpop.f32.mrf.mxu0
  %4798 = vdwg.mxu0
  %v4799 = vadd.f32 %v4089, %v4481
  %v4800 = vadd.f32 %v4090, %v4486
  %v4801 = vadd.f32 %v4091, %v4491
  %v4802 = vadd.f32 %v4092, %v4496
  %v4803 = vadd.f32 %v4093, %v4501
  %v4804 = vadd.f32 %v4094, %v4506
  %v4805 = vadd.f32 %v4095, %v4511
  %v4806 = vadd.f32 %v4096, %v4516
  %v4807 = vadd.f32 %v4097, %v4521
  %v4808 = vadd.f32 %v4098, %v4526
  %v4809 = vadd.f32 %v4099, %v4531
  %v4810 = vadd.f32 %v4100, %v4536
  %v4811 = vadd.f32 %v4101, %v4541
  %v4812 = vadd.f32 %v4102, %v4546
  %v4813 = vadd.f32 %v4103, %v4551
  %v4814 = vadd.f32 %v4104, %v4556
  %v4815 = vadd.f32 %v4105, %v4561
  %v4816 = vadd.f32 %v4106, %v4566
  %v4817 = vadd.f32 %v4107, %v4571
  %v4818 = vadd.f32 %v4108, %v4576
  %v4819 = vadd.f32 %v4109, %v4581
  %v4820 = vadd.f32 %v4110, %v4586
  %v4821 = vadd.f32 %v4111, %v4591
  %v4822 = vadd.f32 %v4112, %v4596
  %v4823 = vadd.f32 %v4113, %v4601
  %v4824 = vadd.f32 %v4114, %v4606
  %v4825 = vadd.f32 %v4115, %v4611
  %v4826 = vadd.f32 %v4116, %v4616
  %v4827 = vadd.f32 %v4117, %v4621
  %v4828 = vadd.f32 %v4118, %v4626
  %v4829 = vadd.f32 %v4119, %v4631
  %v4830 = vadd.f32 %v4120, %v4636
  %v4831 = vadd.f32 %v4121, %v4641
  %v4832 = vadd.f32 %v4122, %v4646
  %v4833 = vadd.f32 %v4123, %v4651
  %v4834 = vadd.f32 %v4124, %v4656
  %v4835 = vadd.f32 %v4125, %v4661
  %v4836 = vadd.f32 %v4126, %v4666
  %v4837 = vadd.f32 %v4127, %v4671
  %v4838 = vadd.f32 %v4128, %v4676
  %v4839 = vadd.f32 %v4129, %v4681
  %v4840 = vadd.f32 %v4130, %v4686
  %v4841 = vadd.f32 %v4131, %v4691
  %v4842 = vadd.f32 %v4132, %v4696
  %v4843 = vadd.f32 %v4133, %v4701
  %v4844 = vadd.f32 %v4134, %v4706
  %v4845 = vadd.f32 %v4135, %v4711
  %v4846 = vadd.f32 %v4136, %v4716
  %v4847 = vadd.f32 %v4137, %v4721
  %v4848 = vadd.f32 %v4138, %v4726
  %v4849 = vadd.f32 %v4139, %v4731
  %v4850 = vadd.f32 %v4140, %v4736
  %v4851 = vadd.f32 %v4141, %v4741
  %v4852 = vadd.f32 %v4142, %v4746
  %v4853 = vadd.f32 %v4143, %v4751
  %v4854 = vadd.f32 %v4144, %v4756
  %v4855 = vadd.f32 %v4145, %v4761
  %v4856 = vadd.f32 %v4146, %v4766
  %v4857 = vadd.f32 %v4147, %v4771
  %v4858 = vadd.f32 %v4148, %v4776
  %v4859 = vadd.f32 %v4149, %v4781
  %v4860 = vadd.f32 %v4150, %v4786
  %v4861 = vadd.f32 %v4151, %v4791
  %v4862 = vadd.f32 %v4152, %v4796
  %v4863 = vld [vmem:[%s2 + $0x1] sm:$0xff]
  %v4864 = vld [vmem:[%s2 + $0x9] sm:$0xff]
  %v4865 = vld [vmem:[%s2 + $0x19] sm:$0xff]
  %v4866 = vld [vmem:[%s2 + $0x21] sm:$0xff]
  %v4867 = vld [vmem:[%s2 + $0x31] sm:$0xff]
  %v4868 = vld [vmem:[%s2 + $0x39] sm:$0xff]
  %v4869 = vld [vmem:[%s2 + $0x49] sm:$0xff]
  %v4870 = vld [vmem:[%s2 + $0x51] sm:$0xff]
  %v4871 = vld [vmem:[%s2 + $0x61] sm:$0xff]
  %v4872 = vld [vmem:[%s2 + $0x69] sm:$0xff]
  %v4873 = vld [vmem:[%s2 + $0x79] sm:$0xff]
  %v4874 = vld [vmem:[%s2 + $0x81] sm:$0xff]
  %v4875 = vld [vmem:[%s2 + $0x91] sm:$0xff]
  %v4876 = vld [vmem:[%s2 + $0x99] sm:$0xff]
  %v4877 = vld [vmem:[%s2 + $0xa9] sm:$0xff]
  %v4878 = vld [vmem:[%s2 + $0xb1] sm:$0xff]
  %v4879 = vld [vmem:[%s2 + $0xc1] sm:$0xff]
  %v4880 = vld [vmem:[%s2 + $0xc9] sm:$0xff]
  %v4881 = vld [vmem:[%s2 + $0xd9] sm:$0xff]
  %v4882 = vld [vmem:[%s2 + $0xe1] sm:$0xff]
  %v4883 = vld [vmem:[%s2 + $0xf1] sm:$0xff]
  %v4884 = vld [vmem:[%s2 + $0xf9] sm:$0xff]
  %v4885 = vld [vmem:[%s2 + $0x109] sm:$0xff]
  %v4886 = vld [vmem:[%s2 + $0x111] sm:$0xff]
  %v4887 = vld [vmem:[%s2 + $0x121] sm:$0xff]
  %v4888 = vld [vmem:[%s2 + $0x129] sm:$0xff]
  %v4889 = vld [vmem:[%s2 + $0x139] sm:$0xff]
  %v4890 = vld [vmem:[%s2 + $0x141] sm:$0xff]
  %v4891 = vld [vmem:[%s2 + $0x151] sm:$0xff]
  %v4892 = vld [vmem:[%s2 + $0x159] sm:$0xff]
  %v4893 = vld [vmem:[%s2 + $0x169] sm:$0xff]
  %v4894 = vld [vmem:[%s2 + $0x171] sm:$0xff]
  %v4895 = vld [vmem:[%s2 + $0x181] sm:$0xff]
  %v4896 = vld [vmem:[%s2 + $0x189] sm:$0xff]
  %v4897 = vld [vmem:[%s2 + $0x199] sm:$0xff]
  %v4898 = vld [vmem:[%s2 + $0x1a1] sm:$0xff]
  %v4899 = vld [vmem:[%s2 + $0x1b1] sm:$0xff]
  %v4900 = vld [vmem:[%s2 + $0x1b9] sm:$0xff]
  %v4901 = vld [vmem:[%s2 + $0x1c9] sm:$0xff]
  %v4902 = vld [vmem:[%s2 + $0x1d1] sm:$0xff]
  %v4903 = vld [vmem:[%s2 + $0x1e1] sm:$0xff]
  %v4904 = vld [vmem:[%s2 + $0x1e9] sm:$0xff]
  %v4905 = vld [vmem:[%s2 + $0x1f9] sm:$0xff]
  %v4906 = vld [vmem:[%s2 + $0x201] sm:$0xff]
  %v4907 = vld [vmem:[%s2 + $0x211] sm:$0xff]
  %v4908 = vld [vmem:[%s2 + $0x219] sm:$0xff]
  %v4909 = vld [vmem:[%s2 + $0x229] sm:$0xff]
  %v4910 = vld [vmem:[%s2 + $0x231] sm:$0xff]
  %v4911 = vld [vmem:[%s2 + $0x241] sm:$0xff]
  %v4912 = vld [vmem:[%s2 + $0x249] sm:$0xff]
  %v4913 = vld [vmem:[%s2 + $0x259] sm:$0xff]
  %v4914 = vld [vmem:[%s2 + $0x261] sm:$0xff]
  %v4915 = vld [vmem:[%s2 + $0x271] sm:$0xff]
  %v4916 = vld [vmem:[%s2 + $0x279] sm:$0xff]
  %v4917 = vld [vmem:[%s2 + $0x289] sm:$0xff]
  %v4918 = vld [vmem:[%s2 + $0x291] sm:$0xff]
  %v4919 = vld [vmem:[%s2 + $0x2a1] sm:$0xff]
  %v4920 = vld [vmem:[%s2 + $0x2a9] sm:$0xff]
  %v4921 = vld [vmem:[%s2 + $0x2b9] sm:$0xff]
  %v4922 = vld [vmem:[%s2 + $0x2c1] sm:$0xff]
  %v4923 = vld [vmem:[%s2 + $0x2d1] sm:$0xff]
  %v4924 = vld [vmem:[%s2 + $0x2d9] sm:$0xff]
  %v4925 = vld [vmem:[%s2 + $0x2e9] sm:$0xff]
  %v4926 = vld [vmem:[%s2 + $0x2f1] sm:$0xff]
  %s4927 = scalar_lea.vmem %s3, 28
  %v4928 = vld [vmem:[%s4927] sm:$0xf]
  %v4930 = vsel %vm151, %v4863, 0
  %v4933 = vsel %vm151, %v4864, 0
  %v4936 = vsel %vm151, %v4865, 0
  %v4939 = vsel %vm151, %v4866, 0
  %v4942 = vsel %vm151, %v4867, 0
  %v4945 = vsel %vm151, %v4868, 0
  %v4948 = vsel %vm151, %v4869, 0
  %v4951 = vsel %vm151, %v4870, 0
  %v4954 = vsel %vm151, %v4871, 0
  %v4957 = vsel %vm151, %v4872, 0
  %v4960 = vsel %vm151, %v4873, 0
  %v4963 = vsel %vm151, %v4874, 0
  %v4966 = vsel %vm151, %v4875, 0
  %v4969 = vsel %vm151, %v4876, 0
  %v4972 = vsel %vm151, %v4877, 0
  %v4975 = vsel %vm151, %v4878, 0
  %v4978 = vsel %vm151, %v4879, 0
  %v4981 = vsel %vm151, %v4880, 0
  %v4984 = vsel %vm151, %v4881, 0
  %v4987 = vsel %vm151, %v4882, 0
  %v4990 = vsel %vm151, %v4883, 0
  %v4993 = vsel %vm151, %v4884, 0
  %v4996 = vsel %vm151, %v4885, 0
  %v4999 = vsel %vm151, %v4886, 0
  %v5002 = vsel %vm151, %v4887, 0
  %v5005 = vsel %vm151, %v4888, 0
  %v5008 = vsel %vm151, %v4889, 0
  %v5011 = vsel %vm151, %v4890, 0
  %v5014 = vsel %vm151, %v4891, 0
  %v5017 = vsel %vm151, %v4892, 0
  %v5020 = vsel %vm151, %v4893, 0
  %v5023 = vsel %vm151, %v4894, 0
  %v5026 = vsel %vm151, %v4895, 0
  %v5029 = vsel %vm151, %v4896, 0
  %v5032 = vsel %vm151, %v4897, 0
  %v5035 = vsel %vm151, %v4898, 0
  %v5038 = vsel %vm151, %v4899, 0
  %v5041 = vsel %vm151, %v4900, 0
  %v5044 = vsel %vm151, %v4901, 0
  %v5047 = vsel %vm151, %v4902, 0
  %v5050 = vsel %vm151, %v4903, 0
  %v5053 = vsel %vm151, %v4904, 0
  %v5056 = vsel %vm151, %v4905, 0
  %v5059 = vsel %vm151, %v4906, 0
  %v5062 = vsel %vm151, %v4907, 0
  %v5065 = vsel %vm151, %v4908, 0
  %v5068 = vsel %vm151, %v4909, 0
  %v5071 = vsel %vm151, %v4910, 0
  %v5074 = vsel %vm151, %v4911, 0
  %v5077 = vsel %vm151, %v4912, 0
  %v5080 = vsel %vm151, %v4913, 0
  %v5083 = vsel %vm151, %v4914, 0
  %v5086 = vsel %vm151, %v4915, 0
  %v5089 = vsel %vm151, %v4916, 0
  %v5092 = vsel %vm151, %v4917, 0
  %v5095 = vsel %vm151, %v4918, 0
  %v5098 = vsel %vm151, %v4919, 0
  %v5101 = vsel %vm151, %v4920, 0
  %v5104 = vsel %vm151, %v4921, 0
  %v5107 = vsel %vm151, %v4922, 0
  %v5110 = vsel %vm151, %v4923, 0
  %v5113 = vsel %vm151, %v4924, 0
  %v5116 = vsel %vm151, %v4925, 0
  %v5119 = vsel %vm151, %v4926, 0
  %v5122 = vsel %vm344, %v4928, 0
  %5124 = vmatprep.subr.mxu0 0.0
  %5125 = vmatpush1.msra.mxu0 0.0
  %5126 = vmatprep.subr.mxu0 0.0
  %5127 = vmatpush1.msra.mxu0 0.0
  %5128 = vmatprep.subr.mxu0 0.0
  %5129 = vmatpush1.msra.mxu0 0.0
  %5130 = vmatprep.subr.mxu0 0.0
  %5131 = vmatpush1.msra.mxu0 0.0
  %5132 = vmatprep.subr.mxu0 0.0
  %5133 = vmatpush1.msra.mxu0 0.0
  %5134 = vmatprep.subr.mxu0 0.0
  %5135 = vmatpush1.msra.mxu0 0.0
  %5136 = vmatprep.subr.mxu0 0.0
  %5137 = vmatpush1.msra.mxu0 0.0
  %5138 = vmatprep.subr.mxu0 0.0
  %5139 = vmatpush1.msra.mxu0 0.0
  %5140 = vmatprep.subr.mxu0 0.0
  %5141 = vmatpush1.msra.mxu0 0.0
  %5142 = vmatprep.subr.mxu0 0.0
  %5143 = vmatpush1.msra.mxu0 0.0
  %5144 = vmatprep.subr.mxu0 0.0
  %5145 = vmatpush1.msra.mxu0 0.0
  %5146 = vmatprep.subr.mxu0 0.0
  %5147 = vmatpush1.msra.mxu0 0.0
  %5148 = vmatprep.subr.mxu0 0.0
  %5149 = vmatpush1.msra.mxu0 0.0
  %5150 = vmatprep.subr.mxu0 0.0
  %5151 = vmatpush1.msra.mxu0 0.0
  %5152 = vmatprep.subr.mxu0 0.0
  %5153 = vmatpush1.msra.mxu0 0.0
  %5154 = vmatprep.subr.mxu0 0.0
  %5155 = vmatpush1.msra.mxu0 %v5122
  %5156 = vmatprep.subr.mxu0 0.0
  %5157 = vmatpush2.msra.mxu0 0.0
  %5158 = vmatprep.subr.mxu0 0.0
  %5159 = vmatpush2.msra.mxu0 0.0
  %5160 = vmatprep.subr.mxu0 0.0
  %5161 = vmatpush2.msra.mxu0 0.0
  %5162 = vmatprep.subr.mxu0 0.0
  %5163 = vmatpush2.msra.mxu0 0.0
  %5164 = vmatprep.subr.mxu0 0.0
  %5165 = vmatpush2.msra.mxu0 0.0
  %5166 = vmatprep.subr.mxu0 0.0
  %5167 = vmatpush2.msra.mxu0 0.0
  %5168 = vmatprep.subr.mxu0 0.0
  %5169 = vmatpush2.msra.mxu0 0.0
  %5170 = vmatprep.subr.mxu0 0.0
  %5171 = vmatpush2.msra.mxu0 0.0
  %5172 = vmatprep.subr.mxu0 0.0
  %5173 = vmatpush2.msra.mxu0 0.0
  %5174 = vmatprep.subr.mxu0 0.0
  %5175 = vmatpush2.msra.mxu0 0.0
  %5176 = vmatprep.subr.mxu0 0.0
  %5177 = vmatpush2.msra.mxu0 0.0
  %5178 = vmatprep.subr.mxu0 0.0
  %5179 = vmatpush2.msra.mxu0 0.0
  %5180 = vmatprep.subr.mxu0 0.0
  %5181 = vmatpush2.msra.mxu0 0.0
  %5182 = vmatprep.subr.mxu0 0.0
  %5183 = vmatpush2.msra.mxu0 0.0
  %5184 = vmatprep.subr.mxu0 0.0
  %5185 = vmatpush2.msra.mxu0 0.0
  %5186 = vmatprep.subr.mxu0 0.0
  %5187 = vmatpush2.msra.mxu0 0.0
  %5188 = vmatprep.mubr.f32.mxu0 0.0
  %5189 = vmatmul.mubr.f32.gmra.mxu0 %v4930
  %v5190 = vpop.f32.mrf.mxu0
  %v5191 = vadd.f32 0.0, %v5190
  %v5192 = vpop.f32.mrf.mxu0
  %5193 = vmatprep.mubr.f32.mxu0 0.0
  %5194 = vmatmul.mubr.f32.gmra.mxu0 %v4933
  %v5195 = vpop.f32.mrf.mxu0
  %v5196 = vadd.f32 0.0, %v5195
  %v5197 = vpop.f32.mrf.mxu0
  %5198 = vmatprep.mubr.f32.mxu0 0.0
  %5199 = vmatmul.mubr.f32.gmra.mxu0 %v4936
  %v5200 = vpop.f32.mrf.mxu0
  %v5201 = vadd.f32 0.0, %v5200
  %v5202 = vpop.f32.mrf.mxu0
  %5203 = vmatprep.mubr.f32.mxu0 0.0
  %5204 = vmatmul.mubr.f32.gmra.mxu0 %v4939
  %v5205 = vpop.f32.mrf.mxu0
  %v5206 = vadd.f32 0.0, %v5205
  %v5207 = vpop.f32.mrf.mxu0
  %5208 = vmatprep.mubr.f32.mxu0 0.0
  %5209 = vmatmul.mubr.f32.gmra.mxu0 %v4942
  %v5210 = vpop.f32.mrf.mxu0
  %v5211 = vadd.f32 0.0, %v5210
  %v5212 = vpop.f32.mrf.mxu0
  %5213 = vmatprep.mubr.f32.mxu0 0.0
  %5214 = vmatmul.mubr.f32.gmra.mxu0 %v4945
  %v5215 = vpop.f32.mrf.mxu0
  %v5216 = vadd.f32 0.0, %v5215
  %v5217 = vpop.f32.mrf.mxu0
  %5218 = vmatprep.mubr.f32.mxu0 0.0
  %5219 = vmatmul.mubr.f32.gmra.mxu0 %v4948
  %v5220 = vpop.f32.mrf.mxu0
  %v5221 = vadd.f32 0.0, %v5220
  %v5222 = vpop.f32.mrf.mxu0
  %5223 = vmatprep.mubr.f32.mxu0 0.0
  %5224 = vmatmul.mubr.f32.gmra.mxu0 %v4951
  %v5225 = vpop.f32.mrf.mxu0
  %v5226 = vadd.f32 0.0, %v5225
  %v5227 = vpop.f32.mrf.mxu0
  %5228 = vmatprep.mubr.f32.mxu0 0.0
  %5229 = vmatmul.mubr.f32.gmra.mxu0 %v4954
  %v5230 = vpop.f32.mrf.mxu0
  %v5231 = vadd.f32 0.0, %v5230
  %v5232 = vpop.f32.mrf.mxu0
  %5233 = vmatprep.mubr.f32.mxu0 0.0
  %5234 = vmatmul.mubr.f32.gmra.mxu0 %v4957
  %v5235 = vpop.f32.mrf.mxu0
  %v5236 = vadd.f32 0.0, %v5235
  %v5237 = vpop.f32.mrf.mxu0
  %5238 = vmatprep.mubr.f32.mxu0 0.0
  %5239 = vmatmul.mubr.f32.gmra.mxu0 %v4960
  %v5240 = vpop.f32.mrf.mxu0
  %v5241 = vadd.f32 0.0, %v5240
  %v5242 = vpop.f32.mrf.mxu0
  %5243 = vmatprep.mubr.f32.mxu0 0.0
  %5244 = vmatmul.mubr.f32.gmra.mxu0 %v4963
  %v5245 = vpop.f32.mrf.mxu0
  %v5246 = vadd.f32 0.0, %v5245
  %v5247 = vpop.f32.mrf.mxu0
  %5248 = vmatprep.mubr.f32.mxu0 0.0
  %5249 = vmatmul.mubr.f32.gmra.mxu0 %v4966
  %v5250 = vpop.f32.mrf.mxu0
  %v5251 = vadd.f32 0.0, %v5250
  %v5252 = vpop.f32.mrf.mxu0
  %5253 = vmatprep.mubr.f32.mxu0 0.0
  %5254 = vmatmul.mubr.f32.gmra.mxu0 %v4969
  %v5255 = vpop.f32.mrf.mxu0
  %v5256 = vadd.f32 0.0, %v5255
  %v5257 = vpop.f32.mrf.mxu0
  %5258 = vmatprep.mubr.f32.mxu0 0.0
  %5259 = vmatmul.mubr.f32.gmra.mxu0 %v4972
  %v5260 = vpop.f32.mrf.mxu0
  %v5261 = vadd.f32 0.0, %v5260
  %v5262 = vpop.f32.mrf.mxu0
  %5263 = vmatprep.mubr.f32.mxu0 0.0
  %5264 = vmatmul.mubr.f32.gmra.mxu0 %v4975
  %v5265 = vpop.f32.mrf.mxu0
  %v5266 = vadd.f32 0.0, %v5265
  %v5267 = vpop.f32.mrf.mxu0
  %5268 = vmatprep.mubr.f32.mxu0 0.0
  %5269 = vmatmul.mubr.f32.gmra.mxu0 %v4978
  %v5270 = vpop.f32.mrf.mxu0
  %v5271 = vadd.f32 0.0, %v5270
  %v5272 = vpop.f32.mrf.mxu0
  %5273 = vmatprep.mubr.f32.mxu0 0.0
  %5274 = vmatmul.mubr.f32.gmra.mxu0 %v4981
  %v5275 = vpop.f32.mrf.mxu0
  %v5276 = vadd.f32 0.0, %v5275
  %v5277 = vpop.f32.mrf.mxu0
  %5278 = vmatprep.mubr.f32.mxu0 0.0
  %5279 = vmatmul.mubr.f32.gmra.mxu0 %v4984
  %v5280 = vpop.f32.mrf.mxu0
  %v5281 = vadd.f32 0.0, %v5280
  %v5282 = vpop.f32.mrf.mxu0
  %5283 = vmatprep.mubr.f32.mxu0 0.0
  %5284 = vmatmul.mubr.f32.gmra.mxu0 %v4987
  %v5285 = vpop.f32.mrf.mxu0
  %v5286 = vadd.f32 0.0, %v5285
  %v5287 = vpop.f32.mrf.mxu0
  %5288 = vmatprep.mubr.f32.mxu0 0.0
  %5289 = vmatmul.mubr.f32.gmra.mxu0 %v4990
  %v5290 = vpop.f32.mrf.mxu0
  %v5291 = vadd.f32 0.0, %v5290
  %v5292 = vpop.f32.mrf.mxu0
  %5293 = vmatprep.mubr.f32.mxu0 0.0
  %5294 = vmatmul.mubr.f32.gmra.mxu0 %v4993
  %v5295 = vpop.f32.mrf.mxu0
  %v5296 = vadd.f32 0.0, %v5295
  %v5297 = vpop.f32.mrf.mxu0
  %5298 = vmatprep.mubr.f32.mxu0 0.0
  %5299 = vmatmul.mubr.f32.gmra.mxu0 %v4996
  %v5300 = vpop.f32.mrf.mxu0
  %v5301 = vadd.f32 0.0, %v5300
  %v5302 = vpop.f32.mrf.mxu0
  %5303 = vmatprep.mubr.f32.mxu0 0.0
  %5304 = vmatmul.mubr.f32.gmra.mxu0 %v4999
  %v5305 = vpop.f32.mrf.mxu0
  %v5306 = vadd.f32 0.0, %v5305
  %v5307 = vpop.f32.mrf.mxu0
  %5308 = vmatprep.mubr.f32.mxu0 0.0
  %5309 = vmatmul.mubr.f32.gmra.mxu0 %v5002
  %v5310 = vpop.f32.mrf.mxu0
  %v5311 = vadd.f32 0.0, %v5310
  %v5312 = vpop.f32.mrf.mxu0
  %5313 = vmatprep.mubr.f32.mxu0 0.0
  %5314 = vmatmul.mubr.f32.gmra.mxu0 %v5005
  %v5315 = vpop.f32.mrf.mxu0
  %v5316 = vadd.f32 0.0, %v5315
  %v5317 = vpop.f32.mrf.mxu0
  %5318 = vmatprep.mubr.f32.mxu0 0.0
  %5319 = vmatmul.mubr.f32.gmra.mxu0 %v5008
  %v5320 = vpop.f32.mrf.mxu0
  %v5321 = vadd.f32 0.0, %v5320
  %v5322 = vpop.f32.mrf.mxu0
  %5323 = vmatprep.mubr.f32.mxu0 0.0
  %5324 = vmatmul.mubr.f32.gmra.mxu0 %v5011
  %v5325 = vpop.f32.mrf.mxu0
  %v5326 = vadd.f32 0.0, %v5325
  %v5327 = vpop.f32.mrf.mxu0
  %5328 = vmatprep.mubr.f32.mxu0 0.0
  %5329 = vmatmul.mubr.f32.gmra.mxu0 %v5014
  %v5330 = vpop.f32.mrf.mxu0
  %v5331 = vadd.f32 0.0, %v5330
  %v5332 = vpop.f32.mrf.mxu0
  %5333 = vmatprep.mubr.f32.mxu0 0.0
  %5334 = vmatmul.mubr.f32.gmra.mxu0 %v5017
  %v5335 = vpop.f32.mrf.mxu0
  %v5336 = vadd.f32 0.0, %v5335
  %v5337 = vpop.f32.mrf.mxu0
  %5338 = vmatprep.mubr.f32.mxu0 0.0
  %5339 = vmatmul.mubr.f32.gmra.mxu0 %v5020
  %v5340 = vpop.f32.mrf.mxu0
  %v5341 = vadd.f32 0.0, %v5340
  %v5342 = vpop.f32.mrf.mxu0
  %5343 = vmatprep.mubr.f32.mxu0 0.0
  %5344 = vmatmul.mubr.f32.gmra.mxu0 %v5023
  %v5345 = vpop.f32.mrf.mxu0
  %v5346 = vadd.f32 0.0, %v5345
  %v5347 = vpop.f32.mrf.mxu0
  %5348 = vmatprep.mubr.f32.mxu0 0.0
  %5349 = vmatmul.mubr.f32.gmra.mxu0 %v5026
  %v5350 = vpop.f32.mrf.mxu0
  %v5351 = vadd.f32 0.0, %v5350
  %v5352 = vpop.f32.mrf.mxu0
  %5353 = vmatprep.mubr.f32.mxu0 0.0
  %5354 = vmatmul.mubr.f32.gmra.mxu0 %v5029
  %v5355 = vpop.f32.mrf.mxu0
  %v5356 = vadd.f32 0.0, %v5355
  %v5357 = vpop.f32.mrf.mxu0
  %5358 = vmatprep.mubr.f32.mxu0 0.0
  %5359 = vmatmul.mubr.f32.gmra.mxu0 %v5032
  %v5360 = vpop.f32.mrf.mxu0
  %v5361 = vadd.f32 0.0, %v5360
  %v5362 = vpop.f32.mrf.mxu0
  %5363 = vmatprep.mubr.f32.mxu0 0.0
  %5364 = vmatmul.mubr.f32.gmra.mxu0 %v5035
  %v5365 = vpop.f32.mrf.mxu0
  %v5366 = vadd.f32 0.0, %v5365
  %v5367 = vpop.f32.mrf.mxu0
  %5368 = vmatprep.mubr.f32.mxu0 0.0
  %5369 = vmatmul.mubr.f32.gmra.mxu0 %v5038
  %v5370 = vpop.f32.mrf.mxu0
  %v5371 = vadd.f32 0.0, %v5370
  %v5372 = vpop.f32.mrf.mxu0
  %5373 = vmatprep.mubr.f32.mxu0 0.0
  %5374 = vmatmul.mubr.f32.gmra.mxu0 %v5041
  %v5375 = vpop.f32.mrf.mxu0
  %v5376 = vadd.f32 0.0, %v5375
  %v5377 = vpop.f32.mrf.mxu0
  %5378 = vmatprep.mubr.f32.mxu0 0.0
  %5379 = vmatmul.mubr.f32.gmra.mxu0 %v5044
  %v5380 = vpop.f32.mrf.mxu0
  %v5381 = vadd.f32 0.0, %v5380
  %v5382 = vpop.f32.mrf.mxu0
  %5383 = vmatprep.mubr.f32.mxu0 0.0
  %5384 = vmatmul.mubr.f32.gmra.mxu0 %v5047
  %v5385 = vpop.f32.mrf.mxu0
  %v5386 = vadd.f32 0.0, %v5385
  %v5387 = vpop.f32.mrf.mxu0
  %5388 = vmatprep.mubr.f32.mxu0 0.0
  %5389 = vmatmul.mubr.f32.gmra.mxu0 %v5050
  %v5390 = vpop.f32.mrf.mxu0
  %v5391 = vadd.f32 0.0, %v5390
  %v5392 = vpop.f32.mrf.mxu0
  %5393 = vmatprep.mubr.f32.mxu0 0.0
  %5394 = vmatmul.mubr.f32.gmra.mxu0 %v5053
  %v5395 = vpop.f32.mrf.mxu0
  %v5396 = vadd.f32 0.0, %v5395
  %v5397 = vpop.f32.mrf.mxu0
  %5398 = vmatprep.mubr.f32.mxu0 0.0
  %5399 = vmatmul.mubr.f32.gmra.mxu0 %v5056
  %v5400 = vpop.f32.mrf.mxu0
  %v5401 = vadd.f32 0.0, %v5400
  %v5402 = vpop.f32.mrf.mxu0
  %5403 = vmatprep.mubr.f32.mxu0 0.0
  %5404 = vmatmul.mubr.f32.gmra.mxu0 %v5059
  %v5405 = vpop.f32.mrf.mxu0
  %v5406 = vadd.f32 0.0, %v5405
  %v5407 = vpop.f32.mrf.mxu0
  %5408 = vmatprep.mubr.f32.mxu0 0.0
  %5409 = vmatmul.mubr.f32.gmra.mxu0 %v5062
  %v5410 = vpop.f32.mrf.mxu0
  %v5411 = vadd.f32 0.0, %v5410
  %v5412 = vpop.f32.mrf.mxu0
  %5413 = vmatprep.mubr.f32.mxu0 0.0
  %5414 = vmatmul.mubr.f32.gmra.mxu0 %v5065
  %v5415 = vpop.f32.mrf.mxu0
  %v5416 = vadd.f32 0.0, %v5415
  %v5417 = vpop.f32.mrf.mxu0
  %5418 = vmatprep.mubr.f32.mxu0 0.0
  %5419 = vmatmul.mubr.f32.gmra.mxu0 %v5068
  %v5420 = vpop.f32.mrf.mxu0
  %v5421 = vadd.f32 0.0, %v5420
  %v5422 = vpop.f32.mrf.mxu0
  %5423 = vmatprep.mubr.f32.mxu0 0.0
  %5424 = vmatmul.mubr.f32.gmra.mxu0 %v5071
  %v5425 = vpop.f32.mrf.mxu0
  %v5426 = vadd.f32 0.0, %v5425
  %v5427 = vpop.f32.mrf.mxu0
  %5428 = vmatprep.mubr.f32.mxu0 0.0
  %5429 = vmatmul.mubr.f32.gmra.mxu0 %v5074
  %v5430 = vpop.f32.mrf.mxu0
  %v5431 = vadd.f32 0.0, %v5430
  %v5432 = vpop.f32.mrf.mxu0
  %5433 = vmatprep.mubr.f32.mxu0 0.0
  %5434 = vmatmul.mubr.f32.gmra.mxu0 %v5077
  %v5435 = vpop.f32.mrf.mxu0
  %v5436 = vadd.f32 0.0, %v5435
  %v5437 = vpop.f32.mrf.mxu0
  %5438 = vmatprep.mubr.f32.mxu0 0.0
  %5439 = vmatmul.mubr.f32.gmra.mxu0 %v5080
  %v5440 = vpop.f32.mrf.mxu0
  %v5441 = vadd.f32 0.0, %v5440
  %v5442 = vpop.f32.mrf.mxu0
  %5443 = vmatprep.mubr.f32.mxu0 0.0
  %5444 = vmatmul.mubr.f32.gmra.mxu0 %v5083
  %v5445 = vpop.f32.mrf.mxu0
  %v5446 = vadd.f32 0.0, %v5445
  %v5447 = vpop.f32.mrf.mxu0
  %5448 = vmatprep.mubr.f32.mxu0 0.0
  %5449 = vmatmul.mubr.f32.gmra.mxu0 %v5086
  %v5450 = vpop.f32.mrf.mxu0
  %v5451 = vadd.f32 0.0, %v5450
  %v5452 = vpop.f32.mrf.mxu0
  %5453 = vmatprep.mubr.f32.mxu0 0.0
  %5454 = vmatmul.mubr.f32.gmra.mxu0 %v5089
  %v5455 = vpop.f32.mrf.mxu0
  %v5456 = vadd.f32 0.0, %v5455
  %v5457 = vpop.f32.mrf.mxu0
  %5458 = vmatprep.mubr.f32.mxu0 0.0
  %5459 = vmatmul.mubr.f32.gmra.mxu0 %v5092
  %v5460 = vpop.f32.mrf.mxu0
  %v5461 = vadd.f32 0.0, %v5460
  %v5462 = vpop.f32.mrf.mxu0
  %5463 = vmatprep.mubr.f32.mxu0 0.0
  %5464 = vmatmul.mubr.f32.gmra.mxu0 %v5095
  %v5465 = vpop.f32.mrf.mxu0
  %v5466 = vadd.f32 0.0, %v5465
  %v5467 = vpop.f32.mrf.mxu0
  %5468 = vmatprep.mubr.f32.mxu0 0.0
  %5469 = vmatmul.mubr.f32.gmra.mxu0 %v5098
  %v5470 = vpop.f32.mrf.mxu0
  %v5471 = vadd.f32 0.0, %v5470
  %v5472 = vpop.f32.mrf.mxu0
  %5473 = vmatprep.mubr.f32.mxu0 0.0
  %5474 = vmatmul.mubr.f32.gmra.mxu0 %v5101
  %v5475 = vpop.f32.mrf.mxu0
  %v5476 = vadd.f32 0.0, %v5475
  %v5477 = vpop.f32.mrf.mxu0
  %5478 = vmatprep.mubr.f32.mxu0 0.0
  %5479 = vmatmul.mubr.f32.gmra.mxu0 %v5104
  %v5480 = vpop.f32.mrf.mxu0
  %v5481 = vadd.f32 0.0, %v5480
  %v5482 = vpop.f32.mrf.mxu0
  %5483 = vmatprep.mubr.f32.mxu0 0.0
  %5484 = vmatmul.mubr.f32.gmra.mxu0 %v5107
  %v5485 = vpop.f32.mrf.mxu0
  %v5486 = vadd.f32 0.0, %v5485
  %v5487 = vpop.f32.mrf.mxu0
  %5488 = vmatprep.mubr.f32.mxu0 0.0
  %5489 = vmatmul.mubr.f32.gmra.mxu0 %v5110
  %v5490 = vpop.f32.mrf.mxu0
  %v5491 = vadd.f32 0.0, %v5490
  %v5492 = vpop.f32.mrf.mxu0
  %5493 = vmatprep.mubr.f32.mxu0 0.0
  %5494 = vmatmul.mubr.f32.gmra.mxu0 %v5113
  %v5495 = vpop.f32.mrf.mxu0
  %v5496 = vadd.f32 0.0, %v5495
  %v5497 = vpop.f32.mrf.mxu0
  %5498 = vmatprep.mubr.f32.mxu0 0.0
  %5499 = vmatmul.mubr.f32.gmra.mxu0 %v5116
  %v5500 = vpop.f32.mrf.mxu0
  %v5501 = vadd.f32 0.0, %v5500
  %v5502 = vpop.f32.mrf.mxu0
  %5503 = vmatprep.mubr.f32.mxu0 0.0
  %5504 = vmatmul.mubr.f32.gmra.mxu0 %v5119
  %v5505 = vpop.f32.mrf.mxu0
  %v5506 = vadd.f32 0.0, %v5505
  %v5507 = vpop.f32.mrf.mxu0
  %5508 = vdwg.mxu0
  %v5509 = vadd.f32 %v4799, %v5191
  %v5510 = vadd.f32 %v4800, %v5196
  %v5511 = vadd.f32 %v4801, %v5201
  %v5512 = vadd.f32 %v4802, %v5206
  %v5513 = vadd.f32 %v4803, %v5211
  %v5514 = vadd.f32 %v4804, %v5216
  %v5515 = vadd.f32 %v4805, %v5221
  %v5516 = vadd.f32 %v4806, %v5226
  %v5517 = vadd.f32 %v4807, %v5231
  %v5518 = vadd.f32 %v4808, %v5236
  %v5519 = vadd.f32 %v4809, %v5241
  %v5520 = vadd.f32 %v4810, %v5246
  %v5521 = vadd.f32 %v4811, %v5251
  %v5522 = vadd.f32 %v4812, %v5256
  %v5523 = vadd.f32 %v4813, %v5261
  %v5524 = vadd.f32 %v4814, %v5266
  %v5525 = vadd.f32 %v4815, %v5271
  %v5526 = vadd.f32 %v4816, %v5276
  %v5527 = vadd.f32 %v4817, %v5281
  %v5528 = vadd.f32 %v4818, %v5286
  %v5529 = vadd.f32 %v4819, %v5291
  %v5530 = vadd.f32 %v4820, %v5296
  %v5531 = vadd.f32 %v4821, %v5301
  %v5532 = vadd.f32 %v4822, %v5306
  %v5533 = vadd.f32 %v4823, %v5311
  %v5534 = vadd.f32 %v4824, %v5316
  %v5535 = vadd.f32 %v4825, %v5321
  %v5536 = vadd.f32 %v4826, %v5326
  %v5537 = vadd.f32 %v4827, %v5331
  %v5538 = vadd.f32 %v4828, %v5336
  %v5539 = vadd.f32 %v4829, %v5341
  %v5540 = vadd.f32 %v4830, %v5346
  %v5541 = vadd.f32 %v4831, %v5351
  %v5542 = vadd.f32 %v4832, %v5356
  %v5543 = vadd.f32 %v4833, %v5361
  %v5544 = vadd.f32 %v4834, %v5366
  %v5545 = vadd.f32 %v4835, %v5371
  %v5546 = vadd.f32 %v4836, %v5376
  %v5547 = vadd.f32 %v4837, %v5381
  %v5548 = vadd.f32 %v4838, %v5386
  %v5549 = vadd.f32 %v4839, %v5391
  %v5550 = vadd.f32 %v4840, %v5396
  %v5551 = vadd.f32 %v4841, %v5401
  %v5552 = vadd.f32 %v4842, %v5406
  %v5553 = vadd.f32 %v4843, %v5411
  %v5554 = vadd.f32 %v4844, %v5416
  %v5555 = vadd.f32 %v4845, %v5421
  %v5556 = vadd.f32 %v4846, %v5426
  %v5557 = vadd.f32 %v4847, %v5431
  %v5558 = vadd.f32 %v4848, %v5436
  %v5559 = vadd.f32 %v4849, %v5441
  %v5560 = vadd.f32 %v4850, %v5446
  %v5561 = vadd.f32 %v4851, %v5451
  %v5562 = vadd.f32 %v4852, %v5456
  %v5563 = vadd.f32 %v4853, %v5461
  %v5564 = vadd.f32 %v4854, %v5466
  %v5565 = vadd.f32 %v4855, %v5471
  %v5566 = vadd.f32 %v4856, %v5476
  %v5567 = vadd.f32 %v4857, %v5481
  %v5568 = vadd.f32 %v4858, %v5486
  %v5569 = vadd.f32 %v4859, %v5491
  %v5570 = vadd.f32 %v4860, %v5496
  %v5571 = vadd.f32 %v4861, %v5501
  %v5572 = vadd.f32 %v4862, %v5506
  %v5573 = vld [vmem:[%s2 + $0x2] sm:$0xff]
  %v5574 = vld [vmem:[%s2 + $0xa] sm:$0xff]
  %v5575 = vld [vmem:[%s2 + $0x1a] sm:$0xff]
  %v5576 = vld [vmem:[%s2 + $0x22] sm:$0xff]
  %v5577 = vld [vmem:[%s2 + $0x32] sm:$0xff]
  %v5578 = vld [vmem:[%s2 + $0x3a] sm:$0xff]
  %v5579 = vld [vmem:[%s2 + $0x4a] sm:$0xff]
  %v5580 = vld [vmem:[%s2 + $0x52] sm:$0xff]
  %v5581 = vld [vmem:[%s2 + $0x62] sm:$0xff]
  %v5582 = vld [vmem:[%s2 + $0x6a] sm:$0xff]
  %v5583 = vld [vmem:[%s2 + $0x7a] sm:$0xff]
  %v5584 = vld [vmem:[%s2 + $0x82] sm:$0xff]
  %v5585 = vld [vmem:[%s2 + $0x92] sm:$0xff]
  %v5586 = vld [vmem:[%s2 + $0x9a] sm:$0xff]
  %v5587 = vld [vmem:[%s2 + $0xaa] sm:$0xff]
  %v5588 = vld [vmem:[%s2 + $0xb2] sm:$0xff]
  %v5589 = vld [vmem:[%s2 + $0xc2] sm:$0xff]
  %v5590 = vld [vmem:[%s2 + $0xca] sm:$0xff]
  %v5591 = vld [vmem:[%s2 + $0xda] sm:$0xff]
  %v5592 = vld [vmem:[%s2 + $0xe2] sm:$0xff]
  %v5593 = vld [vmem:[%s2 + $0xf2] sm:$0xff]
  %v5594 = vld [vmem:[%s2 + $0xfa] sm:$0xff]
  %v5595 = vld [vmem:[%s2 + $0x10a] sm:$0xff]
  %v5596 = vld [vmem:[%s2 + $0x112] sm:$0xff]
  %v5597 = vld [vmem:[%s2 + $0x122] sm:$0xff]
  %v5598 = vld [vmem:[%s2 + $0x12a] sm:$0xff]
  %v5599 = vld [vmem:[%s2 + $0x13a] sm:$0xff]
  %v5600 = vld [vmem:[%s2 + $0x142] sm:$0xff]
  %v5601 = vld [vmem:[%s2 + $0x152] sm:$0xff]
  %v5602 = vld [vmem:[%s2 + $0x15a] sm:$0xff]
  %v5603 = vld [vmem:[%s2 + $0x16a] sm:$0xff]
  %v5604 = vld [vmem:[%s2 + $0x172] sm:$0xff]
  %v5605 = vld [vmem:[%s2 + $0x182] sm:$0xff]
  %v5606 = vld [vmem:[%s2 + $0x18a] sm:$0xff]
  %v5607 = vld [vmem:[%s2 + $0x19a] sm:$0xff]
  %v5608 = vld [vmem:[%s2 + $0x1a2] sm:$0xff]
  %v5609 = vld [vmem:[%s2 + $0x1b2] sm:$0xff]
  %v5610 = vld [vmem:[%s2 + $0x1ba] sm:$0xff]
  %v5611 = vld [vmem:[%s2 + $0x1ca] sm:$0xff]
  %v5612 = vld [vmem:[%s2 + $0x1d2] sm:$0xff]
  %v5613 = vld [vmem:[%s2 + $0x1e2] sm:$0xff]
  %v5614 = vld [vmem:[%s2 + $0x1ea] sm:$0xff]
  %v5615 = vld [vmem:[%s2 + $0x1fa] sm:$0xff]
  %v5616 = vld [vmem:[%s2 + $0x202] sm:$0xff]
  %v5617 = vld [vmem:[%s2 + $0x212] sm:$0xff]
  %v5618 = vld [vmem:[%s2 + $0x21a] sm:$0xff]
  %v5619 = vld [vmem:[%s2 + $0x22a] sm:$0xff]
  %v5620 = vld [vmem:[%s2 + $0x232] sm:$0xff]
  %v5621 = vld [vmem:[%s2 + $0x242] sm:$0xff]
  %v5622 = vld [vmem:[%s2 + $0x24a] sm:$0xff]
  %v5623 = vld [vmem:[%s2 + $0x25a] sm:$0xff]
  %v5624 = vld [vmem:[%s2 + $0x262] sm:$0xff]
  %v5625 = vld [vmem:[%s2 + $0x272] sm:$0xff]
  %v5626 = vld [vmem:[%s2 + $0x27a] sm:$0xff]
  %v5627 = vld [vmem:[%s2 + $0x28a] sm:$0xff]
  %v5628 = vld [vmem:[%s2 + $0x292] sm:$0xff]
  %v5629 = vld [vmem:[%s2 + $0x2a2] sm:$0xff]
  %v5630 = vld [vmem:[%s2 + $0x2aa] sm:$0xff]
  %v5631 = vld [vmem:[%s2 + $0x2ba] sm:$0xff]
  %v5632 = vld [vmem:[%s2 + $0x2c2] sm:$0xff]
  %v5633 = vld [vmem:[%s2 + $0x2d2] sm:$0xff]
  %v5634 = vld [vmem:[%s2 + $0x2da] sm:$0xff]
  %v5635 = vld [vmem:[%s2 + $0x2ea] sm:$0xff]
  %v5636 = vld [vmem:[%s2 + $0x2f2] sm:$0xff]
  %s5637 = scalar_lea.vmem %s3, 32
  %v5638 = vld [vmem:[%s5637] sm:$0xf]
  %v5640 = vsel %vm151, %v5573, 0
  %v5643 = vsel %vm151, %v5574, 0
  %v5646 = vsel %vm151, %v5575, 0
  %v5649 = vsel %vm151, %v5576, 0
  %v5652 = vsel %vm151, %v5577, 0
  %v5655 = vsel %vm151, %v5578, 0
  %v5658 = vsel %vm151, %v5579, 0
  %v5661 = vsel %vm151, %v5580, 0
  %v5664 = vsel %vm151, %v5581, 0
  %v5667 = vsel %vm151, %v5582, 0
  %v5670 = vsel %vm151, %v5583, 0
  %v5673 = vsel %vm151, %v5584, 0
  %v5676 = vsel %vm151, %v5585, 0
  %v5679 = vsel %vm151, %v5586, 0
  %v5682 = vsel %vm151, %v5587, 0
  %v5685 = vsel %vm151, %v5588, 0
  %v5688 = vsel %vm151, %v5589, 0
  %v5691 = vsel %vm151, %v5590, 0
  %v5694 = vsel %vm151, %v5591, 0
  %v5697 = vsel %vm151, %v5592, 0
  %v5700 = vsel %vm151, %v5593, 0
  %v5703 = vsel %vm151, %v5594, 0
  %v5706 = vsel %vm151, %v5595, 0
  %v5709 = vsel %vm151, %v5596, 0
  %v5712 = vsel %vm151, %v5597, 0
  %v5715 = vsel %vm151, %v5598, 0
  %v5718 = vsel %vm151, %v5599, 0
  %v5721 = vsel %vm151, %v5600, 0
  %v5724 = vsel %vm151, %v5601, 0
  %v5727 = vsel %vm151, %v5602, 0
  %v5730 = vsel %vm151, %v5603, 0
  %v5733 = vsel %vm151, %v5604, 0
  %v5736 = vsel %vm151, %v5605, 0
  %v5739 = vsel %vm151, %v5606, 0
  %v5742 = vsel %vm151, %v5607, 0
  %v5745 = vsel %vm151, %v5608, 0
  %v5748 = vsel %vm151, %v5609, 0
  %v5751 = vsel %vm151, %v5610, 0
  %v5754 = vsel %vm151, %v5611, 0
  %v5757 = vsel %vm151, %v5612, 0
  %v5760 = vsel %vm151, %v5613, 0
  %v5763 = vsel %vm151, %v5614, 0
  %v5766 = vsel %vm151, %v5615, 0
  %v5769 = vsel %vm151, %v5616, 0
  %v5772 = vsel %vm151, %v5617, 0
  %v5775 = vsel %vm151, %v5618, 0
  %v5778 = vsel %vm151, %v5619, 0
  %v5781 = vsel %vm151, %v5620, 0
  %v5784 = vsel %vm151, %v5621, 0
  %v5787 = vsel %vm151, %v5622, 0
  %v5790 = vsel %vm151, %v5623, 0
  %v5793 = vsel %vm151, %v5624, 0
  %v5796 = vsel %vm151, %v5625, 0
  %v5799 = vsel %vm151, %v5626, 0
  %v5802 = vsel %vm151, %v5627, 0
  %v5805 = vsel %vm151, %v5628, 0
  %v5808 = vsel %vm151, %v5629, 0
  %v5811 = vsel %vm151, %v5630, 0
  %v5814 = vsel %vm151, %v5631, 0
  %v5817 = vsel %vm151, %v5632, 0
  %v5820 = vsel %vm151, %v5633, 0
  %v5823 = vsel %vm151, %v5634, 0
  %v5826 = vsel %vm151, %v5635, 0
  %v5829 = vsel %vm151, %v5636, 0
  %v5832 = vsel %vm344, %v5638, 0
  %5834 = vmatprep.subr.mxu0 0.0
  %5835 = vmatpush1.msra.mxu0 0.0
  %5836 = vmatprep.subr.mxu0 0.0
  %5837 = vmatpush1.msra.mxu0 0.0
  %5838 = vmatprep.subr.mxu0 0.0
  %5839 = vmatpush1.msra.mxu0 0.0
  %5840 = vmatprep.subr.mxu0 0.0
  %5841 = vmatpush1.msra.mxu0 0.0
  %5842 = vmatprep.subr.mxu0 0.0
  %5843 = vmatpush1.msra.mxu0 0.0
  %5844 = vmatprep.subr.mxu0 0.0
  %5845 = vmatpush1.msra.mxu0 0.0
  %5846 = vmatprep.subr.mxu0 0.0
  %5847 = vmatpush1.msra.mxu0 0.0
  %5848 = vmatprep.subr.mxu0 0.0
  %5849 = vmatpush1.msra.mxu0 0.0
  %5850 = vmatprep.subr.mxu0 0.0
  %5851 = vmatpush1.msra.mxu0 0.0
  %5852 = vmatprep.subr.mxu0 0.0
  %5853 = vmatpush1.msra.mxu0 0.0
  %5854 = vmatprep.subr.mxu0 0.0
  %5855 = vmatpush1.msra.mxu0 0.0
  %5856 = vmatprep.subr.mxu0 0.0
  %5857 = vmatpush1.msra.mxu0 0.0
  %5858 = vmatprep.subr.mxu0 0.0
  %5859 = vmatpush1.msra.mxu0 0.0
  %5860 = vmatprep.subr.mxu0 0.0
  %5861 = vmatpush1.msra.mxu0 0.0
  %5862 = vmatprep.subr.mxu0 0.0
  %5863 = vmatpush1.msra.mxu0 0.0
  %5864 = vmatprep.subr.mxu0 0.0
  %5865 = vmatpush1.msra.mxu0 %v5832
  %5866 = vmatprep.subr.mxu0 0.0
  %5867 = vmatpush2.msra.mxu0 0.0
  %5868 = vmatprep.subr.mxu0 0.0
  %5869 = vmatpush2.msra.mxu0 0.0
  %5870 = vmatprep.subr.mxu0 0.0
  %5871 = vmatpush2.msra.mxu0 0.0
  %5872 = vmatprep.subr.mxu0 0.0
  %5873 = vmatpush2.msra.mxu0 0.0
  %5874 = vmatprep.subr.mxu0 0.0
  %5875 = vmatpush2.msra.mxu0 0.0
  %5876 = vmatprep.subr.mxu0 0.0
  %5877 = vmatpush2.msra.mxu0 0.0
  %5878 = vmatprep.subr.mxu0 0.0
  %5879 = vmatpush2.msra.mxu0 0.0
  %5880 = vmatprep.subr.mxu0 0.0
  %5881 = vmatpush2.msra.mxu0 0.0
  %5882 = vmatprep.subr.mxu0 0.0
  %5883 = vmatpush2.msra.mxu0 0.0
  %5884 = vmatprep.subr.mxu0 0.0
  %5885 = vmatpush2.msra.mxu0 0.0
  %5886 = vmatprep.subr.mxu0 0.0
  %5887 = vmatpush2.msra.mxu0 0.0
  %5888 = vmatprep.subr.mxu0 0.0
  %5889 = vmatpush2.msra.mxu0 0.0
  %5890 = vmatprep.subr.mxu0 0.0
  %5891 = vmatpush2.msra.mxu0 0.0
  %5892 = vmatprep.subr.mxu0 0.0
  %5893 = vmatpush2.msra.mxu0 0.0
  %5894 = vmatprep.subr.mxu0 0.0
  %5895 = vmatpush2.msra.mxu0 0.0
  %5896 = vmatprep.subr.mxu0 0.0
  %5897 = vmatpush2.msra.mxu0 0.0
  %5898 = vmatprep.mubr.f32.mxu0 0.0
  %5899 = vmatmul.mubr.f32.gmra.mxu0 %v5640
  %v5900 = vpop.f32.mrf.mxu0
  %v5901 = vadd.f32 0.0, %v5900
  %v5902 = vpop.f32.mrf.mxu0
  %5903 = vmatprep.mubr.f32.mxu0 0.0
  %5904 = vmatmul.mubr.f32.gmra.mxu0 %v5643
  %v5905 = vpop.f32.mrf.mxu0
  %v5906 = vadd.f32 0.0, %v5905
  %v5907 = vpop.f32.mrf.mxu0
  %5908 = vmatprep.mubr.f32.mxu0 0.0
  %5909 = vmatmul.mubr.f32.gmra.mxu0 %v5646
  %v5910 = vpop.f32.mrf.mxu0
  %v5911 = vadd.f32 0.0, %v5910
  %v5912 = vpop.f32.mrf.mxu0
  %5913 = vmatprep.mubr.f32.mxu0 0.0
  %5914 = vmatmul.mubr.f32.gmra.mxu0 %v5649
  %v5915 = vpop.f32.mrf.mxu0
  %v5916 = vadd.f32 0.0, %v5915
  %v5917 = vpop.f32.mrf.mxu0
  %5918 = vmatprep.mubr.f32.mxu0 0.0
  %5919 = vmatmul.mubr.f32.gmra.mxu0 %v5652
  %v5920 = vpop.f32.mrf.mxu0
  %v5921 = vadd.f32 0.0, %v5920
  %v5922 = vpop.f32.mrf.mxu0
  %5923 = vmatprep.mubr.f32.mxu0 0.0
  %5924 = vmatmul.mubr.f32.gmra.mxu0 %v5655
  %v5925 = vpop.f32.mrf.mxu0
  %v5926 = vadd.f32 0.0, %v5925
  %v5927 = vpop.f32.mrf.mxu0
  %5928 = vmatprep.mubr.f32.mxu0 0.0
  %5929 = vmatmul.mubr.f32.gmra.mxu0 %v5658
  %v5930 = vpop.f32.mrf.mxu0
  %v5931 = vadd.f32 0.0, %v5930
  %v5932 = vpop.f32.mrf.mxu0
  %5933 = vmatprep.mubr.f32.mxu0 0.0
  %5934 = vmatmul.mubr.f32.gmra.mxu0 %v5661
  %v5935 = vpop.f32.mrf.mxu0
  %v5936 = vadd.f32 0.0, %v5935
  %v5937 = vpop.f32.mrf.mxu0
  %5938 = vmatprep.mubr.f32.mxu0 0.0
  %5939 = vmatmul.mubr.f32.gmra.mxu0 %v5664
  %v5940 = vpop.f32.mrf.mxu0
  %v5941 = vadd.f32 0.0, %v5940
  %v5942 = vpop.f32.mrf.mxu0
  %5943 = vmatprep.mubr.f32.mxu0 0.0
  %5944 = vmatmul.mubr.f32.gmra.mxu0 %v5667
  %v5945 = vpop.f32.mrf.mxu0
  %v5946 = vadd.f32 0.0, %v5945
  %v5947 = vpop.f32.mrf.mxu0
  %5948 = vmatprep.mubr.f32.mxu0 0.0
  %5949 = vmatmul.mubr.f32.gmra.mxu0 %v5670
  %v5950 = vpop.f32.mrf.mxu0
  %v5951 = vadd.f32 0.0, %v5950
  %v5952 = vpop.f32.mrf.mxu0
  %5953 = vmatprep.mubr.f32.mxu0 0.0
  %5954 = vmatmul.mubr.f32.gmra.mxu0 %v5673
  %v5955 = vpop.f32.mrf.mxu0
  %v5956 = vadd.f32 0.0, %v5955
  %v5957 = vpop.f32.mrf.mxu0
  %5958 = vmatprep.mubr.f32.mxu0 0.0
  %5959 = vmatmul.mubr.f32.gmra.mxu0 %v5676
  %v5960 = vpop.f32.mrf.mxu0
  %v5961 = vadd.f32 0.0, %v5960
  %v5962 = vpop.f32.mrf.mxu0
  %5963 = vmatprep.mubr.f32.mxu0 0.0
  %5964 = vmatmul.mubr.f32.gmra.mxu0 %v5679
  %v5965 = vpop.f32.mrf.mxu0
  %v5966 = vadd.f32 0.0, %v5965
  %v5967 = vpop.f32.mrf.mxu0
  %5968 = vmatprep.mubr.f32.mxu0 0.0
  %5969 = vmatmul.mubr.f32.gmra.mxu0 %v5682
  %v5970 = vpop.f32.mrf.mxu0
  %v5971 = vadd.f32 0.0, %v5970
  %v5972 = vpop.f32.mrf.mxu0
  %5973 = vmatprep.mubr.f32.mxu0 0.0
  %5974 = vmatmul.mubr.f32.gmra.mxu0 %v5685
  %v5975 = vpop.f32.mrf.mxu0
  %v5976 = vadd.f32 0.0, %v5975
  %v5977 = vpop.f32.mrf.mxu0
  %5978 = vmatprep.mubr.f32.mxu0 0.0
  %5979 = vmatmul.mubr.f32.gmra.mxu0 %v5688
  %v5980 = vpop.f32.mrf.mxu0
  %v5981 = vadd.f32 0.0, %v5980
  %v5982 = vpop.f32.mrf.mxu0
  %5983 = vmatprep.mubr.f32.mxu0 0.0
  %5984 = vmatmul.mubr.f32.gmra.mxu0 %v5691
  %v5985 = vpop.f32.mrf.mxu0
  %v5986 = vadd.f32 0.0, %v5985
  %v5987 = vpop.f32.mrf.mxu0
  %5988 = vmatprep.mubr.f32.mxu0 0.0
  %5989 = vmatmul.mubr.f32.gmra.mxu0 %v5694
  %v5990 = vpop.f32.mrf.mxu0
  %v5991 = vadd.f32 0.0, %v5990
  %v5992 = vpop.f32.mrf.mxu0
  %5993 = vmatprep.mubr.f32.mxu0 0.0
  %5994 = vmatmul.mubr.f32.gmra.mxu0 %v5697
  %v5995 = vpop.f32.mrf.mxu0
  %v5996 = vadd.f32 0.0, %v5995
  %v5997 = vpop.f32.mrf.mxu0
  %5998 = vmatprep.mubr.f32.mxu0 0.0
  %5999 = vmatmul.mubr.f32.gmra.mxu0 %v5700
  %v6000 = vpop.f32.mrf.mxu0
  %v6001 = vadd.f32 0.0, %v6000
  %v6002 = vpop.f32.mrf.mxu0
  %6003 = vmatprep.mubr.f32.mxu0 0.0
  %6004 = vmatmul.mubr.f32.gmra.mxu0 %v5703
  %v6005 = vpop.f32.mrf.mxu0
  %v6006 = vadd.f32 0.0, %v6005
  %v6007 = vpop.f32.mrf.mxu0
  %6008 = vmatprep.mubr.f32.mxu0 0.0
  %6009 = vmatmul.mubr.f32.gmra.mxu0 %v5706
  %v6010 = vpop.f32.mrf.mxu0
  %v6011 = vadd.f32 0.0, %v6010
  %v6012 = vpop.f32.mrf.mxu0
  %6013 = vmatprep.mubr.f32.mxu0 0.0
  %6014 = vmatmul.mubr.f32.gmra.mxu0 %v5709
  %v6015 = vpop.f32.mrf.mxu0
  %v6016 = vadd.f32 0.0, %v6015
  %v6017 = vpop.f32.mrf.mxu0
  %6018 = vmatprep.mubr.f32.mxu0 0.0
  %6019 = vmatmul.mubr.f32.gmra.mxu0 %v5712
  %v6020 = vpop.f32.mrf.mxu0
  %v6021 = vadd.f32 0.0, %v6020
  %v6022 = vpop.f32.mrf.mxu0
  %6023 = vmatprep.mubr.f32.mxu0 0.0
  %6024 = vmatmul.mubr.f32.gmra.mxu0 %v5715
  %v6025 = vpop.f32.mrf.mxu0
  %v6026 = vadd.f32 0.0, %v6025
  %v6027 = vpop.f32.mrf.mxu0
  %6028 = vmatprep.mubr.f32.mxu0 0.0
  %6029 = vmatmul.mubr.f32.gmra.mxu0 %v5718
  %v6030 = vpop.f32.mrf.mxu0
  %v6031 = vadd.f32 0.0, %v6030
  %v6032 = vpop.f32.mrf.mxu0
  %6033 = vmatprep.mubr.f32.mxu0 0.0
  %6034 = vmatmul.mubr.f32.gmra.mxu0 %v5721
  %v6035 = vpop.f32.mrf.mxu0
  %v6036 = vadd.f32 0.0, %v6035
  %v6037 = vpop.f32.mrf.mxu0
  %6038 = vmatprep.mubr.f32.mxu0 0.0
  %6039 = vmatmul.mubr.f32.gmra.mxu0 %v5724
  %v6040 = vpop.f32.mrf.mxu0
  %v6041 = vadd.f32 0.0, %v6040
  %v6042 = vpop.f32.mrf.mxu0
  %6043 = vmatprep.mubr.f32.mxu0 0.0
  %6044 = vmatmul.mubr.f32.gmra.mxu0 %v5727
  %v6045 = vpop.f32.mrf.mxu0
  %v6046 = vadd.f32 0.0, %v6045
  %v6047 = vpop.f32.mrf.mxu0
  %6048 = vmatprep.mubr.f32.mxu0 0.0
  %6049 = vmatmul.mubr.f32.gmra.mxu0 %v5730
  %v6050 = vpop.f32.mrf.mxu0
  %v6051 = vadd.f32 0.0, %v6050
  %v6052 = vpop.f32.mrf.mxu0
  %6053 = vmatprep.mubr.f32.mxu0 0.0
  %6054 = vmatmul.mubr.f32.gmra.mxu0 %v5733
  %v6055 = vpop.f32.mrf.mxu0
  %v6056 = vadd.f32 0.0, %v6055
  %v6057 = vpop.f32.mrf.mxu0
  %6058 = vmatprep.mubr.f32.mxu0 0.0
  %6059 = vmatmul.mubr.f32.gmra.mxu0 %v5736
  %v6060 = vpop.f32.mrf.mxu0
  %v6061 = vadd.f32 0.0, %v6060
  %v6062 = vpop.f32.mrf.mxu0
  %6063 = vmatprep.mubr.f32.mxu0 0.0
  %6064 = vmatmul.mubr.f32.gmra.mxu0 %v5739
  %v6065 = vpop.f32.mrf.mxu0
  %v6066 = vadd.f32 0.0, %v6065
  %v6067 = vpop.f32.mrf.mxu0
  %6068 = vmatprep.mubr.f32.mxu0 0.0
  %6069 = vmatmul.mubr.f32.gmra.mxu0 %v5742
  %v6070 = vpop.f32.mrf.mxu0
  %v6071 = vadd.f32 0.0, %v6070
  %v6072 = vpop.f32.mrf.mxu0
  %6073 = vmatprep.mubr.f32.mxu0 0.0
  %6074 = vmatmul.mubr.f32.gmra.mxu0 %v5745
  %v6075 = vpop.f32.mrf.mxu0
  %v6076 = vadd.f32 0.0, %v6075
  %v6077 = vpop.f32.mrf.mxu0
  %6078 = vmatprep.mubr.f32.mxu0 0.0
  %6079 = vmatmul.mubr.f32.gmra.mxu0 %v5748
  %v6080 = vpop.f32.mrf.mxu0
  %v6081 = vadd.f32 0.0, %v6080
  %v6082 = vpop.f32.mrf.mxu0
  %6083 = vmatprep.mubr.f32.mxu0 0.0
  %6084 = vmatmul.mubr.f32.gmra.mxu0 %v5751
  %v6085 = vpop.f32.mrf.mxu0
  %v6086 = vadd.f32 0.0, %v6085
  %v6087 = vpop.f32.mrf.mxu0
  %6088 = vmatprep.mubr.f32.mxu0 0.0
  %6089 = vmatmul.mubr.f32.gmra.mxu0 %v5754
  %v6090 = vpop.f32.mrf.mxu0
  %v6091 = vadd.f32 0.0, %v6090
  %v6092 = vpop.f32.mrf.mxu0
  %6093 = vmatprep.mubr.f32.mxu0 0.0
  %6094 = vmatmul.mubr.f32.gmra.mxu0 %v5757
  %v6095 = vpop.f32.mrf.mxu0
  %v6096 = vadd.f32 0.0, %v6095
  %v6097 = vpop.f32.mrf.mxu0
  %6098 = vmatprep.mubr.f32.mxu0 0.0
  %6099 = vmatmul.mubr.f32.gmra.mxu0 %v5760
  %v6100 = vpop.f32.mrf.mxu0
  %v6101 = vadd.f32 0.0, %v6100
  %v6102 = vpop.f32.mrf.mxu0
  %6103 = vmatprep.mubr.f32.mxu0 0.0
  %6104 = vmatmul.mubr.f32.gmra.mxu0 %v5763
  %v6105 = vpop.f32.mrf.mxu0
  %v6106 = vadd.f32 0.0, %v6105
  %v6107 = vpop.f32.mrf.mxu0
  %6108 = vmatprep.mubr.f32.mxu0 0.0
  %6109 = vmatmul.mubr.f32.gmra.mxu0 %v5766
  %v6110 = vpop.f32.mrf.mxu0
  %v6111 = vadd.f32 0.0, %v6110
  %v6112 = vpop.f32.mrf.mxu0
  %6113 = vmatprep.mubr.f32.mxu0 0.0
  %6114 = vmatmul.mubr.f32.gmra.mxu0 %v5769
  %v6115 = vpop.f32.mrf.mxu0
  %v6116 = vadd.f32 0.0, %v6115
  %v6117 = vpop.f32.mrf.mxu0
  %6118 = vmatprep.mubr.f32.mxu0 0.0
  %6119 = vmatmul.mubr.f32.gmra.mxu0 %v5772
  %v6120 = vpop.f32.mrf.mxu0
  %v6121 = vadd.f32 0.0, %v6120
  %v6122 = vpop.f32.mrf.mxu0
  %6123 = vmatprep.mubr.f32.mxu0 0.0
  %6124 = vmatmul.mubr.f32.gmra.mxu0 %v5775
  %v6125 = vpop.f32.mrf.mxu0
  %v6126 = vadd.f32 0.0, %v6125
  %v6127 = vpop.f32.mrf.mxu0
  %6128 = vmatprep.mubr.f32.mxu0 0.0
  %6129 = vmatmul.mubr.f32.gmra.mxu0 %v5778
  %v6130 = vpop.f32.mrf.mxu0
  %v6131 = vadd.f32 0.0, %v6130
  %v6132 = vpop.f32.mrf.mxu0
  %6133 = vmatprep.mubr.f32.mxu0 0.0
  %6134 = vmatmul.mubr.f32.gmra.mxu0 %v5781
  %v6135 = vpop.f32.mrf.mxu0
  %v6136 = vadd.f32 0.0, %v6135
  %v6137 = vpop.f32.mrf.mxu0
  %6138 = vmatprep.mubr.f32.mxu0 0.0
  %6139 = vmatmul.mubr.f32.gmra.mxu0 %v5784
  %v6140 = vpop.f32.mrf.mxu0
  %v6141 = vadd.f32 0.0, %v6140
  %v6142 = vpop.f32.mrf.mxu0
  %6143 = vmatprep.mubr.f32.mxu0 0.0
  %6144 = vmatmul.mubr.f32.gmra.mxu0 %v5787
  %v6145 = vpop.f32.mrf.mxu0
  %v6146 = vadd.f32 0.0, %v6145
  %v6147 = vpop.f32.mrf.mxu0
  %6148 = vmatprep.mubr.f32.mxu0 0.0
  %6149 = vmatmul.mubr.f32.gmra.mxu0 %v5790
  %v6150 = vpop.f32.mrf.mxu0
  %v6151 = vadd.f32 0.0, %v6150
  %v6152 = vpop.f32.mrf.mxu0
  %6153 = vmatprep.mubr.f32.mxu0 0.0
  %6154 = vmatmul.mubr.f32.gmra.mxu0 %v5793
  %v6155 = vpop.f32.mrf.mxu0
  %v6156 = vadd.f32 0.0, %v6155
  %v6157 = vpop.f32.mrf.mxu0
  %6158 = vmatprep.mubr.f32.mxu0 0.0
  %6159 = vmatmul.mubr.f32.gmra.mxu0 %v5796
  %v6160 = vpop.f32.mrf.mxu0
  %v6161 = vadd.f32 0.0, %v6160
  %v6162 = vpop.f32.mrf.mxu0
  %6163 = vmatprep.mubr.f32.mxu0 0.0
  %6164 = vmatmul.mubr.f32.gmra.mxu0 %v5799
  %v6165 = vpop.f32.mrf.mxu0
  %v6166 = vadd.f32 0.0, %v6165
  %v6167 = vpop.f32.mrf.mxu0
  %6168 = vmatprep.mubr.f32.mxu0 0.0
  %6169 = vmatmul.mubr.f32.gmra.mxu0 %v5802
  %v6170 = vpop.f32.mrf.mxu0
  %v6171 = vadd.f32 0.0, %v6170
  %v6172 = vpop.f32.mrf.mxu0
  %6173 = vmatprep.mubr.f32.mxu0 0.0
  %6174 = vmatmul.mubr.f32.gmra.mxu0 %v5805
  %v6175 = vpop.f32.mrf.mxu0
  %v6176 = vadd.f32 0.0, %v6175
  %v6177 = vpop.f32.mrf.mxu0
  %6178 = vmatprep.mubr.f32.mxu0 0.0
  %6179 = vmatmul.mubr.f32.gmra.mxu0 %v5808
  %v6180 = vpop.f32.mrf.mxu0
  %v6181 = vadd.f32 0.0, %v6180
  %v6182 = vpop.f32.mrf.mxu0
  %6183 = vmatprep.mubr.f32.mxu0 0.0
  %6184 = vmatmul.mubr.f32.gmra.mxu0 %v5811
  %v6185 = vpop.f32.mrf.mxu0
  %v6186 = vadd.f32 0.0, %v6185
  %v6187 = vpop.f32.mrf.mxu0
  %6188 = vmatprep.mubr.f32.mxu0 0.0
  %6189 = vmatmul.mubr.f32.gmra.mxu0 %v5814
  %v6190 = vpop.f32.mrf.mxu0
  %v6191 = vadd.f32 0.0, %v6190
  %v6192 = vpop.f32.mrf.mxu0
  %6193 = vmatprep.mubr.f32.mxu0 0.0
  %6194 = vmatmul.mubr.f32.gmra.mxu0 %v5817
  %v6195 = vpop.f32.mrf.mxu0
  %v6196 = vadd.f32 0.0, %v6195
  %v6197 = vpop.f32.mrf.mxu0
  %6198 = vmatprep.mubr.f32.mxu0 0.0
  %6199 = vmatmul.mubr.f32.gmra.mxu0 %v5820
  %v6200 = vpop.f32.mrf.mxu0
  %v6201 = vadd.f32 0.0, %v6200
  %v6202 = vpop.f32.mrf.mxu0
  %6203 = vmatprep.mubr.f32.mxu0 0.0
  %6204 = vmatmul.mubr.f32.gmra.mxu0 %v5823
  %v6205 = vpop.f32.mrf.mxu0
  %v6206 = vadd.f32 0.0, %v6205
  %v6207 = vpop.f32.mrf.mxu0
  %6208 = vmatprep.mubr.f32.mxu0 0.0
  %6209 = vmatmul.mubr.f32.gmra.mxu0 %v5826
  %v6210 = vpop.f32.mrf.mxu0
  %v6211 = vadd.f32 0.0, %v6210
  %v6212 = vpop.f32.mrf.mxu0
  %6213 = vmatprep.mubr.f32.mxu0 0.0
  %6214 = vmatmul.mubr.f32.gmra.mxu0 %v5829
  %v6215 = vpop.f32.mrf.mxu0
  %v6216 = vadd.f32 0.0, %v6215
  %v6217 = vpop.f32.mrf.mxu0
  %6218 = vdwg.mxu0
  %v6219 = vadd.f32 %v5509, %v5901
  %v6220 = vadd.f32 %v5510, %v5906
  %v6221 = vadd.f32 %v5511, %v5911
  %v6222 = vadd.f32 %v5512, %v5916
  %v6223 = vadd.f32 %v5513, %v5921
  %v6224 = vadd.f32 %v5514, %v5926
  %v6225 = vadd.f32 %v5515, %v5931
  %v6226 = vadd.f32 %v5516, %v5936
  %v6227 = vadd.f32 %v5517, %v5941
  %v6228 = vadd.f32 %v5518, %v5946
  %v6229 = vadd.f32 %v5519, %v5951
  %v6230 = vadd.f32 %v5520, %v5956
  %v6231 = vadd.f32 %v5521, %v5961
  %v6232 = vadd.f32 %v5522, %v5966
  %v6233 = vadd.f32 %v5523, %v5971
  %v6234 = vadd.f32 %v5524, %v5976
  %v6235 = vadd.f32 %v5525, %v5981
  %v6236 = vadd.f32 %v5526, %v5986
  %v6237 = vadd.f32 %v5527, %v5991
  %v6238 = vadd.f32 %v5528, %v5996
  %v6239 = vadd.f32 %v5529, %v6001
  %v6240 = vadd.f32 %v5530, %v6006
  %v6241 = vadd.f32 %v5531, %v6011
  %v6242 = vadd.f32 %v5532, %v6016
  %v6243 = vadd.f32 %v5533, %v6021
  %v6244 = vadd.f32 %v5534, %v6026
  %v6245 = vadd.f32 %v5535, %v6031
  %v6246 = vadd.f32 %v5536, %v6036
  %v6247 = vadd.f32 %v5537, %v6041
  %v6248 = vadd.f32 %v5538, %v6046
  %v6249 = vadd.f32 %v5539, %v6051
  %v6250 = vadd.f32 %v5540, %v6056
  %v6251 = vadd.f32 %v5541, %v6061
  %v6252 = vadd.f32 %v5542, %v6066
  %v6253 = vadd.f32 %v5543, %v6071
  %v6254 = vadd.f32 %v5544, %v6076
  %v6255 = vadd.f32 %v5545, %v6081
  %v6256 = vadd.f32 %v5546, %v6086
  %v6257 = vadd.f32 %v5547, %v6091
  %v6258 = vadd.f32 %v5548, %v6096
  %v6259 = vadd.f32 %v5549, %v6101
  %v6260 = vadd.f32 %v5550, %v6106
  %v6261 = vadd.f32 %v5551, %v6111
  %v6262 = vadd.f32 %v5552, %v6116
  %v6263 = vadd.f32 %v5553, %v6121
  %v6264 = vadd.f32 %v5554, %v6126
  %v6265 = vadd.f32 %v5555, %v6131
  %v6266 = vadd.f32 %v5556, %v6136
  %v6267 = vadd.f32 %v5557, %v6141
  %v6268 = vadd.f32 %v5558, %v6146
  %v6269 = vadd.f32 %v5559, %v6151
  %v6270 = vadd.f32 %v5560, %v6156
  %v6271 = vadd.f32 %v5561, %v6161
  %v6272 = vadd.f32 %v5562, %v6166
  %v6273 = vadd.f32 %v5563, %v6171
  %v6274 = vadd.f32 %v5564, %v6176
  %v6275 = vadd.f32 %v5565, %v6181
  %v6276 = vadd.f32 %v5566, %v6186
  %v6277 = vadd.f32 %v5567, %v6191
  %v6278 = vadd.f32 %v5568, %v6196
  %v6279 = vadd.f32 %v5569, %v6201
  %v6280 = vadd.f32 %v5570, %v6206
  %v6281 = vadd.f32 %v5571, %v6211
  %v6282 = vadd.f32 %v5572, %v6216
  %v6283 = vld [vmem:[%s4] sm:$0x1]
  %v6285 = vlaneseq
  %v6286 = vshrl.u32 %v6285, 7
  %v6287 = vsub.s32 0, %v6286
  %v6288 = vrot.slane %v6283, %v6287
  %v6290 = vadd.f32 %v6219, %v6288
  %v6291 = vadd.f32 %v6220, %v6288
  %v6292 = vadd.f32 %v6221, %v6288
  %v6293 = vadd.f32 %v6222, %v6288
  %v6294 = vadd.f32 %v6223, %v6288
  %v6295 = vadd.f32 %v6224, %v6288
  %v6296 = vadd.f32 %v6225, %v6288
  %v6297 = vadd.f32 %v6226, %v6288
  %v6298 = vadd.f32 %v6227, %v6288
  %v6299 = vadd.f32 %v6228, %v6288
  %v6300 = vadd.f32 %v6229, %v6288
  %v6301 = vadd.f32 %v6230, %v6288
  %v6302 = vadd.f32 %v6231, %v6288
  %v6303 = vadd.f32 %v6232, %v6288
  %v6304 = vadd.f32 %v6233, %v6288
  %v6305 = vadd.f32 %v6234, %v6288
  %v6306 = vadd.f32 %v6235, %v6288
  %v6307 = vadd.f32 %v6236, %v6288
  %v6308 = vadd.f32 %v6237, %v6288
  %v6309 = vadd.f32 %v6238, %v6288
  %v6310 = vadd.f32 %v6239, %v6288
  %v6311 = vadd.f32 %v6240, %v6288
  %v6312 = vadd.f32 %v6241, %v6288
  %v6313 = vadd.f32 %v6242, %v6288
  %v6314 = vadd.f32 %v6243, %v6288
  %v6315 = vadd.f32 %v6244, %v6288
  %v6316 = vadd.f32 %v6245, %v6288
  %v6317 = vadd.f32 %v6246, %v6288
  %v6318 = vadd.f32 %v6247, %v6288
  %v6319 = vadd.f32 %v6248, %v6288
  %v6320 = vadd.f32 %v6249, %v6288
  %v6321 = vadd.f32 %v6250, %v6288
  %v6322 = vadd.f32 %v6251, %v6288
  %v6323 = vadd.f32 %v6252, %v6288
  %v6324 = vadd.f32 %v6253, %v6288
  %v6325 = vadd.f32 %v6254, %v6288
  %v6326 = vadd.f32 %v6255, %v6288
  %v6327 = vadd.f32 %v6256, %v6288
  %v6328 = vadd.f32 %v6257, %v6288
  %v6329 = vadd.f32 %v6258, %v6288
  %v6330 = vadd.f32 %v6259, %v6288
  %v6331 = vadd.f32 %v6260, %v6288
  %v6332 = vadd.f32 %v6261, %v6288
  %v6333 = vadd.f32 %v6262, %v6288
  %v6334 = vadd.f32 %v6263, %v6288
  %v6335 = vadd.f32 %v6264, %v6288
  %v6336 = vadd.f32 %v6265, %v6288
  %v6337 = vadd.f32 %v6266, %v6288
  %v6338 = vadd.f32 %v6267, %v6288
  %v6339 = vadd.f32 %v6268, %v6288
  %v6340 = vadd.f32 %v6269, %v6288
  %v6341 = vadd.f32 %v6270, %v6288
  %v6342 = vadd.f32 %v6271, %v6288
  %v6343 = vadd.f32 %v6272, %v6288
  %v6344 = vadd.f32 %v6273, %v6288
  %v6345 = vadd.f32 %v6274, %v6288
  %v6346 = vadd.f32 %v6275, %v6288
  %v6347 = vadd.f32 %v6276, %v6288
  %v6348 = vadd.f32 %v6277, %v6288
  %v6349 = vadd.f32 %v6278, %v6288
  %v6350 = vadd.f32 %v6279, %v6288
  %v6351 = vadd.f32 %v6280, %v6288
  %v6352 = vadd.f32 %v6281, %v6288
  %v6353 = vadd.f32 %v6282, %v6288
  %vm6354 = vcmp.ge.f32.partialorder %v6290, 0.0
  %vm6355 = vcmp.ge.f32.partialorder %v6291, 0.0
  %vm6356 = vcmp.ge.f32.partialorder %v6292, 0.0
  %vm6357 = vcmp.ge.f32.partialorder %v6293, 0.0
  %vm6358 = vcmp.ge.f32.partialorder %v6294, 0.0
  %vm6359 = vcmp.ge.f32.partialorder %v6295, 0.0
  %vm6360 = vcmp.ge.f32.partialorder %v6296, 0.0
  %vm6361 = vcmp.ge.f32.partialorder %v6297, 0.0
  %vm6362 = vcmp.ge.f32.partialorder %v6298, 0.0
  %vm6363 = vcmp.ge.f32.partialorder %v6299, 0.0
  %vm6364 = vcmp.ge.f32.partialorder %v6300, 0.0
  %vm6365 = vcmp.ge.f32.partialorder %v6301, 0.0
  %vm6366 = vcmp.ge.f32.partialorder %v6302, 0.0
  %vm6367 = vcmp.ge.f32.partialorder %v6303, 0.0
  %vm6368 = vcmp.ge.f32.partialorder %v6304, 0.0
  %vm6369 = vcmp.ge.f32.partialorder %v6305, 0.0
  %vm6370 = vcmp.ge.f32.partialorder %v6306, 0.0
  %vm6371 = vcmp.ge.f32.partialorder %v6307, 0.0
  %vm6372 = vcmp.ge.f32.partialorder %v6308, 0.0
  %vm6373 = vcmp.ge.f32.partialorder %v6309, 0.0
  %vm6374 = vcmp.ge.f32.partialorder %v6310, 0.0
  %vm6375 = vcmp.ge.f32.partialorder %v6311, 0.0
  %vm6376 = vcmp.ge.f32.partialorder %v6312, 0.0
  %vm6377 = vcmp.ge.f32.partialorder %v6313, 0.0
  %vm6378 = vcmp.ge.f32.partialorder %v6314, 0.0
  %vm6379 = vcmp.ge.f32.partialorder %v6315, 0.0
  %vm6380 = vcmp.ge.f32.partialorder %v6316, 0.0
  %vm6381 = vcmp.ge.f32.partialorder %v6317, 0.0
  %vm6382 = vcmp.ge.f32.partialorder %v6318, 0.0
  %vm6383 = vcmp.ge.f32.partialorder %v6319, 0.0
  %vm6384 = vcmp.ge.f32.partialorder %v6320, 0.0
  %vm6385 = vcmp.ge.f32.partialorder %v6321, 0.0
  %vm6386 = vcmp.ge.f32.partialorder %v6322, 0.0
  %vm6387 = vcmp.ge.f32.partialorder %v6323, 0.0
  %vm6388 = vcmp.ge.f32.partialorder %v6324, 0.0
  %vm6389 = vcmp.ge.f32.partialorder %v6325, 0.0
  %vm6390 = vcmp.ge.f32.partialorder %v6326, 0.0
  %vm6391 = vcmp.ge.f32.partialorder %v6327, 0.0
  %vm6392 = vcmp.ge.f32.partialorder %v6328, 0.0
  %vm6393 = vcmp.ge.f32.partialorder %v6329, 0.0
  %vm6394 = vcmp.ge.f32.partialorder %v6330, 0.0
  %vm6395 = vcmp.ge.f32.partialorder %v6331, 0.0
  %vm6396 = vcmp.ge.f32.partialorder %v6332, 0.0
  %vm6397 = vcmp.ge.f32.partialorder %v6333, 0.0
  %vm6398 = vcmp.ge.f32.partialorder %v6334, 0.0
  %vm6399 = vcmp.ge.f32.partialorder %v6335, 0.0
  %vm6400 = vcmp.ge.f32.partialorder %v6336, 0.0
  %vm6401 = vcmp.ge.f32.partialorder %v6337, 0.0
  %vm6402 = vcmp.ge.f32.partialorder %v6338, 0.0
  %vm6403 = vcmp.ge.f32.partialorder %v6339, 0.0
  %vm6404 = vcmp.ge.f32.partialorder %v6340, 0.0
  %vm6405 = vcmp.ge.f32.partialorder %v6341, 0.0
  %vm6406 = vcmp.ge.f32.partialorder %v6342, 0.0
  %vm6407 = vcmp.ge.f32.partialorder %v6343, 0.0
  %vm6408 = vcmp.ge.f32.partialorder %v6344, 0.0
  %vm6409 = vcmp.ge.f32.partialorder %v6345, 0.0
  %vm6410 = vcmp.ge.f32.partialorder %v6346, 0.0
  %vm6411 = vcmp.ge.f32.partialorder %v6347, 0.0
  %vm6412 = vcmp.ge.f32.partialorder %v6348, 0.0
  %vm6413 = vcmp.ge.f32.partialorder %v6349, 0.0
  %vm6414 = vcmp.ge.f32.partialorder %v6350, 0.0
  %vm6415 = vcmp.ge.f32.partialorder %v6351, 0.0
  %vm6416 = vcmp.ge.f32.partialorder %v6352, 0.0
  %vm6417 = vcmp.ge.f32.partialorder %v6353, 0.0
  %v6418 = vmul.f32 %v6290, 0.25
  %v6419 = vmul.f32 %v6291, 0.25
  %v6420 = vmul.f32 %v6292, 0.25
  %v6421 = vmul.f32 %v6293, 0.25
  %v6422 = vmul.f32 %v6294, 0.25
  %v6423 = vmul.f32 %v6295, 0.25
  %v6424 = vmul.f32 %v6296, 0.25
  %v6425 = vmul.f32 %v6297, 0.25
  %v6426 = vmul.f32 %v6298, 0.25
  %v6427 = vmul.f32 %v6299, 0.25
  %v6428 = vmul.f32 %v6300, 0.25
  %v6429 = vmul.f32 %v6301, 0.25
  %v6430 = vmul.f32 %v6302, 0.25
  %v6431 = vmul.f32 %v6303, 0.25
  %v6432 = vmul.f32 %v6304, 0.25
  %v6433 = vmul.f32 %v6305, 0.25
  %v6434 = vmul.f32 %v6306, 0.25
  %v6435 = vmul.f32 %v6307, 0.25
  %v6436 = vmul.f32 %v6308, 0.25
  %v6437 = vmul.f32 %v6309, 0.25
  %v6438 = vmul.f32 %v6310, 0.25
  %v6439 = vmul.f32 %v6311, 0.25
  %v6440 = vmul.f32 %v6312, 0.25
  %v6441 = vmul.f32 %v6313, 0.25
  %v6442 = vmul.f32 %v6314, 0.25
  %v6443 = vmul.f32 %v6315, 0.25
  %v6444 = vmul.f32 %v6316, 0.25
  %v6445 = vmul.f32 %v6317, 0.25
  %v6446 = vmul.f32 %v6318, 0.25
  %v6447 = vmul.f32 %v6319, 0.25
  %v6448 = vmul.f32 %v6320, 0.25
  %v6449 = vmul.f32 %v6321, 0.25
  %v6450 = vmul.f32 %v6322, 0.25
  %v6451 = vmul.f32 %v6323, 0.25
  %v6452 = vmul.f32 %v6324, 0.25
  %v6453 = vmul.f32 %v6325, 0.25
  %v6454 = vmul.f32 %v6326, 0.25
  %v6455 = vmul.f32 %v6327, 0.25
  %v6456 = vmul.f32 %v6328, 0.25
  %v6457 = vmul.f32 %v6329, 0.25
  %v6458 = vmul.f32 %v6330, 0.25
  %v6459 = vmul.f32 %v6331, 0.25
  %v6460 = vmul.f32 %v6332, 0.25
  %v6461 = vmul.f32 %v6333, 0.25
  %v6462 = vmul.f32 %v6334, 0.25
  %v6463 = vmul.f32 %v6335, 0.25
  %v6464 = vmul.f32 %v6336, 0.25
  %v6465 = vmul.f32 %v6337, 0.25
  %v6466 = vmul.f32 %v6338, 0.25
  %v6467 = vmul.f32 %v6339, 0.25
  %v6468 = vmul.f32 %v6340, 0.25
  %v6469 = vmul.f32 %v6341, 0.25
  %v6470 = vmul.f32 %v6342, 0.25
  %v6471 = vmul.f32 %v6343, 0.25
  %v6472 = vmul.f32 %v6344, 0.25
  %v6473 = vmul.f32 %v6345, 0.25
  %v6474 = vmul.f32 %v6346, 0.25
  %v6475 = vmul.f32 %v6347, 0.25
  %v6476 = vmul.f32 %v6348, 0.25
  %v6477 = vmul.f32 %v6349, 0.25
  %v6478 = vmul.f32 %v6350, 0.25
  %v6479 = vmul.f32 %v6351, 0.25
  %v6480 = vmul.f32 %v6352, 0.25
  %v6481 = vmul.f32 %v6353, 0.25
  %v6482 = vsel %vm6354, %v6290, %v6418
  %v6483 = vsel %vm6355, %v6291, %v6419
  %v6484 = vsel %vm6356, %v6292, %v6420
  %v6485 = vsel %vm6357, %v6293, %v6421
  %v6486 = vsel %vm6358, %v6294, %v6422
  %v6487 = vsel %vm6359, %v6295, %v6423
  %v6488 = vsel %vm6360, %v6296, %v6424
  %v6489 = vsel %vm6361, %v6297, %v6425
  %v6490 = vsel %vm6362, %v6298, %v6426
  %v6491 = vsel %vm6363, %v6299, %v6427
  %v6492 = vsel %vm6364, %v6300, %v6428
  %v6493 = vsel %vm6365, %v6301, %v6429
  %v6494 = vsel %vm6366, %v6302, %v6430
  %v6495 = vsel %vm6367, %v6303, %v6431
  %v6496 = vsel %vm6368, %v6304, %v6432
  %v6497 = vsel %vm6369, %v6305, %v6433
  %v6498 = vsel %vm6370, %v6306, %v6434
  %v6499 = vsel %vm6371, %v6307, %v6435
  %v6500 = vsel %vm6372, %v6308, %v6436
  %v6501 = vsel %vm6373, %v6309, %v6437
  %v6502 = vsel %vm6374, %v6310, %v6438
  %v6503 = vsel %vm6375, %v6311, %v6439
  %v6504 = vsel %vm6376, %v6312, %v6440
  %v6505 = vsel %vm6377, %v6313, %v6441
  %v6506 = vsel %vm6378, %v6314, %v6442
  %v6507 = vsel %vm6379, %v6315, %v6443
  %v6508 = vsel %vm6380, %v6316, %v6444
  %v6509 = vsel %vm6381, %v6317, %v6445
  %v6510 = vsel %vm6382, %v6318, %v6446
  %v6511 = vsel %vm6383, %v6319, %v6447
  %v6512 = vsel %vm6384, %v6320, %v6448
  %v6513 = vsel %vm6385, %v6321, %v6449
  %v6514 = vsel %vm6386, %v6322, %v6450
  %v6515 = vsel %vm6387, %v6323, %v6451
  %v6516 = vsel %vm6388, %v6324, %v6452
  %v6517 = vsel %vm6389, %v6325, %v6453
  %v6518 = vsel %vm6390, %v6326, %v6454
  %v6519 = vsel %vm6391, %v6327, %v6455
  %v6520 = vsel %vm6392, %v6328, %v6456
  %v6521 = vsel %vm6393, %v6329, %v6457
  %v6522 = vsel %vm6394, %v6330, %v6458
  %v6523 = vsel %vm6395, %v6331, %v6459
  %v6524 = vsel %vm6396, %v6332, %v6460
  %v6525 = vsel %vm6397, %v6333, %v6461
  %v6526 = vsel %vm6398, %v6334, %v6462
  %v6527 = vsel %vm6399, %v6335, %v6463
  %v6528 = vsel %vm6400, %v6336, %v6464
  %v6529 = vsel %vm6401, %v6337, %v6465
  %v6530 = vsel %vm6402, %v6338, %v6466
  %v6531 = vsel %vm6403, %v6339, %v6467
  %v6532 = vsel %vm6404, %v6340, %v6468
  %v6533 = vsel %vm6405, %v6341, %v6469
  %v6534 = vsel %vm6406, %v6342, %v6470
  %v6535 = vsel %vm6407, %v6343, %v6471
  %v6536 = vsel %vm6408, %v6344, %v6472
  %v6537 = vsel %vm6409, %v6345, %v6473
  %v6538 = vsel %vm6410, %v6346, %v6474
  %v6539 = vsel %vm6411, %v6347, %v6475
  %v6540 = vsel %vm6412, %v6348, %v6476
  %v6541 = vsel %vm6413, %v6349, %v6477
  %v6542 = vsel %vm6414, %v6350, %v6478
  %v6543 = vsel %vm6415, %v6351, %v6479
  %v6544 = vsel %vm6416, %v6352, %v6480
  %v6545 = vsel %vm6417, %v6353, %v6481
  %vm6546 = vcmask 261120
  %6547 = vst.msk [vmem:[%s5] sm:$0xff] %vm6546, %v6482
  %6548 = vst.msk [vmem:[%s5 + $0x8] sm:$0xff] %vm6546, %v6483
  %6549 = vst.msk [vmem:[%s5 + $0x10] sm:$0xff] %vm6546, %v6484
  %6550 = vst.msk [vmem:[%s5 + $0x18] sm:$0xff] %vm6546, %v6485
  %6551 = vst.msk [vmem:[%s5 + $0x20] sm:$0xff] %vm6546, %v6486
  %6552 = vst.msk [vmem:[%s5 + $0x28] sm:$0xff] %vm6546, %v6487
  %6553 = vst.msk [vmem:[%s5 + $0x30] sm:$0xff] %vm6546, %v6488
  %6554 = vst.msk [vmem:[%s5 + $0x38] sm:$0xff] %vm6546, %v6489
  %6555 = vst.msk [vmem:[%s5 + $0x40] sm:$0xff] %vm6546, %v6490
  %6556 = vst.msk [vmem:[%s5 + $0x48] sm:$0xff] %vm6546, %v6491
  %6557 = vst.msk [vmem:[%s5 + $0x50] sm:$0xff] %vm6546, %v6492
  %6558 = vst.msk [vmem:[%s5 + $0x58] sm:$0xff] %vm6546, %v6493
  %6559 = vst.msk [vmem:[%s5 + $0x60] sm:$0xff] %vm6546, %v6494
  %6560 = vst.msk [vmem:[%s5 + $0x68] sm:$0xff] %vm6546, %v6495
  %6561 = vst.msk [vmem:[%s5 + $0x70] sm:$0xff] %vm6546, %v6496
  %6562 = vst.msk [vmem:[%s5 + $0x78] sm:$0xff] %vm6546, %v6497
  %6563 = vst.msk [vmem:[%s5 + $0x80] sm:$0xff] %vm6546, %v6498
  %6564 = vst.msk [vmem:[%s5 + $0x88] sm:$0xff] %vm6546, %v6499
  %6565 = vst.msk [vmem:[%s5 + $0x90] sm:$0xff] %vm6546, %v6500
  %6566 = vst.msk [vmem:[%s5 + $0x98] sm:$0xff] %vm6546, %v6501
  %6567 = vst.msk [vmem:[%s5 + $0xa0] sm:$0xff] %vm6546, %v6502
  %6568 = vst.msk [vmem:[%s5 + $0xa8] sm:$0xff] %vm6546, %v6503
  %6569 = vst.msk [vmem:[%s5 + $0xb0] sm:$0xff] %vm6546, %v6504
  %6570 = vst.msk [vmem:[%s5 + $0xb8] sm:$0xff] %vm6546, %v6505
  %6571 = vst.msk [vmem:[%s5 + $0xc0] sm:$0xff] %vm6546, %v6506
  %6572 = vst.msk [vmem:[%s5 + $0xc8] sm:$0xff] %vm6546, %v6507
  %6573 = vst.msk [vmem:[%s5 + $0xd0] sm:$0xff] %vm6546, %v6508
  %6574 = vst.msk [vmem:[%s5 + $0xd8] sm:$0xff] %vm6546, %v6509
  %6575 = vst.msk [vmem:[%s5 + $0xe0] sm:$0xff] %vm6546, %v6510
  %6576 = vst.msk [vmem:[%s5 + $0xe8] sm:$0xff] %vm6546, %v6511
  %6577 = vst.msk [vmem:[%s5 + $0xf0] sm:$0xff] %vm6546, %v6512
  %6578 = vst.msk [vmem:[%s5 + $0xf8] sm:$0xff] %vm6546, %v6513
  %6579 = vst.msk [vmem:[%s5 + $0x100] sm:$0xff] %vm6546, %v6514
  %6580 = vst.msk [vmem:[%s5 + $0x108] sm:$0xff] %vm6546, %v6515
  %6581 = vst.msk [vmem:[%s5 + $0x110] sm:$0xff] %vm6546, %v6516
  %6582 = vst.msk [vmem:[%s5 + $0x118] sm:$0xff] %vm6546, %v6517
  %6583 = vst.msk [vmem:[%s5 + $0x120] sm:$0xff] %vm6546, %v6518
  %6584 = vst.msk [vmem:[%s5 + $0x128] sm:$0xff] %vm6546, %v6519
  %6585 = vst.msk [vmem:[%s5 + $0x130] sm:$0xff] %vm6546, %v6520
  %6586 = vst.msk [vmem:[%s5 + $0x138] sm:$0xff] %vm6546, %v6521
  %6587 = vst.msk [vmem:[%s5 + $0x140] sm:$0xff] %vm6546, %v6522
  %6588 = vst.msk [vmem:[%s5 + $0x148] sm:$0xff] %vm6546, %v6523
  %6589 = vst.msk [vmem:[%s5 + $0x150] sm:$0xff] %vm6546, %v6524
  %6590 = vst.msk [vmem:[%s5 + $0x158] sm:$0xff] %vm6546, %v6525
  %6591 = vst.msk [vmem:[%s5 + $0x160] sm:$0xff] %vm6546, %v6526
  %6592 = vst.msk [vmem:[%s5 + $0x168] sm:$0xff] %vm6546, %v6527
  %6593 = vst.msk [vmem:[%s5 + $0x170] sm:$0xff] %vm6546, %v6528
  %6594 = vst.msk [vmem:[%s5 + $0x178] sm:$0xff] %vm6546, %v6529
  %6595 = vst.msk [vmem:[%s5 + $0x180] sm:$0xff] %vm6546, %v6530
  %6596 = vst.msk [vmem:[%s5 + $0x188] sm:$0xff] %vm6546, %v6531
  %6597 = vst.msk [vmem:[%s5 + $0x190] sm:$0xff] %vm6546, %v6532
  %6598 = vst.msk [vmem:[%s5 + $0x198] sm:$0xff] %vm6546, %v6533
  %6599 = vst.msk [vmem:[%s5 + $0x1a0] sm:$0xff] %vm6546, %v6534
  %6600 = vst.msk [vmem:[%s5 + $0x1a8] sm:$0xff] %vm6546, %v6535
  %6601 = vst.msk [vmem:[%s5 + $0x1b0] sm:$0xff] %vm6546, %v6536
  %6602 = vst.msk [vmem:[%s5 + $0x1b8] sm:$0xff] %vm6546, %v6537
  %6603 = vst.msk [vmem:[%s5 + $0x1c0] sm:$0xff] %vm6546, %v6538
  %6604 = vst.msk [vmem:[%s5 + $0x1c8] sm:$0xff] %vm6546, %v6539
  %6605 = vst.msk [vmem:[%s5 + $0x1d0] sm:$0xff] %vm6546, %v6540
  %6606 = vst.msk [vmem:[%s5 + $0x1d8] sm:$0xff] %vm6546, %v6541
  %6607 = vst.msk [vmem:[%s5 + $0x1e0] sm:$0xff] %vm6546, %v6542
  %6608 = vst.msk [vmem:[%s5 + $0x1e8] sm:$0xff] %vm6546, %v6543
  %6609 = vst.msk [vmem:[%s5 + $0x1f0] sm:$0xff] %vm6546, %v6544
  %6610 = vst.msk [vmem:[%s5 + $0x1f8] sm:$0xff] %vm6546, %v6545
  // Predicated region
  $region22: #{tpu_custom_call.1} parent=0 // pred_check
    _
  $region23: #{tpu_custom_call.1} parent=0 // pred_check_branch
    %6612 = sbr.rel (0) target = $region25
  $region24: #{tpu_custom_call.1} parent=0 // pred_region
    _
  $region25: #{tpu_custom_call.1} parent=0 // pred_fallthru
    _
  // Predicated region
  $region26: #{tpu_custom_call.1} parent=0 // pred_check
    _
  $region27: #{tpu_custom_call.1} parent=0 // pred_check_branch
    %6614 = sbr.rel (0) target = $region29
  $region28: #{tpu_custom_call.1} parent=0 // pred_region
    _
  $region29: #{tpu_custom_call.1} parent=0 // pred_fallthru
    _

</llo_original>
